<compile_context>
chip_gen: v7x
topology: tpu7x:2x2x1
jax: 0.10.0
libtpu: 0.0.40
codegen_flags: <defaults>
</compile_context>

<pallas_src>
import functools

import jax
import jax.numpy as jnp
from jax.experimental import pallas as pl
from jax.experimental.pallas import tpu as pltpu

NEG_SLOPE = 0.01  # nn.LeakyReLU default negative slope


# ----------------------- fused conv + MaxPool + LeakyReLU --------------------

def _conv_pool_kernel(s_ref, w_ref, b_ref, o_ref, *, pool_sq):
    # s_ref: (1, pool_sq, Cin*K*K, Np_pad) bf16  im2col slabs, one per (dy,dx)
    #        offset in the pooling window; lanes = pooled-output lattice hp*Wp+wp
    # w_ref: (Cout_pad, Cin*K*K)           bf16  conv weights (VMEM resident)
    # b_ref: (Cout_pad, 1)                 f32   bias (VMEM resident)
    # o_ref: (1, Cout_pad, Np_pad)               pooled + LeakyReLU output
    w = w_ref[...]
    m = None
    for q in range(pool_sq):                       # MaxPool = max over offsets
        part = jnp.dot(w, s_ref[0, q, :, :], preferred_element_type=jnp.float32)
        m = part if m is None else jnp.maximum(m, part)
    y = m + b_ref[...]                             # per-channel bias commutes with max
    y = jnp.where(y > 0, y, NEG_SLOPE * y)         # LeakyReLU (VPU, f32 — v5e safe)
    o_ref[0, :, :] = y.astype(o_ref.dtype)


def _im2col_pooled(x, *, ksize, pad, pool, np_pad):
    # x: (B, Cin, H, W) -> (B, pool*pool, Cin*K*K, np_pad) bf16 with
    # col[b, dy*pool+dx, c*K*K+kh*K+kw, hp*Wp+wp] = xpad[b, c, pool*hp+dy+kh, pool*wp+dx+kw]
    B, Cin, H, W = x.shape
    Hp, Wp = H // pool, W // pool
    xp = jnp.pad(x, ((0, 0), (0, 0), (pad, pad), (pad, pad)))
    rows = jnp.stack([
        jnp.stack([xp[:, :, dy + kh: dy + kh + pool * Hp: pool, :]
                   for kh in range(ksize)], axis=0)
        for dy in range(pool)], axis=0)            # (pool, K, B, Cin, Hp, Wpad)
    cols = jnp.stack([
        jnp.stack([rows[..., dx + kw: dx + kw + pool * Wp: pool]
                   for kw in range(ksize)], axis=0)
        for dx in range(pool)], axis=0)            # (dx, kw, dy, kh, B, Cin, Hp, Wp)
    col = cols.transpose(4, 2, 0, 5, 3, 1, 6, 7)   # (B, dy, dx, Cin, kh, kw, Hp, Wp)
    col = col.reshape(B, pool * pool, Cin * ksize * ksize, Hp * Wp)
    col = jnp.pad(col, ((0, 0), (0, 0), (0, 0), (0, np_pad - Hp * Wp)))
    return col.astype(jnp.bfloat16)


def conv_pool_lrelu(x, w_mat, bias, *, ksize, pad, pool, np_pad, out_dtype):
    # x: (B, Cin, H, W) -> (B, Cout_pad, np_pad); lane index = hp*(W//pool) + wp.
    B = x.shape[0]
    cout_pad, ckk = w_mat.shape
    pool_sq = pool * pool
    slab = _im2col_pooled(x, ksize=ksize, pad=pad, pool=pool, np_pad=np_pad)
    kern = functools.partial(_conv_pool_kernel, pool_sq=pool_sq)
    return pl.pallas_call(
        kern,
        out_shape=jax.ShapeDtypeStruct((B, cout_pad, np_pad), out_dtype),
        grid=(B,),
        in_specs=[
            pl.BlockSpec((1, pool_sq, ckk, np_pad), lambda b: (b, 0, 0, 0)),
            pl.BlockSpec((cout_pad, ckk), lambda b: (0, 0)),   # VMEM resident
            pl.BlockSpec((cout_pad, 1), lambda b: (0, 0)),     # VMEM resident
        ],
        out_specs=pl.BlockSpec((1, cout_pad, np_pad), lambda b: (b, 0, 0)),
        compiler_params=pltpu.CompilerParams(
            dimension_semantics=("parallel",)),
    )(slab, w_mat, bias)


# ------------------------------ classifier head ------------------------------

def _mlp_kernel(x_ref, w1_ref, b1_ref, w2_ref, b2_ref, o_ref):
    h = jnp.dot(x_ref[...], w1_ref[...], preferred_element_type=jnp.float32) + b1_ref[...]
    # TODO(synk): Dropout(0.6) is identity in eval mode; training-mode masking not implemented.
    h = jnp.where(h > 0, h, NEG_SLOPE * h)
    o_ref[...] = jnp.dot(h.astype(jnp.bfloat16), w2_ref[...],
                         preferred_element_type=jnp.float32) + b2_ref[...]


def mlp_head(feat, w1, b1, w2, b2, num_classes):
    B, F = feat.shape
    Kp, Hid = w1.shape                                   # (2944, 128)
    Np = w2.shape[1]                                     # 128 (padded from 37)
    # whole batch in one grid step for small B (16 = native bf16 sublane tile)
    TB = 16 if B <= 16 else min(256, ((B + 15) // 16) * 16)
    B_pad = ((B + TB - 1) // TB) * TB
    x = jnp.pad(feat, ((0, B_pad - B), (0, Kp - F))).astype(jnp.bfloat16)
    out = pl.pallas_call(
        _mlp_kernel,
        out_shape=jax.ShapeDtypeStruct((B_pad, Np), jnp.float32),
        grid=(B_pad // TB,),
        in_specs=[
            pl.BlockSpec((TB, Kp), lambda i: (i, 0)),
            pl.BlockSpec((Kp, Hid), lambda i: (0, 0)),   # VMEM resident
            pl.BlockSpec((1, Hid), lambda i: (0, 0)),
            pl.BlockSpec((Hid, Np), lambda i: (0, 0)),
            pl.BlockSpec((1, Np), lambda i: (0, 0)),
        ],
        out_specs=pl.BlockSpec((TB, Np), lambda i: (i, 0)),
        compiler_params=pltpu.CompilerParams(
            dimension_semantics=("parallel",)),
    )(x, w1, b1, w2, b2)
    return out[:B, :num_classes]


# --------------------------------- params ------------------------------------

def _prep_conv(wt, bias, cout_pad):
    # wt: (Cout, Cin, K, K) torch layout -> (Cout_pad, Cin*K*K) bf16 (zero-padded Cout)
    cout = wt.shape[0]
    w_mat = wt.reshape(cout, -1)
    w_mat = jnp.pad(w_mat, ((0, cout_pad - cout), (0, 0))).astype(jnp.bfloat16)
    b = jnp.pad(bias, (0, cout_pad - cout)).astype(jnp.float32).reshape(cout_pad, 1)
    return w_mat, b


def init_params():
    key = jax.random.PRNGKey(42)
    ks = jax.random.split(key, 8)
    s = 0.05
    w1t = jax.random.normal(ks[0], (24, 1, 5, 5), jnp.float32) * s   # Conv2d(1, 24, 5, 1, 2)
    b1t = jax.random.normal(ks[1], (24,), jnp.float32) * s
    w2t = jax.random.normal(ks[2], (60, 24, 5, 5), jnp.float32) * s  # Conv2d(24, 60, 5, 1, 2)
    b2t = jax.random.normal(ks[3], (60,), jnp.float32) * s
    fc1_w = jax.random.normal(ks[4], (60 * 7 * 7, 128), jnp.float32) * s
    fc1_b = jax.random.normal(ks[5], (128,), jnp.float32) * s
    fc2_w = jax.random.normal(ks[6], (128, 37), jnp.float32) * s
    fc2_b = jax.random.normal(ks[7], (37,), jnp.float32) * s

    p = {}
    p["c1_w"], p["c1_b"] = _prep_conv(w1t, b1t, 32)                  # Cout 24 -> 32
    p["c2_w"], p["c2_b"] = _prep_conv(w2t, b2t, 64)                  # Cout 60 -> 64
    p["fc1_w"] = jnp.pad(fc1_w, ((0, 4), (0, 0))).astype(jnp.bfloat16)         # K 2940 -> 2944
    p["fc1_b"] = fc1_b.reshape(1, 128).astype(jnp.float32)
    p["fc2_w"] = jnp.pad(fc2_w, ((0, 0), (0, 128 - 37))).astype(jnp.bfloat16)  # N 37 -> 128
    p["fc2_b"] = jnp.pad(fc2_b, (0, 128 - 37)).reshape(1, 128).astype(jnp.float32)
    return p


# -------------------------------- forward ------------------------------------

def cnn_forward(x, params):
    # x: (B, 1, 56, 56) f32, NCHW
    B = x.shape[0]
    # conv1 -> MaxPool2d(4,4) -> LeakyReLU   (one fused kernel, one grid step/image)
    y1 = conv_pool_lrelu(x, params["c1_w"], params["c1_b"],
                         ksize=5, pad=2, pool=4, np_pad=256,
                         out_dtype=jnp.bfloat16)                     # (B, 32, 256) bf16
    # stage-1 output already has lane = hp*14+wp: slab prep for stage 2 is a slice+reshape
    y1_sp = y1[:, :24, :14 * 14].reshape(B, 24, 14, 14)              # (B, 24, 14, 14) bf16
    # conv2 -> MaxPool2d(2,2) -> LeakyReLU   (fused)
    y2 = conv_pool_lrelu(y1_sp, params["c2_w"], params["c2_b"],
                         ksize=5, pad=2, pool=2, np_pad=128,
                         out_dtype=jnp.float32)                      # (B, 64, 128) f32
    # flatten exactly like torch x.view(B, -1) on (B, 60, 7, 7)
    feat = y2[:, :60, :7 * 7].reshape(B, -1)                         # (B, 2940) f32
    # Linear -> Dropout(eval) -> LeakyReLU -> Linear (one fused kernel)
    logits = mlp_head(feat, params["fc1_w"], params["fc1_b"],
                      params["fc2_w"], params["fc2_b"], 37)          # (B, 37)
    return logits, feat


if __name__ == "__main__":
    params = init_params()
    x = jax.random.normal(jax.random.PRNGKey(0), (2, 1, 56, 56), jnp.float32)

    fwd = jax.jit(cnn_forward)
    logits, feat = fwd(x, params)
    jax.block_until_ready((logits, feat))

    assert logits.shape == (2, 37), logits.shape
    assert feat.shape == (2, 60 * 7 * 7), feat.shape
    print("KERNEL_OK")
</pallas_src>

<mosaic_0001>
module attributes {stable_mosaic.version = 11 : i64} {
  func.func @_conv_pool_kernel(%arg0: i32, %arg1: memref<1x16x25x256xbf16, #tpu.memory_space<vmem>>, %arg2: memref<32x25xbf16, #tpu.memory_space<vmem>>, %arg3: memref<32x1xf32, #tpu.memory_space<vmem>>, %arg4: memref<1x32x256xbf16, #tpu.memory_space<vmem>>) attributes {dimension_semantics = [#tpu.dimension_semantics<parallel>], iteration_bounds = array<i64: 2>, scalar_prefetch = 0 : i64, scratch_operands = 0 : i64, tpu.core_type = #tpu.core_type<tc>, window_params = [{transform_indices = @transform_0, window_bounds = array<i64: 1, 16, 25, 256>}, {pipeline_mode = #tpu.pipeline_mode<synchronous>, transform_indices = @transform_1, window_bounds = array<i64: 32, 25>}, {pipeline_mode = #tpu.pipeline_mode<synchronous>, transform_indices = @transform_2, window_bounds = array<i64: 32, 1>}, {transform_indices = @transform_3, window_bounds = array<i64: 1, 32, 256>}]} {
    %c0 = arith.constant 0 : index
    %c0_0 = arith.constant 0 : index
    %0 = vector.load %arg2[%c0, %c0_0] : memref<32x25xbf16, #tpu.memory_space<vmem>>, vector<32x25xbf16>
    %c0_1 = arith.constant 0 : index
    %c0_2 = arith.constant 0 : index
    %c0_3 = arith.constant 0 : index
    %c0_4 = arith.constant 0 : index
    %1 = vector.load %arg1[%c0_1, %c0_2, %c0_3, %c0_4] : memref<1x16x25x256xbf16, #tpu.memory_space<vmem>>, vector<1x1x25x256xbf16>
    %2 = vector.shape_cast %1 : vector<1x1x25x256xbf16> to vector<25x256xbf16>
    %cst = arith.constant dense<0.000000e+00> : vector<32x256xf32>
    %3 = tpu.matmul %0, %2, %cst {dimension_numbers = #tpu.dot_dimension_numbers<[1], [0], [0], [1], [0, 0, 1, 1], [], []>} : vector<32x25xbf16>, vector<25x256xbf16>, vector<32x256xf32> -> vector<32x256xf32>
    %c0_5 = arith.constant 0 : index
    %c1 = arith.constant 1 : index
    %c0_6 = arith.constant 0 : index
    %c0_7 = arith.constant 0 : index
    %4 = vector.load %arg1[%c0_5, %c1, %c0_6, %c0_7] : memref<1x16x25x256xbf16, #tpu.memory_space<vmem>>, vector<1x1x25x256xbf16>
    %5 = vector.shape_cast %4 : vector<1x1x25x256xbf16> to vector<25x256xbf16>
    %cst_8 = arith.constant dense<0.000000e+00> : vector<32x256xf32>
    %6 = tpu.matmul %0, %5, %cst_8 {dimension_numbers = #tpu.dot_dimension_numbers<[1], [0], [0], [1], [0, 0, 1, 1], [], []>} : vector<32x25xbf16>, vector<25x256xbf16>, vector<32x256xf32> -> vector<32x256xf32>
    %7 = arith.maximumf %3, %6 : vector<32x256xf32>
    %c0_9 = arith.constant 0 : index
    %c2 = arith.constant 2 : index
    %c0_10 = arith.constant 0 : index
    %c0_11 = arith.constant 0 : index
    %8 = vector.load %arg1[%c0_9, %c2, %c0_10, %c0_11] : memref<1x16x25x256xbf16, #tpu.memory_space<vmem>>, vector<1x1x25x256xbf16>
    %9 = vector.shape_cast %8 : vector<1x1x25x256xbf16> to vector<25x256xbf16>
    %cst_12 = arith.constant dense<0.000000e+00> : vector<32x256xf32>
    %10 = tpu.matmul %0, %9, %cst_12 {dimension_numbers = #tpu.dot_dimension_numbers<[1], [0], [0], [1], [0, 0, 1, 1], [], []>} : vector<32x25xbf16>, vector<25x256xbf16>, vector<32x256xf32> -> vector<32x256xf32>
    %11 = arith.maximumf %7, %10 : vector<32x256xf32>
    %c0_13 = arith.constant 0 : index
    %c3 = arith.constant 3 : index
    %c0_14 = arith.constant 0 : index
    %c0_15 = arith.constant 0 : index
    %12 = vector.load %arg1[%c0_13, %c3, %c0_14, %c0_15] : memref<1x16x25x256xbf16, #tpu.memory_space<vmem>>, vector<1x1x25x256xbf16>
    %13 = vector.shape_cast %12 : vector<1x1x25x256xbf16> to vector<25x256xbf16>
    %cst_16 = arith.constant dense<0.000000e+00> : vector<32x256xf32>
    %14 = tpu.matmul %0, %13, %cst_16 {dimension_numbers = #tpu.dot_dimension_numbers<[1], [0], [0], [1], [0, 0, 1, 1], [], []>} : vector<32x25xbf16>, vector<25x256xbf16>, vector<32x256xf32> -> vector<32x256xf32>
    %15 = arith.maximumf %11, %14 : vector<32x256xf32>
    %c0_17 = arith.constant 0 : index
    %c4 = arith.constant 4 : index
    %c0_18 = arith.constant 0 : index
    %c0_19 = arith.constant 0 : index
    %16 = vector.load %arg1[%c0_17, %c4, %c0_18, %c0_19] : memref<1x16x25x256xbf16, #tpu.memory_space<vmem>>, vector<1x1x25x256xbf16>
    %17 = vector.shape_cast %16 : vector<1x1x25x256xbf16> to vector<25x256xbf16>
    %cst_20 = arith.constant dense<0.000000e+00> : vector<32x256xf32>
    %18 = tpu.matmul %0, %17, %cst_20 {dimension_numbers = #tpu.dot_dimension_numbers<[1], [0], [0], [1], [0, 0, 1, 1], [], []>} : vector<32x25xbf16>, vector<25x256xbf16>, vector<32x256xf32> -> vector<32x256xf32>
    %19 = arith.maximumf %15, %18 : vector<32x256xf32>
    %c0_21 = arith.constant 0 : index
    %c5 = arith.constant 5 : index
    %c0_22 = arith.constant 0 : index
    %c0_23 = arith.constant 0 : index
    %20 = vector.load %arg1[%c0_21, %c5, %c0_22, %c0_23] : memref<1x16x25x256xbf16, #tpu.memory_space<vmem>>, vector<1x1x25x256xbf16>
    %21 = vector.shape_cast %20 : vector<1x1x25x256xbf16> to vector<25x256xbf16>
    %cst_24 = arith.constant dense<0.000000e+00> : vector<32x256xf32>
    %22 = tpu.matmul %0, %21, %cst_24 {dimension_numbers = #tpu.dot_dimension_numbers<[1], [0], [0], [1], [0, 0, 1, 1], [], []>} : vector<32x25xbf16>, vector<25x256xbf16>, vector<32x256xf32> -> vector<32x256xf32>
    %23 = arith.maximumf %19, %22 : vector<32x256xf32>
    %c0_25 = arith.constant 0 : index
    %c6 = arith.constant 6 : index
    %c0_26 = arith.constant 0 : index
    %c0_27 = arith.constant 0 : index
    %24 = vector.load %arg1[%c0_25, %c6, %c0_26, %c0_27] : memref<1x16x25x256xbf16, #tpu.memory_space<vmem>>, vector<1x1x25x256xbf16>
    %25 = vector.shape_cast %24 : vector<1x1x25x256xbf16> to vector<25x256xbf16>
    %cst_28 = arith.constant dense<0.000000e+00> : vector<32x256xf32>
    %26 = tpu.matmul %0, %25, %cst_28 {dimension_numbers = #tpu.dot_dimension_numbers<[1], [0], [0], [1], [0, 0, 1, 1], [], []>} : vector<32x25xbf16>, vector<25x256xbf16>, vector<32x256xf32> -> vector<32x256xf32>
    %27 = arith.maximumf %23, %26 : vector<32x256xf32>
    %c0_29 = arith.constant 0 : index
    %c7 = arith.constant 7 : index
    %c0_30 = arith.constant 0 : index
    %c0_31 = arith.constant 0 : index
    %28 = vector.load %arg1[%c0_29, %c7, %c0_30, %c0_31] : memref<1x16x25x256xbf16, #tpu.memory_space<vmem>>, vector<1x1x25x256xbf16>
    %29 = vector.shape_cast %28 : vector<1x1x25x256xbf16> to vector<25x256xbf16>
    %cst_32 = arith.constant dense<0.000000e+00> : vector<32x256xf32>
    %30 = tpu.matmul %0, %29, %cst_32 {dimension_numbers = #tpu.dot_dimension_numbers<[1], [0], [0], [1], [0, 0, 1, 1], [], []>} : vector<32x25xbf16>, vector<25x256xbf16>, vector<32x256xf32> -> vector<32x256xf32>
    %31 = arith.maximumf %27, %30 : vector<32x256xf32>
    %c0_33 = arith.constant 0 : index
    %c8 = arith.constant 8 : index
    %c0_34 = arith.constant 0 : index
    %c0_35 = arith.constant 0 : index
    %32 = vector.load %arg1[%c0_33, %c8, %c0_34, %c0_35] : memref<1x16x25x256xbf16, #tpu.memory_space<vmem>>, vector<1x1x25x256xbf16>
    %33 = vector.shape_cast %32 : vector<1x1x25x256xbf16> to vector<25x256xbf16>
    %cst_36 = arith.constant dense<0.000000e+00> : vector<32x256xf32>
    %34 = tpu.matmul %0, %33, %cst_36 {dimension_numbers = #tpu.dot_dimension_numbers<[1], [0], [0], [1], [0, 0, 1, 1], [], []>} : vector<32x25xbf16>, vector<25x256xbf16>, vector<32x256xf32> -> vector<32x256xf32>
    %35 = arith.maximumf %31, %34 : vector<32x256xf32>
    %c0_37 = arith.constant 0 : index
    %c9 = arith.constant 9 : index
    %c0_38 = arith.constant 0 : index
    %c0_39 = arith.constant 0 : index
    %36 = vector.load %arg1[%c0_37, %c9, %c0_38, %c0_39] : memref<1x16x25x256xbf16, #tpu.memory_space<vmem>>, vector<1x1x25x256xbf16>
    %37 = vector.shape_cast %36 : vector<1x1x25x256xbf16> to vector<25x256xbf16>
    %cst_40 = arith.constant dense<0.000000e+00> : vector<32x256xf32>
    %38 = tpu.matmul %0, %37, %cst_40 {dimension_numbers = #tpu.dot_dimension_numbers<[1], [0], [0], [1], [0, 0, 1, 1], [], []>} : vector<32x25xbf16>, vector<25x256xbf16>, vector<32x256xf32> -> vector<32x256xf32>
    %39 = arith.maximumf %35, %38 : vector<32x256xf32>
    %c0_41 = arith.constant 0 : index
    %c10 = arith.constant 10 : index
    %c0_42 = arith.constant 0 : index
    %c0_43 = arith.constant 0 : index
    %40 = vector.load %arg1[%c0_41, %c10, %c0_42, %c0_43] : memref<1x16x25x256xbf16, #tpu.memory_space<vmem>>, vector<1x1x25x256xbf16>
    %41 = vector.shape_cast %40 : vector<1x1x25x256xbf16> to vector<25x256xbf16>
    %cst_44 = arith.constant dense<0.000000e+00> : vector<32x256xf32>
    %42 = tpu.matmul %0, %41, %cst_44 {dimension_numbers = #tpu.dot_dimension_numbers<[1], [0], [0], [1], [0, 0, 1, 1], [], []>} : vector<32x25xbf16>, vector<25x256xbf16>, vector<32x256xf32> -> vector<32x256xf32>
    %43 = arith.maximumf %39, %42 : vector<32x256xf32>
    %c0_45 = arith.constant 0 : index
    %c11 = arith.constant 11 : index
    %c0_46 = arith.constant 0 : index
    %c0_47 = arith.constant 0 : index
    %44 = vector.load %arg1[%c0_45, %c11, %c0_46, %c0_47] : memref<1x16x25x256xbf16, #tpu.memory_space<vmem>>, vector<1x1x25x256xbf16>
    %45 = vector.shape_cast %44 : vector<1x1x25x256xbf16> to vector<25x256xbf16>
    %cst_48 = arith.constant dense<0.000000e+00> : vector<32x256xf32>
    %46 = tpu.matmul %0, %45, %cst_48 {dimension_numbers = #tpu.dot_dimension_numbers<[1], [0], [0], [1], [0, 0, 1, 1], [], []>} : vector<32x25xbf16>, vector<25x256xbf16>, vector<32x256xf32> -> vector<32x256xf32>
    %47 = arith.maximumf %43, %46 : vector<32x256xf32>
    %c0_49 = arith.constant 0 : index
    %c12 = arith.constant 12 : index
    %c0_50 = arith.constant 0 : index
    %c0_51 = arith.constant 0 : index
    %48 = vector.load %arg1[%c0_49, %c12, %c0_50, %c0_51] : memref<1x16x25x256xbf16, #tpu.memory_space<vmem>>, vector<1x1x25x256xbf16>
    %49 = vector.shape_cast %48 : vector<1x1x25x256xbf16> to vector<25x256xbf16>
    %cst_52 = arith.constant dense<0.000000e+00> : vector<32x256xf32>
    %50 = tpu.matmul %0, %49, %cst_52 {dimension_numbers = #tpu.dot_dimension_numbers<[1], [0], [0], [1], [0, 0, 1, 1], [], []>} : vector<32x25xbf16>, vector<25x256xbf16>, vector<32x256xf32> -> vector<32x256xf32>
    %51 = arith.maximumf %47, %50 : vector<32x256xf32>
    %c0_53 = arith.constant 0 : index
    %c13 = arith.constant 13 : index
    %c0_54 = arith.constant 0 : index
    %c0_55 = arith.constant 0 : index
    %52 = vector.load %arg1[%c0_53, %c13, %c0_54, %c0_55] : memref<1x16x25x256xbf16, #tpu.memory_space<vmem>>, vector<1x1x25x256xbf16>
    %53 = vector.shape_cast %52 : vector<1x1x25x256xbf16> to vector<25x256xbf16>
    %cst_56 = arith.constant dense<0.000000e+00> : vector<32x256xf32>
    %54 = tpu.matmul %0, %53, %cst_56 {dimension_numbers = #tpu.dot_dimension_numbers<[1], [0], [0], [1], [0, 0, 1, 1], [], []>} : vector<32x25xbf16>, vector<25x256xbf16>, vector<32x256xf32> -> vector<32x256xf32>
    %55 = arith.maximumf %51, %54 : vector<32x256xf32>
    %c0_57 = arith.constant 0 : index
    %c14 = arith.constant 14 : index
    %c0_58 = arith.constant 0 : index
    %c0_59 = arith.constant 0 : index
    %56 = vector.load %arg1[%c0_57, %c14, %c0_58, %c0_59] : memref<1x16x25x256xbf16, #tpu.memory_space<vmem>>, vector<1x1x25x256xbf16>
    %57 = vector.shape_cast %56 : vector<1x1x25x256xbf16> to vector<25x256xbf16>
    %cst_60 = arith.constant dense<0.000000e+00> : vector<32x256xf32>
    %58 = tpu.matmul %0, %57, %cst_60 {dimension_numbers = #tpu.dot_dimension_numbers<[1], [0], [0], [1], [0, 0, 1, 1], [], []>} : vector<32x25xbf16>, vector<25x256xbf16>, vector<32x256xf32> -> vector<32x256xf32>
    %59 = arith.maximumf %55, %58 : vector<32x256xf32>
    %c0_61 = arith.constant 0 : index
    %c15 = arith.constant 15 : index
    %c0_62 = arith.constant 0 : index
    %c0_63 = arith.constant 0 : index
    %60 = vector.load %arg1[%c0_61, %c15, %c0_62, %c0_63] : memref<1x16x25x256xbf16, #tpu.memory_space<vmem>>, vector<1x1x25x256xbf16>
    %61 = vector.shape_cast %60 : vector<1x1x25x256xbf16> to vector<25x256xbf16>
    %cst_64 = arith.constant dense<0.000000e+00> : vector<32x256xf32>
    %62 = tpu.matmul %0, %61, %cst_64 {dimension_numbers = #tpu.dot_dimension_numbers<[1], [0], [0], [1], [0, 0, 1, 1], [], []>} : vector<32x25xbf16>, vector<25x256xbf16>, vector<32x256xf32> -> vector<32x256xf32>
    %63 = arith.maximumf %59, %62 : vector<32x256xf32>
    %c0_65 = arith.constant 0 : index
    %c0_66 = arith.constant 0 : index
    %64 = vector.load %arg3[%c0_65, %c0_66] : memref<32x1xf32, #tpu.memory_space<vmem>>, vector<32x1xf32>
    %65 = vector.broadcast %64 : vector<32x1xf32> to vector<32x256xf32>
    %66 = arith.addf %63, %65 : vector<32x256xf32>
    %cst_67 = arith.constant 0.000000e+00 : f32
    %67 = vector.broadcast %cst_67 : f32 to vector<32x256xf32>
    %68 = arith.cmpf ogt, %66, %67 : vector<32x256xf32>
    %cst_68 = arith.constant 0.00999999977 : f32
    %69 = vector.broadcast %cst_68 : f32 to vector<32x256xf32>
    %70 = arith.mulf %69, %66 : vector<32x256xf32>
    %71 = arith.select %68, %66, %70 : vector<32x256xi1>, vector<32x256xf32>
    %72 = arith.truncf %71 : vector<32x256xf32> to vector<32x256xbf16>
    %c0_69 = arith.constant 0 : index
    %c0_70 = arith.constant 0 : index
    %c0_71 = arith.constant 0 : index
    %73 = vector.load %arg4[%c0_69, %c0_70, %c0_71] : memref<1x32x256xbf16, #tpu.memory_space<vmem>>, vector<1x32x256xbf16>
    %74 = vector.shape_cast %73 : vector<1x32x256xbf16> to vector<32x256xbf16>
    %75 = vector.shape_cast %72 : vector<32x256xbf16> to vector<1x32x256xbf16>
    tpu.vector_store %arg4[%c0_69, %c0_70, %c0_71], %75 {strides = array<i32>} : memref<1x32x256xbf16, #tpu.memory_space<vmem>>, vector<1x32x256xbf16>,
    return
  }
  func.func @transform_0(%arg0: i32) -> (i32, i32, i32, i32) {
    %c0_i32 = arith.constant 0 : i32
    %c0_i32_0 = arith.constant 0 : i32
    %c0_i32_1 = arith.constant 0 : i32
    %c0_i32_2 = arith.constant 0 : i32
    return %arg0, %c0_i32, %c0_i32_0, %c0_i32_1 : i32, i32, i32, i32
  }
  func.func @transform_1(%arg0: i32) -> (i32, i32) {
    %c0_i32 = arith.constant 0 : i32
    %c0_i32_0 = arith.constant 0 : i32
    %c0_i32_1 = arith.constant 0 : i32
    return %c0_i32, %c0_i32_0 : i32, i32
  }
  func.func @transform_2(%arg0: i32) -> (i32, i32) {
    %c0_i32 = arith.constant 0 : i32
    %c0_i32_0 = arith.constant 0 : i32
    %c0_i32_1 = arith.constant 0 : i32
    return %c0_i32, %c0_i32_0 : i32, i32
  }
  func.func @transform_3(%arg0: i32) -> (i32, i32, i32) {
    %c0_i32 = arith.constant 0 : i32
    %c0_i32_0 = arith.constant 0 : i32
    %c0_i32_1 = arith.constant 0 : i32
    return %arg0, %c0_i32, %c0_i32_0 : i32, i32, i32
  }
}

module attributes {stable_mosaic.version = 11 : i64} {
  func.func @_conv_pool_kernel(%arg0: i32, %arg1: memref<1x4x600x128xbf16, #tpu.memory_space<vmem>>, %arg2: memref<64x600xbf16, #tpu.memory_space<vmem>>, %arg3: memref<64x1xf32, #tpu.memory_space<vmem>>, %arg4: memref<1x64x128xf32, #tpu.memory_space<vmem>>) attributes {dimension_semantics = [#tpu.dimension_semantics<parallel>], iteration_bounds = array<i64: 2>, scalar_prefetch = 0 : i64, scratch_operands = 0 : i64, tpu.core_type = #tpu.core_type<tc>, window_params = [{transform_indices = @transform_0, window_bounds = array<i64: 1, 4, 600, 128>}, {pipeline_mode = #tpu.pipeline_mode<synchronous>, transform_indices = @transform_1, window_bounds = array<i64: 64, 600>}, {pipeline_mode = #tpu.pipeline_mode<synchronous>, transform_indices = @transform_2, window_bounds = array<i64: 64, 1>}, {transform_indices = @transform_3, window_bounds = array<i64: 1, 64, 128>}]} {
    %c0 = arith.constant 0 : index
    %c0_0 = arith.constant 0 : index
    %0 = vector.load %arg2[%c0, %c0_0] : memref<64x600xbf16, #tpu.memory_space<vmem>>, vector<64x600xbf16>
    %c0_1 = arith.constant 0 : index
    %c0_2 = arith.constant 0 : index
    %c0_3 = arith.constant 0 : index
    %c0_4 = arith.constant 0 : index
    %1 = vector.load %arg1[%c0_1, %c0_2, %c0_3, %c0_4] : memref<1x4x600x128xbf16, #tpu.memory_space<vmem>>, vector<1x1x600x128xbf16>
    %2 = vector.shape_cast %1 : vector<1x1x600x128xbf16> to vector<600x128xbf16>
    %cst = arith.constant dense<0.000000e+00> : vector<64x128xf32>
    %3 = tpu.matmul %0, %2, %cst {dimension_numbers = #tpu.dot_dimension_numbers<[1], [0], [0], [1], [0, 0, 1, 1], [], []>} : vector<64x600xbf16>, vector<600x128xbf16>, vector<64x128xf32> -> vector<64x128xf32>
    %c0_5 = arith.constant 0 : index
    %c1 = arith.constant 1 : index
    %c0_6 = arith.constant 0 : index
    %c0_7 = arith.constant 0 : index
    %4 = vector.load %arg1[%c0_5, %c1, %c0_6, %c0_7] : memref<1x4x600x128xbf16, #tpu.memory_space<vmem>>, vector<1x1x600x128xbf16>
    %5 = vector.shape_cast %4 : vector<1x1x600x128xbf16> to vector<600x128xbf16>
    %cst_8 = arith.constant dense<0.000000e+00> : vector<64x128xf32>
    %6 = tpu.matmul %0, %5, %cst_8 {dimension_numbers = #tpu.dot_dimension_numbers<[1], [0], [0], [1], [0, 0, 1, 1], [], []>} : vector<64x600xbf16>, vector<600x128xbf16>, vector<64x128xf32> -> vector<64x128xf32>
    %7 = arith.maximumf %3, %6 : vector<64x128xf32>
    %c0_9 = arith.constant 0 : index
    %c2 = arith.constant 2 : index
    %c0_10 = arith.constant 0 : index
    %c0_11 = arith.constant 0 : index
    %8 = vector.load %arg1[%c0_9, %c2, %c0_10, %c0_11] : memref<1x4x600x128xbf16, #tpu.memory_space<vmem>>, vector<1x1x600x128xbf16>
    %9 = vector.shape_cast %8 : vector<1x1x600x128xbf16> to vector<600x128xbf16>
    %cst_12 = arith.constant dense<0.000000e+00> : vector<64x128xf32>
    %10 = tpu.matmul %0, %9, %cst_12 {dimension_numbers = #tpu.dot_dimension_numbers<[1], [0], [0], [1], [0, 0, 1, 1], [], []>} : vector<64x600xbf16>, vector<600x128xbf16>, vector<64x128xf32> -> vector<64x128xf32>
    %11 = arith.maximumf %7, %10 : vector<64x128xf32>
    %c0_13 = arith.constant 0 : index
    %c3 = arith.constant 3 : index
    %c0_14 = arith.constant 0 : index
    %c0_15 = arith.constant 0 : index
    %12 = vector.load %arg1[%c0_13, %c3, %c0_14, %c0_15] : memref<1x4x600x128xbf16, #tpu.memory_space<vmem>>, vector<1x1x600x128xbf16>
    %13 = vector.shape_cast %12 : vector<1x1x600x128xbf16> to vector<600x128xbf16>
    %cst_16 = arith.constant dense<0.000000e+00> : vector<64x128xf32>
    %14 = tpu.matmul %0, %13, %cst_16 {dimension_numbers = #tpu.dot_dimension_numbers<[1], [0], [0], [1], [0, 0, 1, 1], [], []>} : vector<64x600xbf16>, vector<600x128xbf16>, vector<64x128xf32> -> vector<64x128xf32>
    %15 = arith.maximumf %11, %14 : vector<64x128xf32>
    %c0_17 = arith.constant 0 : index
    %c0_18 = arith.constant 0 : index
    %16 = vector.load %arg3[%c0_17, %c0_18] : memref<64x1xf32, #tpu.memory_space<vmem>>, vector<64x1xf32>
    %17 = vector.broadcast %16 : vector<64x1xf32> to vector<64x128xf32>
    %18 = arith.addf %15, %17 : vector<64x128xf32>
    %cst_19 = arith.constant 0.000000e+00 : f32
    %19 = vector.broadcast %cst_19 : f32 to vector<64x128xf32>
    %20 = arith.cmpf ogt, %18, %19 : vector<64x128xf32>
    %cst_20 = arith.constant 0.00999999977 : f32
    %21 = vector.broadcast %cst_20 : f32 to vector<64x128xf32>
    %22 = arith.mulf %21, %18 : vector<64x128xf32>
    %23 = arith.select %20, %18, %22 : vector<64x128xi1>, vector<64x128xf32>
    %c0_21 = arith.constant 0 : index
    %c0_22 = arith.constant 0 : index
    %c0_23 = arith.constant 0 : index
    %24 = vector.load %arg4[%c0_21, %c0_22, %c0_23] : memref<1x64x128xf32, #tpu.memory_space<vmem>>, vector<1x64x128xf32>
    %25 = vector.shape_cast %24 : vector<1x64x128xf32> to vector<64x128xf32>
    %26 = vector.shape_cast %23 : vector<64x128xf32> to vector<1x64x128xf32>
    tpu.vector_store %arg4[%c0_21, %c0_22, %c0_23], %26 {strides = array<i32>} : memref<1x64x128xf32, #tpu.memory_space<vmem>>, vector<1x64x128xf32>,
    return
  }
  func.func @transform_0(%arg0: i32) -> (i32, i32, i32, i32) {
    %c0_i32 = arith.constant 0 : i32
    %c0_i32_0 = arith.constant 0 : i32
    %c0_i32_1 = arith.constant 0 : i32
    %c0_i32_2 = arith.constant 0 : i32
    return %arg0, %c0_i32, %c0_i32_0, %c0_i32_1 : i32, i32, i32, i32
  }
  func.func @transform_1(%arg0: i32) -> (i32, i32) {
    %c0_i32 = arith.constant 0 : i32
    %c0_i32_0 = arith.constant 0 : i32
    %c0_i32_1 = arith.constant 0 : i32
    return %c0_i32, %c0_i32_0 : i32, i32
  }
  func.func @transform_2(%arg0: i32) -> (i32, i32) {
    %c0_i32 = arith.constant 0 : i32
    %c0_i32_0 = arith.constant 0 : i32
    %c0_i32_1 = arith.constant 0 : i32
    return %c0_i32, %c0_i32_0 : i32, i32
  }
  func.func @transform_3(%arg0: i32) -> (i32, i32, i32) {
    %c0_i32 = arith.constant 0 : i32
    %c0_i32_0 = arith.constant 0 : i32
    %c0_i32_1 = arith.constant 0 : i32
    return %arg0, %c0_i32, %c0_i32_0 : i32, i32, i32
  }
}

module attributes {stable_mosaic.version = 11 : i64} {
  func.func @_mlp_kernel(%arg0: i32, %arg1: memref<16x2944xbf16, #tpu.memory_space<vmem>>, %arg2: memref<2944x128xbf16, #tpu.memory_space<vmem>>, %arg3: memref<1x128xf32, #tpu.memory_space<vmem>>, %arg4: memref<128x128xbf16, #tpu.memory_space<vmem>>, %arg5: memref<1x128xf32, #tpu.memory_space<vmem>>, %arg6: memref<16x128xf32, #tpu.memory_space<vmem>>) attributes {dimension_semantics = [#tpu.dimension_semantics<parallel>], iteration_bounds = array<i64: 1>, scalar_prefetch = 0 : i64, scratch_operands = 0 : i64, tpu.core_type = #tpu.core_type<tc>, window_params = [{transform_indices = @transform_0, window_bounds = array<i64: 16, 2944>}, {pipeline_mode = #tpu.pipeline_mode<synchronous>, transform_indices = @transform_1, window_bounds = array<i64: 2944, 128>}, {pipeline_mode = #tpu.pipeline_mode<synchronous>, transform_indices = @transform_2, window_bounds = array<i64: 1, 128>}, {pipeline_mode = #tpu.pipeline_mode<synchronous>, transform_indices = @transform_3, window_bounds = array<i64: 128, 128>}, {pipeline_mode = #tpu.pipeline_mode<synchronous>, transform_indices = @transform_4, window_bounds = array<i64: 1, 128>}, {transform_indices = @transform_5, window_bounds = array<i64: 16, 128>}]} {
    %c0 = arith.constant 0 : index
    %c0_0 = arith.constant 0 : index
    %0 = vector.load %arg1[%c0, %c0_0] : memref<16x2944xbf16, #tpu.memory_space<vmem>>, vector<16x2944xbf16>
    %c0_1 = arith.constant 0 : index
    %c0_2 = arith.constant 0 : index
    %1 = vector.load %arg2[%c0_1, %c0_2] : memref<2944x128xbf16, #tpu.memory_space<vmem>>, vector<2944x128xbf16>
    %cst = arith.constant dense<0.000000e+00> : vector<16x128xf32>
    %2 = tpu.matmul %0, %1, %cst {dimension_numbers = #tpu.dot_dimension_numbers<[1], [0], [0], [1], [0, 0, 1, 1], [], []>} : vector<16x2944xbf16>, vector<2944x128xbf16>, vector<16x128xf32> -> vector<16x128xf32>
    %c0_3 = arith.constant 0 : index
    %c0_4 = arith.constant 0 : index
    %3 = vector.load %arg3[%c0_3, %c0_4] : memref<1x128xf32, #tpu.memory_space<vmem>>, vector<1x128xf32>
    %4 = vector.broadcast %3 : vector<1x128xf32> to vector<16x128xf32>
    %5 = arith.addf %2, %4 : vector<16x128xf32>
    %cst_5 = arith.constant 0.000000e+00 : f32
    %6 = vector.broadcast %cst_5 : f32 to vector<16x128xf32>
    %7 = arith.cmpf ogt, %5, %6 : vector<16x128xf32>
    %cst_6 = arith.constant 0.00999999977 : f32
    %8 = vector.broadcast %cst_6 : f32 to vector<16x128xf32>
    %9 = arith.mulf %8, %5 : vector<16x128xf32>
    %10 = arith.select %7, %5, %9 : vector<16x128xi1>, vector<16x128xf32>
    %11 = arith.truncf %10 : vector<16x128xf32> to vector<16x128xbf16>
    %c0_7 = arith.constant 0 : index
    %c0_8 = arith.constant 0 : index
    %12 = vector.load %arg4[%c0_7, %c0_8] : memref<128x128xbf16, #tpu.memory_space<vmem>>, vector<128x128xbf16>
    %cst_9 = arith.constant dense<0.000000e+00> : vector<16x128xf32>
    %13 = tpu.matmul %11, %12, %cst_9 {dimension_numbers = #tpu.dot_dimension_numbers<[1], [0], [0], [1], [0, 0, 1, 1], [], []>} : vector<16x128xbf16>, vector<128x128xbf16>, vector<16x128xf32> -> vector<16x128xf32>
    %c0_10 = arith.constant 0 : index
    %c0_11 = arith.constant 0 : index
    %14 = vector.load %arg5[%c0_10, %c0_11] : memref<1x128xf32, #tpu.memory_space<vmem>>, vector<1x128xf32>
    %15 = vector.broadcast %14 : vector<1x128xf32> to vector<16x128xf32>
    %16 = arith.addf %13, %15 : vector<16x128xf32>
    %c0_12 = arith.constant 0 : index
    %c0_13 = arith.constant 0 : index
    %17 = vector.load %arg6[%c0_12, %c0_13] : memref<16x128xf32, #tpu.memory_space<vmem>>, vector<16x128xf32>
    tpu.vector_store %arg6[%c0_12, %c0_13], %16 {strides = array<i32>} : memref<16x128xf32, #tpu.memory_space<vmem>>, vector<16x128xf32>,
    return
  }
  func.func @transform_0(%arg0: i32) -> (i32, i32) {
    %c0_i32 = arith.constant 0 : i32
    %c0_i32_0 = arith.constant 0 : i32
    return %arg0, %c0_i32 : i32, i32
  }
  func.func @transform_1(%arg0: i32) -> (i32, i32) {
    %c0_i32 = arith.constant 0 : i32
    %c0_i32_0 = arith.constant 0 : i32
    %c0_i32_1 = arith.constant 0 : i32
    return %c0_i32, %c0_i32_0 : i32, i32
  }
  func.func @transform_2(%arg0: i32) -> (i32, i32) {
    %c0_i32 = arith.constant 0 : i32
    %c0_i32_0 = arith.constant 0 : i32
    %c0_i32_1 = arith.constant 0 : i32
    return %c0_i32, %c0_i32_0 : i32, i32
  }
  func.func @transform_3(%arg0: i32) -> (i32, i32) {
    %c0_i32 = arith.constant 0 : i32
    %c0_i32_0 = arith.constant 0 : i32
    %c0_i32_1 = arith.constant 0 : i32
    return %c0_i32, %c0_i32_0 : i32, i32
  }
  func.func @transform_4(%arg0: i32) -> (i32, i32) {
    %c0_i32 = arith.constant 0 : i32
    %c0_i32_0 = arith.constant 0 : i32
    %c0_i32_1 = arith.constant 0 : i32
    return %c0_i32, %c0_i32_0 : i32, i32
  }
  func.func @transform_5(%arg0: i32) -> (i32, i32) {
    %c0_i32 = arith.constant 0 : i32
    %c0_i32_0 = arith.constant 0 : i32
    return %arg0, %c0_i32 : i32, i32
  }
}

</mosaic_0001>

<llo_original>
// kernel: cnn_forward.3
$region0: #{cnn_forward.3}
  #allocation0 [shape = 'u32[]', space=smem, size = 0x4, offset = 0x4, fixed_abs, tag = 'smem constant byte address 0x4 - core index']
  #allocation1 [shape = 'u32[144,128]{1,0:T(1,128)}', space=vmem, size = 0x12000, scoped, tag = 'internal scratch']
  %s0 = inlined_call_operand.vmem [shape: bf16[2,16,25,256], index: 0, kind: input, shape index: {}]
  %s1 = inlined_call_operand.vmem [shape: bf16[32,25], index: 1, kind: input, shape index: {}]
  %s2 = inlined_call_operand.vmem [shape: f32[32,1], index: 2, kind: input, shape index: {}]
  %s3 = inlined_call_operand.vmem [shape: bf16[2,32,256], index: 3, kind: output, shape index: {}]
  %s4 = sld [smem:[#allocation0]]
  $region45: #{cnn_forward.3} parent=0
    _
  %s6 = ssub.s32 1, %s4
  %s7 = scalar_select 0, %s6, %s4
  loop: start=0, step=1, limit=4
  $region2: #{cnn_forward.3} parent=0 // loop_pre_header
    _
  $region3: #{cnn_forward.3} parent=0 // loop_header
    %s9 = sphi 0, %s13
    %p10 = scmp.ge.s32.totalorder %s9, 4
    %s19 = sphi 0, %s21
    %s22 = sphi 0, %s19
    %s23 = sphi 0, %s22
    %s39 = sphi 0, %s23
    %s43 = sphi 0, %s43
    %s45 = sphi 0, %s43
    %s46 = sphi 0, %s45
    %s60 = sphi 0, %s46
    %s64 = sphi 0, %s64
    %s66 = sphi 0, %s64
    %s67 = sphi 0, %s66
    %s81 = sphi 0, %s67
    %s87 = sphi 0, %s89
    %s90 = sphi 0, %s87
    %s91 = sphi 0, %s90
    %s107 = sphi 0, %s91
  $region4: #{cnn_forward.3} parent=0 // loop_header_branch
    %12 = sbr.rel (%p10) target = $region8
  $region5: #{cnn_forward.3} parent=0 // loop_body
    %s14 = ssub.s32 %s9, 1
    %s15 = ssub.s32 %s9, 2
    %s16 = sadd.s32 %s9, 1
    %s17 = ssub.s32 %s9, %s16
    %p18 = scmp.eq.s32.totalorder %s17, 0
    %s20 = sadd.s32 %s19, 1
    %s21 = scalar_select %p18, %s19, %s20
    %p24 = pneg %p18
    %p25 = scmp.eq.s32.totalorder %s9, 1
    %p26 = por %p24, %p25
    %p27 = scmp.ne.s32.totalorder %s19, %s22
    %p28 = scmp.eq.s32.totalorder %s9, 0
    %p29 = por %p27, %p28
    %p30 = scmp.ne.s32.totalorder %s19, %s22
    %p31 = scmp.eq.s32.totalorder %s14, 1
    %p32 = por %p30, %p31
    %p33 = scmp.ne.s32.totalorder %s22, %s23
    %p34 = scmp.eq.s32.totalorder %s14, 0
    %p35 = por %p33, %p34
    %p36 = scmp.ne.s32.totalorder %s22, %s23
    %p37 = scmp.eq.s32.totalorder %s15, 1
    %p38 = por %p36, %p37
    %p40 = scmp.ne.s32.totalorder %s23, %s39
    %p41 = scmp.eq.s32.totalorder %s15, 0
    %p42 = por %p40, %p41
    %s44 = sadd.s32 %s43, 1
    %p47 = scmp.eq.s32.totalorder %s9, 1
    %p48 = scmp.ne.s32.totalorder %s43, %s45
    %p49 = scmp.eq.s32.totalorder %s9, 0
    %p50 = por %p48, %p49
    %p51 = scmp.ne.s32.totalorder %s43, %s45
    %p52 = scmp.eq.s32.totalorder %s14, 1
    %p53 = por %p51, %p52
    %p54 = scmp.ne.s32.totalorder %s45, %s46
    %p55 = scmp.eq.s32.totalorder %s14, 0
    %p56 = por %p54, %p55
    %p57 = scmp.ne.s32.totalorder %s45, %s46
    %p58 = scmp.eq.s32.totalorder %s15, 1
    %p59 = por %p57, %p58
    %p61 = scmp.ne.s32.totalorder %s46, %s60
    %p62 = scmp.eq.s32.totalorder %s15, 0
    %p63 = por %p61, %p62
    %s65 = sadd.s32 %s64, 1
    %p68 = scmp.eq.s32.totalorder %s9, 1
    %p69 = scmp.ne.s32.totalorder %s64, %s66
    %p70 = scmp.eq.s32.totalorder %s9, 0
    %p71 = por %p69, %p70
    %p72 = scmp.ne.s32.totalorder %s64, %s66
    %p73 = scmp.eq.s32.totalorder %s14, 1
    %p74 = por %p72, %p73
    %p75 = scmp.ne.s32.totalorder %s66, %s67
    %p76 = scmp.eq.s32.totalorder %s14, 0
    %p77 = por %p75, %p76
    %p78 = scmp.ne.s32.totalorder %s66, %s67
    %p79 = scmp.eq.s32.totalorder %s15, 1
    %p80 = por %p78, %p79
    %p82 = scmp.ne.s32.totalorder %s67, %s81
    %p83 = scmp.eq.s32.totalorder %s15, 0
    %p84 = por %p82, %p83
    %s85 = ssub.s32 %s9, %s16
    %p86 = scmp.eq.s32.totalorder %s85, 0
    %s88 = sadd.s32 %s87, 1
    %s89 = scalar_select %p86, %s87, %s88
    %p92 = pneg %p86
    %p93 = scmp.eq.s32.totalorder %s9, 1
    %p94 = por %p92, %p93
    %p95 = scmp.ne.s32.totalorder %s87, %s90
    %p96 = scmp.eq.s32.totalorder %s9, 0
    %p97 = por %p95, %p96
    %p98 = scmp.ne.s32.totalorder %s87, %s90
    %p99 = scmp.eq.s32.totalorder %s14, 1
    %p100 = por %p98, %p99
    %p101 = scmp.ne.s32.totalorder %s90, %s91
    %p102 = scmp.eq.s32.totalorder %s14, 0
    %p103 = por %p101, %p102
    %p104 = scmp.ne.s32.totalorder %s90, %s91
    %p105 = scmp.eq.s32.totalorder %s15, 1
    %p106 = por %p104, %p105
    %p108 = scmp.ne.s32.totalorder %s91, %s107
    %p109 = scmp.eq.s32.totalorder %s15, 0
    %p110 = por %p108, %p109
    %p111 = scmp.le.s32.totalorder 1, %s9
    %p112 = scmp.lt.s32.totalorder %s9, 3
    %p113 = pnand %p111, %p112
    %p114 = pneg %p113
    // Predicated region
    $region9: #{cnn_forward.3} parent=5 // pred_check
      _
    $region10: #{cnn_forward.3} parent=5 // pred_check_branch
      %116 = sbr.rel (%p113) target = $region12
    $region11: #{cnn_forward.3} parent=5 // pred_region
      %s117 = ssub.s32 %s9, 1
      // Predicated region
      $region13: #{cnn_forward.3} parent=11 // pred_check
        %p118 = pneg %p56
      $region14: #{cnn_forward.3} parent=11 // pred_check_branch
        %120 = sbr.rel (%p118) target = $region16
      $region15: #{cnn_forward.3} parent=11 // pred_region
        _
      $region16: #{cnn_forward.3} parent=11 // pred_fallthru
        _
      // Predicated region
      $region17: #{cnn_forward.3} parent=11 // pred_check
        %p121 = pneg %p77
      $region18: #{cnn_forward.3} parent=11 // pred_check_branch
        %123 = sbr.rel (%p121) target = $region20
      $region19: #{cnn_forward.3} parent=11 // pred_region
        _
      $region20: #{cnn_forward.3} parent=11 // pred_fallthru
        _
    $region12: #{cnn_forward.3} parent=5 // pred_fallthru
      _
    %p124 = scmp.lt.s32.totalorder %s9, 2
    // Predicated region
    $region21: #{cnn_forward.3} parent=5 // pred_check
      %p125 = pneg %p124
    $region22: #{cnn_forward.3} parent=5 // pred_check_branch
      %127 = sbr.rel (%p125) target = $region24
    $region23: #{cnn_forward.3} parent=5 // pred_region
      // Predicated region
      $region25: #{cnn_forward.3} parent=23 // pred_check
        %p128 = pneg %p29
      $region26: #{cnn_forward.3} parent=23 // pred_check_branch
        %130 = sbr.rel (%p128) target = $region28
      $region27: #{cnn_forward.3} parent=23 // pred_region
        %p131 = scmp.lt.s32.totalorder %s9, 1
        %s132 = scalar_select %p131, %s9, 1
        %s133 = smul.addr %s132, 128
        %s134 = smul.addr %s133, 4
        %s135 = scalar_lea.vmem %s0, %s134
      $region28: #{cnn_forward.3} parent=23 // pred_fallthru
        _
    $region24: #{cnn_forward.3} parent=5 // pred_fallthru
      _
    %p136 = scmp.le.s32.totalorder 1, %s9
    %p137 = scmp.lt.s32.totalorder %s9, 3
    %p138 = pnand %p136, %p137
    %p139 = pneg %p138
    // Predicated region
    $region29: #{cnn_forward.3} parent=5 // pred_check
      _
    $region30: #{cnn_forward.3} parent=5 // pred_check_branch
      %141 = sbr.rel (%p138) target = $region32
    $region31: #{cnn_forward.3} parent=5 // pred_region
      %s142 = ssub.s32 %s9, 1
      %p143 = scmp.lt.s32.totalorder %s14, 1
      %s144 = scalar_select %p143, %s14, 1
      %s145 = smul.addr %s144, 128
      %s146 = smul.addr %s145, 4
      %s147 = scalar_lea.vmem %s0, %s146
      %p148 = pneg %p35
      %p149 = pneg %p32
      %p150 = pneg %p56
      %p151 = pneg %p53
      %p152 = pneg %p77
      %p153 = pneg %p74
      %p154 = pneg %p103
      %p155 = pneg %p100
      %p156 = scmp.lt.s32.totalorder %s14, 1
      %s157 = scalar_select %p156, %s14, 1
      %s158 = smul.addr %s157, 8
      %s159 = smul.addr %s158, 4
      %s160 = scalar_lea.vmem %s3, %s159
      %p161 = scmp.lt.s32.totalorder %s14, 1
      %s162 = scalar_select %p161, %s14, 1
      %s163 = smul.addr %s162, 128
      %s164 = smul.addr %s163, 4
      %s165 = scalar_lea.vmem %s0, %s164
      %p166 = scmp.lt.s32.totalorder %s14, 1
      %s167 = scalar_select %p166, %s14, 1
      %s168 = smul.addr %s167, 8
      %s169 = smul.addr %s168, 4
      %s170 = scalar_lea.vmem %s3, %s169
      %v172 = vld [vmem:[%s1] sm:$0xf]
      %v173 = vld [vmem:[%s1 + $0x4] sm:$0xf]
      %v174 = vld [vmem:[%s1 + $0x8] sm:$0xf]
      %v175 = vld [vmem:[%s1 + $0xc] sm:$0xf]
      %v176 = vld [vmem:[%s165] sm:$0xff]
      %v177 = vld [vmem:[%s165 + $0x8] sm:$0xff]
      %v178 = vld [vmem:[%s165 + $0x10] sm:$0xff]
      %v179 = vld [vmem:[%s165 + $0x18] sm:$0x11]
      %v184 = vunpack.c.l.b16 %v172
      %v185 = vunpack.c.l.b16 %v173
      %v186 = vunpack.c.l.b16 %v174
      %v187 = vunpack.c.l.b16 %v175
      %v188 = vpack.c.b16 %v185, %v184
      %v189 = vpack.c.b16 %v187, %v186
      %v194 = vunpack.c.l.b16 %v176
      %v195 = vunpack.c.h.b16 %v176
      %v196 = vunpack.c.l.b16 %v177
      %v197 = vunpack.c.h.b16 %v177
      %v198 = vunpack.c.l.b16 %v178
      %v199 = vunpack.c.h.b16 %v178
      %v200 = vunpack.c.l.b16 %v179
      %v201 = vunpack.c.h.b16 %v179
      %v202 = vpack.c.b16 %v196, %v194
      %v203 = vpack.c.b16 %v197, %v195
      %v204 = vpack.c.b16 %v200, %v198
      %v205 = vpack.c.b16 %v201, %v199
      %vm208 = vcmask 203776
      %v210 = vsel %vm208, %v188, 0
      %v213 = vsel %vm208, %v189, 0
      %vm215 = vcmask 1043456
      %vm216 = vcmask 1044480
      %v217 = vsel %vm215, 4294967295, 65535
      %v218 = vsel %vm216, %v217, 0
      %v220 = vand.u32 %v204, %v218
      %v223 = vand.u32 %v205, %v218
      %225 = vmatprep.subr.bf16.mxu0 %v203
      %226 = vmatpush1.bf16.msra.mxu0 %v202
      %227 = vmatprep.subr.bf16.mxu0 %v223
      %228 = vmatpush1.bf16.msra.mxu0 %v220
      %229 = vmatprep.subr.bf16.mxu0 0
      %230 = vmatpush1.bf16.msra.mxu0 0
      %231 = vmatprep.subr.bf16.mxu0 0
      %232 = vmatpush1.bf16.msra.mxu0 0
      %233 = vmatprep.subr.bf16.mxu0 0
      %234 = vmatpush1.bf16.msra.mxu0 0
      %235 = vmatprep.subr.bf16.mxu0 0
      %236 = vmatpush1.bf16.msra.mxu0 0
      %237 = vmatprep.subr.bf16.mxu0 0
      %238 = vmatpush1.bf16.msra.mxu0 0
      %239 = vmatprep.subr.bf16.mxu0 0
      %240 = vmatpush1.bf16.msra.mxu0 0
      %241 = vmatprep.subr.bf16.mxu0 0
      %242 = vmatpush1.bf16.msra.mxu0 0
      %243 = vmatprep.subr.bf16.mxu0 0
      %244 = vmatpush1.bf16.msra.mxu0 0
      %245 = vmatprep.subr.bf16.mxu0 0
      %246 = vmatpush1.bf16.msra.mxu0 0
      %247 = vmatprep.subr.bf16.mxu0 0
      %248 = vmatpush1.bf16.msra.mxu0 0
      %249 = vmatprep.subr.bf16.mxu0 0
      %250 = vmatpush1.bf16.msra.mxu0 0
      %251 = vmatprep.subr.bf16.mxu0 0
      %252 = vmatpush1.bf16.msra.mxu0 0
      %253 = vmatprep.subr.bf16.mxu0 0
      %254 = vmatpush1.bf16.msra.mxu0 0
      %255 = vmatprep.subr.bf16.mxu0 0
      %256 = vmatpush1.bf16.msra.mxu0 0
      %257 = vmatprep.mubr.bf16.mxu0 0
      %258 = vmatmul.mubr.bf16.gmra.mrb[0].mxu0 %v210
      %v259 = vpop.f32.mrb[0].mxu0
      %v260 = vadd.f32 0.0, %v259
      %v261 = vpop.f32.mrb[0].mxu0
      %v262 = vadd.f32 0.0, %v261
      %v263 = vpop.f32.mrb[0].mxu0
      %v264 = vadd.f32 0.0, %v263
      %v265 = vpop.f32.mrb[0].mxu0
      %v266 = vadd.f32 0.0, %v265
      %267 = vmatprep.mubr.bf16.mxu0 0
      %268 = vmatmul.mubr.bf16.gmra.mrb[0].mxu0 %v213
      %v269 = vpop.f32.mrb[0].mxu0
      %v270 = vadd.f32 0.0, %v269
      %v271 = vpop.f32.mrb[0].mxu0
      %v272 = vadd.f32 0.0, %v271
      %v273 = vpop.f32.mrb[0].mxu0
      %v274 = vadd.f32 0.0, %v273
      %v275 = vpop.f32.mrb[0].mxu0
      %v276 = vadd.f32 0.0, %v275
      %277 = vdwg.mxu0
      %s278 = scalar_lea.vmem %s165, 32
      %v279 = vld [vmem:[%s278] sm:$0xff]
      %v280 = vld [vmem:[%s278 + $0x8] sm:$0xff]
      %v281 = vld [vmem:[%s278 + $0x10] sm:$0xff]
      %v282 = vld [vmem:[%s278 + $0x18] sm:$0x11]
      %v287 = vunpack.c.l.b16 %v279
      %v288 = vunpack.c.h.b16 %v279
      %v289 = vunpack.c.l.b16 %v280
      %v290 = vunpack.c.h.b16 %v280
      %v291 = vunpack.c.l.b16 %v281
      %v292 = vunpack.c.h.b16 %v281
      %v293 = vunpack.c.l.b16 %v282
      %v294 = vunpack.c.h.b16 %v282
      %v295 = vpack.c.b16 %v289, %v287
      %v296 = vpack.c.b16 %v290, %v288
      %v297 = vpack.c.b16 %v293, %v291
      %v298 = vpack.c.b16 %v294, %v292
      %v302 = vand.u32 %v297, %v218
      %v305 = vand.u32 %v298, %v218
      %307 = vmatprep.subr.bf16.mxu0 %v296
      %308 = vmatpush1.bf16.msra.mxu0 %v295
      %309 = vmatprep.subr.bf16.mxu0 %v305
      %310 = vmatpush1.bf16.msra.mxu0 %v302
      %311 = vmatprep.subr.bf16.mxu0 0
      %312 = vmatpush1.bf16.msra.mxu0 0
      %313 = vmatprep.subr.bf16.mxu0 0
      %314 = vmatpush1.bf16.msra.mxu0 0
      %315 = vmatprep.subr.bf16.mxu0 0
      %316 = vmatpush1.bf16.msra.mxu0 0
      %317 = vmatprep.subr.bf16.mxu0 0
      %318 = vmatpush1.bf16.msra.mxu0 0
      %319 = vmatprep.subr.bf16.mxu0 0
      %320 = vmatpush1.bf16.msra.mxu0 0
      %321 = vmatprep.subr.bf16.mxu0 0
      %322 = vmatpush1.bf16.msra.mxu0 0
      %323 = vmatprep.subr.bf16.mxu0 0
      %324 = vmatpush1.bf16.msra.mxu0 0
      %325 = vmatprep.subr.bf16.mxu0 0
      %326 = vmatpush1.bf16.msra.mxu0 0
      %327 = vmatprep.subr.bf16.mxu0 0
      %328 = vmatpush1.bf16.msra.mxu0 0
      %329 = vmatprep.subr.bf16.mxu0 0
      %330 = vmatpush1.bf16.msra.mxu0 0
      %331 = vmatprep.subr.bf16.mxu0 0
      %332 = vmatpush1.bf16.msra.mxu0 0
      %333 = vmatprep.subr.bf16.mxu0 0
      %334 = vmatpush1.bf16.msra.mxu0 0
      %335 = vmatprep.subr.bf16.mxu0 0
      %336 = vmatpush1.bf16.msra.mxu0 0
      %337 = vmatprep.subr.bf16.mxu0 0
      %338 = vmatpush1.bf16.msra.mxu0 0
      %339 = vmatprep.mubr.bf16.mxu0 0
      %340 = vmatmul.mubr.bf16.gmra.mrb[0].mxu0 %v210
      %v341 = vpop.f32.mrb[0].mxu0
      %v342 = vadd.f32 0.0, %v341
      %v343 = vpop.f32.mrb[0].mxu0
      %v344 = vadd.f32 0.0, %v343
      %v345 = vpop.f32.mrb[0].mxu0
      %v346 = vadd.f32 0.0, %v345
      %v347 = vpop.f32.mrb[0].mxu0
      %v348 = vadd.f32 0.0, %v347
      %349 = vmatprep.mubr.bf16.mxu0 0
      %350 = vmatmul.mubr.bf16.gmra.mrb[0].mxu0 %v213
      %v351 = vpop.f32.mrb[0].mxu0
      %v352 = vadd.f32 0.0, %v351
      %v353 = vpop.f32.mrb[0].mxu0
      %v354 = vadd.f32 0.0, %v353
      %v355 = vpop.f32.mrb[0].mxu0
      %v356 = vadd.f32 0.0, %v355
      %v357 = vpop.f32.mrb[0].mxu0
      %v358 = vadd.f32 0.0, %v357
      %359 = vdwg.mxu0
      %v360 = vmax.f32 %v260, %v342
      %v361 = vmax.f32 %v262, %v344
      %v362 = vmax.f32 %v264, %v346
      %v363 = vmax.f32 %v266, %v348
      %v364 = vmax.f32 %v270, %v352
      %v365 = vmax.f32 %v272, %v354
      %v366 = vmax.f32 %v274, %v356
      %v367 = vmax.f32 %v276, %v358
      %s368 = scalar_lea.vmem %s165, 64
      %v369 = vld [vmem:[%s368] sm:$0xff]
      %v370 = vld [vmem:[%s368 + $0x8] sm:$0xff]
      %v371 = vld [vmem:[%s368 + $0x10] sm:$0xff]
      %v372 = vld [vmem:[%s368 + $0x18] sm:$0x11]
      %v377 = vunpack.c.l.b16 %v369
      %v378 = vunpack.c.h.b16 %v369
      %v379 = vunpack.c.l.b16 %v370
      %v380 = vunpack.c.h.b16 %v370
      %v381 = vunpack.c.l.b16 %v371
      %v382 = vunpack.c.h.b16 %v371
      %v383 = vunpack.c.l.b16 %v372
      %v384 = vunpack.c.h.b16 %v372
      %v385 = vpack.c.b16 %v379, %v377
      %v386 = vpack.c.b16 %v380, %v378
      %v387 = vpack.c.b16 %v383, %v381
      %v388 = vpack.c.b16 %v384, %v382
      %v392 = vand.u32 %v387, %v218
      %v395 = vand.u32 %v388, %v218
      %397 = vmatprep.subr.bf16.mxu0 %v386
      %398 = vmatpush1.bf16.msra.mxu0 %v385
      %399 = vmatprep.subr.bf16.mxu0 %v395
      %400 = vmatpush1.bf16.msra.mxu0 %v392
      %401 = vmatprep.subr.bf16.mxu0 0
      %402 = vmatpush1.bf16.msra.mxu0 0
      %403 = vmatprep.subr.bf16.mxu0 0
      %404 = vmatpush1.bf16.msra.mxu0 0
      %405 = vmatprep.subr.bf16.mxu0 0
      %406 = vmatpush1.bf16.msra.mxu0 0
      %407 = vmatprep.subr.bf16.mxu0 0
      %408 = vmatpush1.bf16.msra.mxu0 0
      %409 = vmatprep.subr.bf16.mxu0 0
      %410 = vmatpush1.bf16.msra.mxu0 0
      %411 = vmatprep.subr.bf16.mxu0 0
      %412 = vmatpush1.bf16.msra.mxu0 0
      %413 = vmatprep.subr.bf16.mxu0 0
      %414 = vmatpush1.bf16.msra.mxu0 0
      %415 = vmatprep.subr.bf16.mxu0 0
      %416 = vmatpush1.bf16.msra.mxu0 0
      %417 = vmatprep.subr.bf16.mxu0 0
      %418 = vmatpush1.bf16.msra.mxu0 0
      %419 = vmatprep.subr.bf16.mxu0 0
      %420 = vmatpush1.bf16.msra.mxu0 0
      %421 = vmatprep.subr.bf16.mxu0 0
      %422 = vmatpush1.bf16.msra.mxu0 0
      %423 = vmatprep.subr.bf16.mxu0 0
      %424 = vmatpush1.bf16.msra.mxu0 0
      %425 = vmatprep.subr.bf16.mxu0 0
      %426 = vmatpush1.bf16.msra.mxu0 0
      %427 = vmatprep.subr.bf16.mxu0 0
      %428 = vmatpush1.bf16.msra.mxu0 0
      %429 = vmatprep.mubr.bf16.mxu0 0
      %430 = vmatmul.mubr.bf16.gmra.mrb[0].mxu0 %v210
      %v431 = vpop.f32.mrb[0].mxu0
      %v432 = vadd.f32 0.0, %v431
      %v433 = vpop.f32.mrb[0].mxu0
      %v434 = vadd.f32 0.0, %v433
      %v435 = vpop.f32.mrb[0].mxu0
      %v436 = vadd.f32 0.0, %v435
      %v437 = vpop.f32.mrb[0].mxu0
      %v438 = vadd.f32 0.0, %v437
      %439 = vmatprep.mubr.bf16.mxu0 0
      %440 = vmatmul.mubr.bf16.gmra.mrb[0].mxu0 %v213
      %v441 = vpop.f32.mrb[0].mxu0
      %v442 = vadd.f32 0.0, %v441
      %v443 = vpop.f32.mrb[0].mxu0
      %v444 = vadd.f32 0.0, %v443
      %v445 = vpop.f32.mrb[0].mxu0
      %v446 = vadd.f32 0.0, %v445
      %v447 = vpop.f32.mrb[0].mxu0
      %v448 = vadd.f32 0.0, %v447
      %449 = vdwg.mxu0
      %v450 = vmax.f32 %v360, %v432
      %v451 = vmax.f32 %v361, %v434
      %v452 = vmax.f32 %v362, %v436
      %v453 = vmax.f32 %v363, %v438
      %v454 = vmax.f32 %v364, %v442
      %v455 = vmax.f32 %v365, %v444
      %v456 = vmax.f32 %v366, %v446
      %v457 = vmax.f32 %v367, %v448
      %s458 = scalar_lea.vmem %s165, 96
      %v459 = vld [vmem:[%s458] sm:$0xff]
      %v460 = vld [vmem:[%s458 + $0x8] sm:$0xff]
      %v461 = vld [vmem:[%s458 + $0x10] sm:$0xff]
      %v462 = vld [vmem:[%s458 + $0x18] sm:$0x11]
      %v467 = vunpack.c.l.b16 %v459
      %v468 = vunpack.c.h.b16 %v459
      %v469 = vunpack.c.l.b16 %v460
      %v470 = vunpack.c.h.b16 %v460
      %v471 = vunpack.c.l.b16 %v461
      %v472 = vunpack.c.h.b16 %v461
      %v473 = vunpack.c.l.b16 %v462
      %v474 = vunpack.c.h.b16 %v462
      %v475 = vpack.c.b16 %v469, %v467
      %v476 = vpack.c.b16 %v470, %v468
      %v477 = vpack.c.b16 %v473, %v471
      %v478 = vpack.c.b16 %v474, %v472
      %v482 = vand.u32 %v477, %v218
      %v485 = vand.u32 %v478, %v218
      %487 = vmatprep.subr.bf16.mxu0 %v476
      %488 = vmatpush1.bf16.msra.mxu0 %v475
      %489 = vmatprep.subr.bf16.mxu0 %v485
      %490 = vmatpush1.bf16.msra.mxu0 %v482
      %491 = vmatprep.subr.bf16.mxu0 0
      %492 = vmatpush1.bf16.msra.mxu0 0
      %493 = vmatprep.subr.bf16.mxu0 0
      %494 = vmatpush1.bf16.msra.mxu0 0
      %495 = vmatprep.subr.bf16.mxu0 0
      %496 = vmatpush1.bf16.msra.mxu0 0
      %497 = vmatprep.subr.bf16.mxu0 0
      %498 = vmatpush1.bf16.msra.mxu0 0
      %499 = vmatprep.subr.bf16.mxu0 0
      %500 = vmatpush1.bf16.msra.mxu0 0
      %501 = vmatprep.subr.bf16.mxu0 0
      %502 = vmatpush1.bf16.msra.mxu0 0
      %503 = vmatprep.subr.bf16.mxu0 0
      %504 = vmatpush1.bf16.msra.mxu0 0
      %505 = vmatprep.subr.bf16.mxu0 0
      %506 = vmatpush1.bf16.msra.mxu0 0
      %507 = vmatprep.subr.bf16.mxu0 0
      %508 = vmatpush1.bf16.msra.mxu0 0
      %509 = vmatprep.subr.bf16.mxu0 0
      %510 = vmatpush1.bf16.msra.mxu0 0
      %511 = vmatprep.subr.bf16.mxu0 0
      %512 = vmatpush1.bf16.msra.mxu0 0
      %513 = vmatprep.subr.bf16.mxu0 0
      %514 = vmatpush1.bf16.msra.mxu0 0
      %515 = vmatprep.subr.bf16.mxu0 0
      %516 = vmatpush1.bf16.msra.mxu0 0
      %517 = vmatprep.subr.bf16.mxu0 0
      %518 = vmatpush1.bf16.msra.mxu0 0
      %519 = vmatprep.mubr.bf16.mxu0 0
      %520 = vmatmul.mubr.bf16.gmra.mrb[0].mxu0 %v210
      %v521 = vpop.f32.mrb[0].mxu0
      %v522 = vadd.f32 0.0, %v521
      %v523 = vpop.f32.mrb[0].mxu0
      %v524 = vadd.f32 0.0, %v523
      %v525 = vpop.f32.mrb[0].mxu0
      %v526 = vadd.f32 0.0, %v525
      %v527 = vpop.f32.mrb[0].mxu0
      %v528 = vadd.f32 0.0, %v527
      %529 = vmatprep.mubr.bf16.mxu0 0
      %530 = vmatmul.mubr.bf16.gmra.mrb[0].mxu0 %v213
      %v531 = vpop.f32.mrb[0].mxu0
      %v532 = vadd.f32 0.0, %v531
      %v533 = vpop.f32.mrb[0].mxu0
      %v534 = vadd.f32 0.0, %v533
      %v535 = vpop.f32.mrb[0].mxu0
      %v536 = vadd.f32 0.0, %v535
      %v537 = vpop.f32.mrb[0].mxu0
      %v538 = vadd.f32 0.0, %v537
      %539 = vdwg.mxu0
      %v540 = vmax.f32 %v450, %v522
      %v541 = vmax.f32 %v451, %v524
      %v542 = vmax.f32 %v452, %v526
      %v543 = vmax.f32 %v453, %v528
      %v544 = vmax.f32 %v454, %v532
      %v545 = vmax.f32 %v455, %v534
      %v546 = vmax.f32 %v456, %v536
      %v547 = vmax.f32 %v457, %v538
      %s548 = scalar_lea.vmem %s165, 128
      %v549 = vld [vmem:[%s548] sm:$0xff]
      %v550 = vld [vmem:[%s548 + $0x8] sm:$0xff]
      %v551 = vld [vmem:[%s548 + $0x10] sm:$0xff]
      %v552 = vld [vmem:[%s548 + $0x18] sm:$0x11]
      %v557 = vunpack.c.l.b16 %v549
      %v558 = vunpack.c.h.b16 %v549
      %v559 = vunpack.c.l.b16 %v550
      %v560 = vunpack.c.h.b16 %v550
      %v561 = vunpack.c.l.b16 %v551
      %v562 = vunpack.c.h.b16 %v551
      %v563 = vunpack.c.l.b16 %v552
      %v564 = vunpack.c.h.b16 %v552
      %v565 = vpack.c.b16 %v559, %v557
      %v566 = vpack.c.b16 %v560, %v558
      %v567 = vpack.c.b16 %v563, %v561
      %v568 = vpack.c.b16 %v564, %v562
      %v572 = vand.u32 %v567, %v218
      %v575 = vand.u32 %v568, %v218
      %577 = vmatprep.subr.bf16.mxu0 %v566
      %578 = vmatpush1.bf16.msra.mxu0 %v565
      %579 = vmatprep.subr.bf16.mxu0 %v575
      %580 = vmatpush1.bf16.msra.mxu0 %v572
      %581 = vmatprep.subr.bf16.mxu0 0
      %582 = vmatpush1.bf16.msra.mxu0 0
      %583 = vmatprep.subr.bf16.mxu0 0
      %584 = vmatpush1.bf16.msra.mxu0 0
      %585 = vmatprep.subr.bf16.mxu0 0
      %586 = vmatpush1.bf16.msra.mxu0 0
      %587 = vmatprep.subr.bf16.mxu0 0
      %588 = vmatpush1.bf16.msra.mxu0 0
      %589 = vmatprep.subr.bf16.mxu0 0
      %590 = vmatpush1.bf16.msra.mxu0 0
      %591 = vmatprep.subr.bf16.mxu0 0
      %592 = vmatpush1.bf16.msra.mxu0 0
      %593 = vmatprep.subr.bf16.mxu0 0
      %594 = vmatpush1.bf16.msra.mxu0 0
      %595 = vmatprep.subr.bf16.mxu0 0
      %596 = vmatpush1.bf16.msra.mxu0 0
      %597 = vmatprep.subr.bf16.mxu0 0
      %598 = vmatpush1.bf16.msra.mxu0 0
      %599 = vmatprep.subr.bf16.mxu0 0
      %600 = vmatpush1.bf16.msra.mxu0 0
      %601 = vmatprep.subr.bf16.mxu0 0
      %602 = vmatpush1.bf16.msra.mxu0 0
      %603 = vmatprep.subr.bf16.mxu0 0
      %604 = vmatpush1.bf16.msra.mxu0 0
      %605 = vmatprep.subr.bf16.mxu0 0
      %606 = vmatpush1.bf16.msra.mxu0 0
      %607 = vmatprep.subr.bf16.mxu0 0
      %608 = vmatpush1.bf16.msra.mxu0 0
      %609 = vmatprep.mubr.bf16.mxu0 0
      %610 = vmatmul.mubr.bf16.gmra.mrb[0].mxu0 %v210
      %v611 = vpop.f32.mrb[0].mxu0
      %v612 = vadd.f32 0.0, %v611
      %v613 = vpop.f32.mrb[0].mxu0
      %v614 = vadd.f32 0.0, %v613
      %v615 = vpop.f32.mrb[0].mxu0
      %v616 = vadd.f32 0.0, %v615
      %v617 = vpop.f32.mrb[0].mxu0
      %v618 = vadd.f32 0.0, %v617
      %619 = vmatprep.mubr.bf16.mxu0 0
      %620 = vmatmul.mubr.bf16.gmra.mrb[0].mxu0 %v213
      %v621 = vpop.f32.mrb[0].mxu0
      %v622 = vadd.f32 0.0, %v621
      %v623 = vpop.f32.mrb[0].mxu0
      %v624 = vadd.f32 0.0, %v623
      %v625 = vpop.f32.mrb[0].mxu0
      %v626 = vadd.f32 0.0, %v625
      %v627 = vpop.f32.mrb[0].mxu0
      %v628 = vadd.f32 0.0, %v627
      %629 = vdwg.mxu0
      %v630 = vmax.f32 %v540, %v612
      %v631 = vmax.f32 %v541, %v614
      %v632 = vmax.f32 %v542, %v616
      %v633 = vmax.f32 %v543, %v618
      %v634 = vmax.f32 %v544, %v622
      %v635 = vmax.f32 %v545, %v624
      %v636 = vmax.f32 %v546, %v626
      %v637 = vmax.f32 %v547, %v628
      %s638 = scalar_lea.vmem %s165, 160
      %v639 = vld [vmem:[%s638] sm:$0xff]
      %v640 = vld [vmem:[%s638 + $0x8] sm:$0xff]
      %v641 = vld [vmem:[%s638 + $0x10] sm:$0xff]
      %v642 = vld [vmem:[%s638 + $0x18] sm:$0x11]
      %v647 = vunpack.c.l.b16 %v639
      %v648 = vunpack.c.h.b16 %v639
      %v649 = vunpack.c.l.b16 %v640
      %v650 = vunpack.c.h.b16 %v640
      %v651 = vunpack.c.l.b16 %v641
      %v652 = vunpack.c.h.b16 %v641
      %v653 = vunpack.c.l.b16 %v642
      %v654 = vunpack.c.h.b16 %v642
      %v655 = vpack.c.b16 %v649, %v647
      %v656 = vpack.c.b16 %v650, %v648
      %v657 = vpack.c.b16 %v653, %v651
      %v658 = vpack.c.b16 %v654, %v652
      %v662 = vand.u32 %v657, %v218
      %v665 = vand.u32 %v658, %v218
      %667 = vmatprep.subr.bf16.mxu0 %v656
      %668 = vmatpush1.bf16.msra.mxu0 %v655
      %669 = vmatprep.subr.bf16.mxu0 %v665
      %670 = vmatpush1.bf16.msra.mxu0 %v662
      %671 = vmatprep.subr.bf16.mxu0 0
      %672 = vmatpush1.bf16.msra.mxu0 0
      %673 = vmatprep.subr.bf16.mxu0 0
      %674 = vmatpush1.bf16.msra.mxu0 0
      %675 = vmatprep.subr.bf16.mxu0 0
      %676 = vmatpush1.bf16.msra.mxu0 0
      %677 = vmatprep.subr.bf16.mxu0 0
      %678 = vmatpush1.bf16.msra.mxu0 0
      %679 = vmatprep.subr.bf16.mxu0 0
      %680 = vmatpush1.bf16.msra.mxu0 0
      %681 = vmatprep.subr.bf16.mxu0 0
      %682 = vmatpush1.bf16.msra.mxu0 0
      %683 = vmatprep.subr.bf16.mxu0 0
      %684 = vmatpush1.bf16.msra.mxu0 0
      %685 = vmatprep.subr.bf16.mxu0 0
      %686 = vmatpush1.bf16.msra.mxu0 0
      %687 = vmatprep.subr.bf16.mxu0 0
      %688 = vmatpush1.bf16.msra.mxu0 0
      %689 = vmatprep.subr.bf16.mxu0 0
      %690 = vmatpush1.bf16.msra.mxu0 0
      %691 = vmatprep.subr.bf16.mxu0 0
      %692 = vmatpush1.bf16.msra.mxu0 0
      %693 = vmatprep.subr.bf16.mxu0 0
      %694 = vmatpush1.bf16.msra.mxu0 0
      %695 = vmatprep.subr.bf16.mxu0 0
      %696 = vmatpush1.bf16.msra.mxu0 0
      %697 = vmatprep.subr.bf16.mxu0 0
      %698 = vmatpush1.bf16.msra.mxu0 0
      %699 = vmatprep.mubr.bf16.mxu0 0
      %700 = vmatmul.mubr.bf16.gmra.mrb[0].mxu0 %v210
      %v701 = vpop.f32.mrb[0].mxu0
      %v702 = vadd.f32 0.0, %v701
      %v703 = vpop.f32.mrb[0].mxu0
      %v704 = vadd.f32 0.0, %v703
      %v705 = vpop.f32.mrb[0].mxu0
      %v706 = vadd.f32 0.0, %v705
      %v707 = vpop.f32.mrb[0].mxu0
      %v708 = vadd.f32 0.0, %v707
      %709 = vmatprep.mubr.bf16.mxu0 0
      %710 = vmatmul.mubr.bf16.gmra.mrb[0].mxu0 %v213
      %v711 = vpop.f32.mrb[0].mxu0
      %v712 = vadd.f32 0.0, %v711
      %v713 = vpop.f32.mrb[0].mxu0
      %v714 = vadd.f32 0.0, %v713
      %v715 = vpop.f32.mrb[0].mxu0
      %v716 = vadd.f32 0.0, %v715
      %v717 = vpop.f32.mrb[0].mxu0
      %v718 = vadd.f32 0.0, %v717
      %719 = vdwg.mxu0
      %v720 = vmax.f32 %v630, %v702
      %v721 = vmax.f32 %v631, %v704
      %v722 = vmax.f32 %v632, %v706
      %v723 = vmax.f32 %v633, %v708
      %v724 = vmax.f32 %v634, %v712
      %v725 = vmax.f32 %v635, %v714
      %v726 = vmax.f32 %v636, %v716
      %v727 = vmax.f32 %v637, %v718
      %s728 = scalar_lea.vmem %s165, 192
      %v729 = vld [vmem:[%s728] sm:$0xff]
      %v730 = vld [vmem:[%s728 + $0x8] sm:$0xff]
      %v731 = vld [vmem:[%s728 + $0x10] sm:$0xff]
      %v732 = vld [vmem:[%s728 + $0x18] sm:$0x11]
      %v737 = vunpack.c.l.b16 %v729
      %v738 = vunpack.c.h.b16 %v729
      %v739 = vunpack.c.l.b16 %v730
      %v740 = vunpack.c.h.b16 %v730
      %v741 = vunpack.c.l.b16 %v731
      %v742 = vunpack.c.h.b16 %v731
      %v743 = vunpack.c.l.b16 %v732
      %v744 = vunpack.c.h.b16 %v732
      %v745 = vpack.c.b16 %v739, %v737
      %v746 = vpack.c.b16 %v740, %v738
      %v747 = vpack.c.b16 %v743, %v741
      %v748 = vpack.c.b16 %v744, %v742
      %v752 = vand.u32 %v747, %v218
      %v755 = vand.u32 %v748, %v218
      %757 = vmatprep.subr.bf16.mxu0 %v746
      %758 = vmatpush1.bf16.msra.mxu0 %v745
      %759 = vmatprep.subr.bf16.mxu0 %v755
      %760 = vmatpush1.bf16.msra.mxu0 %v752
      %761 = vmatprep.subr.bf16.mxu0 0
      %762 = vmatpush1.bf16.msra.mxu0 0
      %763 = vmatprep.subr.bf16.mxu0 0
      %764 = vmatpush1.bf16.msra.mxu0 0
      %765 = vmatprep.subr.bf16.mxu0 0
      %766 = vmatpush1.bf16.msra.mxu0 0
      %767 = vmatprep.subr.bf16.mxu0 0
      %768 = vmatpush1.bf16.msra.mxu0 0
      %769 = vmatprep.subr.bf16.mxu0 0
      %770 = vmatpush1.bf16.msra.mxu0 0
      %771 = vmatprep.subr.bf16.mxu0 0
      %772 = vmatpush1.bf16.msra.mxu0 0
      %773 = vmatprep.subr.bf16.mxu0 0
      %774 = vmatpush1.bf16.msra.mxu0 0
      %775 = vmatprep.subr.bf16.mxu0 0
      %776 = vmatpush1.bf16.msra.mxu0 0
      %777 = vmatprep.subr.bf16.mxu0 0
      %778 = vmatpush1.bf16.msra.mxu0 0
      %779 = vmatprep.subr.bf16.mxu0 0
      %780 = vmatpush1.bf16.msra.mxu0 0
      %781 = vmatprep.subr.bf16.mxu0 0
      %782 = vmatpush1.bf16.msra.mxu0 0
      %783 = vmatprep.subr.bf16.mxu0 0
      %784 = vmatpush1.bf16.msra.mxu0 0
      %785 = vmatprep.subr.bf16.mxu0 0
      %786 = vmatpush1.bf16.msra.mxu0 0
      %787 = vmatprep.subr.bf16.mxu0 0
      %788 = vmatpush1.bf16.msra.mxu0 0
      %789 = vmatprep.mubr.bf16.mxu0 0
      %790 = vmatmul.mubr.bf16.gmra.mrb[0].mxu0 %v210
      %v791 = vpop.f32.mrb[0].mxu0
      %v792 = vadd.f32 0.0, %v791
      %v793 = vpop.f32.mrb[0].mxu0
      %v794 = vadd.f32 0.0, %v793
      %v795 = vpop.f32.mrb[0].mxu0
      %v796 = vadd.f32 0.0, %v795
      %v797 = vpop.f32.mrb[0].mxu0
      %v798 = vadd.f32 0.0, %v797
      %799 = vmatprep.mubr.bf16.mxu0 0
      %800 = vmatmul.mubr.bf16.gmra.mrb[0].mxu0 %v213
      %v801 = vpop.f32.mrb[0].mxu0
      %v802 = vadd.f32 0.0, %v801
      %v803 = vpop.f32.mrb[0].mxu0
      %v804 = vadd.f32 0.0, %v803
      %v805 = vpop.f32.mrb[0].mxu0
      %v806 = vadd.f32 0.0, %v805
      %v807 = vpop.f32.mrb[0].mxu0
      %v808 = vadd.f32 0.0, %v807
      %809 = vdwg.mxu0
      %v810 = vmax.f32 %v720, %v792
      %v811 = vmax.f32 %v721, %v794
      %v812 = vmax.f32 %v722, %v796
      %v813 = vmax.f32 %v723, %v798
      %v814 = vmax.f32 %v724, %v802
      %v815 = vmax.f32 %v725, %v804
      %v816 = vmax.f32 %v726, %v806
      %v817 = vmax.f32 %v727, %v808
      %s818 = scalar_lea.vmem %s165, 224
      %v819 = vld [vmem:[%s818] sm:$0xff]
      %v820 = vld [vmem:[%s818 + $0x8] sm:$0xff]
      %v821 = vld [vmem:[%s818 + $0x10] sm:$0xff]
      %v822 = vld [vmem:[%s818 + $0x18] sm:$0x11]
      %v827 = vunpack.c.l.b16 %v819
      %v828 = vunpack.c.h.b16 %v819
      %v829 = vunpack.c.l.b16 %v820
      %v830 = vunpack.c.h.b16 %v820
      %v831 = vunpack.c.l.b16 %v821
      %v832 = vunpack.c.h.b16 %v821
      %v833 = vunpack.c.l.b16 %v822
      %v834 = vunpack.c.h.b16 %v822
      %v835 = vpack.c.b16 %v829, %v827
      %v836 = vpack.c.b16 %v830, %v828
      %v837 = vpack.c.b16 %v833, %v831
      %v838 = vpack.c.b16 %v834, %v832
      %v842 = vand.u32 %v837, %v218
      %v845 = vand.u32 %v838, %v218
      %847 = vmatprep.subr.bf16.mxu0 %v836
      %848 = vmatpush1.bf16.msra.mxu0 %v835
      %849 = vmatprep.subr.bf16.mxu0 %v845
      %850 = vmatpush1.bf16.msra.mxu0 %v842
      %851 = vmatprep.subr.bf16.mxu0 0
      %852 = vmatpush1.bf16.msra.mxu0 0
      %853 = vmatprep.subr.bf16.mxu0 0
      %854 = vmatpush1.bf16.msra.mxu0 0
      %855 = vmatprep.subr.bf16.mxu0 0
      %856 = vmatpush1.bf16.msra.mxu0 0
      %857 = vmatprep.subr.bf16.mxu0 0
      %858 = vmatpush1.bf16.msra.mxu0 0
      %859 = vmatprep.subr.bf16.mxu0 0
      %860 = vmatpush1.bf16.msra.mxu0 0
      %861 = vmatprep.subr.bf16.mxu0 0
      %862 = vmatpush1.bf16.msra.mxu0 0
      %863 = vmatprep.subr.bf16.mxu0 0
      %864 = vmatpush1.bf16.msra.mxu0 0
      %865 = vmatprep.subr.bf16.mxu0 0
      %866 = vmatpush1.bf16.msra.mxu0 0
      %867 = vmatprep.subr.bf16.mxu0 0
      %868 = vmatpush1.bf16.msra.mxu0 0
      %869 = vmatprep.subr.bf16.mxu0 0
      %870 = vmatpush1.bf16.msra.mxu0 0
      %871 = vmatprep.subr.bf16.mxu0 0
      %872 = vmatpush1.bf16.msra.mxu0 0
      %873 = vmatprep.subr.bf16.mxu0 0
      %874 = vmatpush1.bf16.msra.mxu0 0
      %875 = vmatprep.subr.bf16.mxu0 0
      %876 = vmatpush1.bf16.msra.mxu0 0
      %877 = vmatprep.subr.bf16.mxu0 0
      %878 = vmatpush1.bf16.msra.mxu0 0
      %879 = vmatprep.mubr.bf16.mxu0 0
      %880 = vmatmul.mubr.bf16.gmra.mrb[0].mxu0 %v210
      %v881 = vpop.f32.mrb[0].mxu0
      %v882 = vadd.f32 0.0, %v881
      %v883 = vpop.f32.mrb[0].mxu0
      %v884 = vadd.f32 0.0, %v883
      %v885 = vpop.f32.mrb[0].mxu0
      %v886 = vadd.f32 0.0, %v885
      %v887 = vpop.f32.mrb[0].mxu0
      %v888 = vadd.f32 0.0, %v887
      %889 = vmatprep.mubr.bf16.mxu0 0
      %890 = vmatmul.mubr.bf16.gmra.mrb[0].mxu0 %v213
      %v891 = vpop.f32.mrb[0].mxu0
      %v892 = vadd.f32 0.0, %v891
      %v893 = vpop.f32.mrb[0].mxu0
      %v894 = vadd.f32 0.0, %v893
      %v895 = vpop.f32.mrb[0].mxu0
      %v896 = vadd.f32 0.0, %v895
      %v897 = vpop.f32.mrb[0].mxu0
      %v898 = vadd.f32 0.0, %v897
      %899 = vdwg.mxu0
      %v900 = vmax.f32 %v810, %v882
      %v901 = vmax.f32 %v811, %v884
      %v902 = vmax.f32 %v812, %v886
      %v903 = vmax.f32 %v813, %v888
      %v904 = vmax.f32 %v814, %v892
      %v905 = vmax.f32 %v815, %v894
      %v906 = vmax.f32 %v816, %v896
      %v907 = vmax.f32 %v817, %v898
      %s908 = scalar_lea.vmem %s165, 256
      %v909 = vld [vmem:[%s908] sm:$0xff]
      %v910 = vld [vmem:[%s908 + $0x8] sm:$0xff]
      %v911 = vld [vmem:[%s908 + $0x10] sm:$0xff]
      %v912 = vld [vmem:[%s908 + $0x18] sm:$0x11]
      %v917 = vunpack.c.l.b16 %v909
      %v918 = vunpack.c.h.b16 %v909
      %v919 = vunpack.c.l.b16 %v910
      %v920 = vunpack.c.h.b16 %v910
      %v921 = vunpack.c.l.b16 %v911
      %v922 = vunpack.c.h.b16 %v911
      %v923 = vunpack.c.l.b16 %v912
      %v924 = vunpack.c.h.b16 %v912
      %v925 = vpack.c.b16 %v919, %v917
      %v926 = vpack.c.b16 %v920, %v918
      %v927 = vpack.c.b16 %v923, %v921
      %v928 = vpack.c.b16 %v924, %v922
      %v932 = vand.u32 %v927, %v218
      %v935 = vand.u32 %v928, %v218
      %937 = vmatprep.subr.bf16.mxu0 %v926
      %938 = vmatpush1.bf16.msra.mxu0 %v925
      %939 = vmatprep.subr.bf16.mxu0 %v935
      %940 = vmatpush1.bf16.msra.mxu0 %v932
      %941 = vmatprep.subr.bf16.mxu0 0
      %942 = vmatpush1.bf16.msra.mxu0 0
      %943 = vmatprep.subr.bf16.mxu0 0
      %944 = vmatpush1.bf16.msra.mxu0 0
      %945 = vmatprep.subr.bf16.mxu0 0
      %946 = vmatpush1.bf16.msra.mxu0 0
      %947 = vmatprep.subr.bf16.mxu0 0
      %948 = vmatpush1.bf16.msra.mxu0 0
      %949 = vmatprep.subr.bf16.mxu0 0
      %950 = vmatpush1.bf16.msra.mxu0 0
      %951 = vmatprep.subr.bf16.mxu0 0
      %952 = vmatpush1.bf16.msra.mxu0 0
      %953 = vmatprep.subr.bf16.mxu0 0
      %954 = vmatpush1.bf16.msra.mxu0 0
      %955 = vmatprep.subr.bf16.mxu0 0
      %956 = vmatpush1.bf16.msra.mxu0 0
      %957 = vmatprep.subr.bf16.mxu0 0
      %958 = vmatpush1.bf16.msra.mxu0 0
      %959 = vmatprep.subr.bf16.mxu0 0
      %960 = vmatpush1.bf16.msra.mxu0 0
      %961 = vmatprep.subr.bf16.mxu0 0
      %962 = vmatpush1.bf16.msra.mxu0 0
      %963 = vmatprep.subr.bf16.mxu0 0
      %964 = vmatpush1.bf16.msra.mxu0 0
      %965 = vmatprep.subr.bf16.mxu0 0
      %966 = vmatpush1.bf16.msra.mxu0 0
      %967 = vmatprep.subr.bf16.mxu0 0
      %968 = vmatpush1.bf16.msra.mxu0 0
      %969 = vmatprep.mubr.bf16.mxu0 0
      %970 = vmatmul.mubr.bf16.gmra.mrb[0].mxu0 %v210
      %v971 = vpop.f32.mrb[0].mxu0
      %v972 = vadd.f32 0.0, %v971
      %v973 = vpop.f32.mrb[0].mxu0
      %v974 = vadd.f32 0.0, %v973
      %v975 = vpop.f32.mrb[0].mxu0
      %v976 = vadd.f32 0.0, %v975
      %v977 = vpop.f32.mrb[0].mxu0
      %v978 = vadd.f32 0.0, %v977
      %979 = vmatprep.mubr.bf16.mxu0 0
      %980 = vmatmul.mubr.bf16.gmra.mrb[0].mxu0 %v213
      %v981 = vpop.f32.mrb[0].mxu0
      %v982 = vadd.f32 0.0, %v981
      %v983 = vpop.f32.mrb[0].mxu0
      %v984 = vadd.f32 0.0, %v983
      %v985 = vpop.f32.mrb[0].mxu0
      %v986 = vadd.f32 0.0, %v985
      %v987 = vpop.f32.mrb[0].mxu0
      %v988 = vadd.f32 0.0, %v987
      %989 = vdwg.mxu0
      %v990 = vmax.f32 %v900, %v972
      %v991 = vmax.f32 %v901, %v974
      %v992 = vmax.f32 %v902, %v976
      %v993 = vmax.f32 %v903, %v978
      %v994 = vmax.f32 %v904, %v982
      %v995 = vmax.f32 %v905, %v984
      %v996 = vmax.f32 %v906, %v986
      %v997 = vmax.f32 %v907, %v988
      %s998 = scalar_lea.vmem %s165, 288
      %v999 = vld [vmem:[%s998] sm:$0xff]
      %v1000 = vld [vmem:[%s998 + $0x8] sm:$0xff]
      %v1001 = vld [vmem:[%s998 + $0x10] sm:$0xff]
      %v1002 = vld [vmem:[%s998 + $0x18] sm:$0x11]
      %v1007 = vunpack.c.l.b16 %v999
      %v1008 = vunpack.c.h.b16 %v999
      %v1009 = vunpack.c.l.b16 %v1000
      %v1010 = vunpack.c.h.b16 %v1000
      %v1011 = vunpack.c.l.b16 %v1001
      %v1012 = vunpack.c.h.b16 %v1001
      %v1013 = vunpack.c.l.b16 %v1002
      %v1014 = vunpack.c.h.b16 %v1002
      %v1015 = vpack.c.b16 %v1009, %v1007
      %v1016 = vpack.c.b16 %v1010, %v1008
      %v1017 = vpack.c.b16 %v1013, %v1011
      %v1018 = vpack.c.b16 %v1014, %v1012
      %v1022 = vand.u32 %v1017, %v218
      %v1025 = vand.u32 %v1018, %v218
      %1027 = vmatprep.subr.bf16.mxu0 %v1016
      %1028 = vmatpush1.bf16.msra.mxu0 %v1015
      %1029 = vmatprep.subr.bf16.mxu0 %v1025
      %1030 = vmatpush1.bf16.msra.mxu0 %v1022
      %1031 = vmatprep.subr.bf16.mxu0 0
      %1032 = vmatpush1.bf16.msra.mxu0 0
      %1033 = vmatprep.subr.bf16.mxu0 0
      %1034 = vmatpush1.bf16.msra.mxu0 0
      %1035 = vmatprep.subr.bf16.mxu0 0
      %1036 = vmatpush1.bf16.msra.mxu0 0
      %1037 = vmatprep.subr.bf16.mxu0 0
      %1038 = vmatpush1.bf16.msra.mxu0 0
      %1039 = vmatprep.subr.bf16.mxu0 0
      %1040 = vmatpush1.bf16.msra.mxu0 0
      %1041 = vmatprep.subr.bf16.mxu0 0
      %1042 = vmatpush1.bf16.msra.mxu0 0
      %1043 = vmatprep.subr.bf16.mxu0 0
      %1044 = vmatpush1.bf16.msra.mxu0 0
      %1045 = vmatprep.subr.bf16.mxu0 0
      %1046 = vmatpush1.bf16.msra.mxu0 0
      %1047 = vmatprep.subr.bf16.mxu0 0
      %1048 = vmatpush1.bf16.msra.mxu0 0
      %1049 = vmatprep.subr.bf16.mxu0 0
      %1050 = vmatpush1.bf16.msra.mxu0 0
      %1051 = vmatprep.subr.bf16.mxu0 0
      %1052 = vmatpush1.bf16.msra.mxu0 0
      %1053 = vmatprep.subr.bf16.mxu0 0
      %1054 = vmatpush1.bf16.msra.mxu0 0
      %1055 = vmatprep.subr.bf16.mxu0 0
      %1056 = vmatpush1.bf16.msra.mxu0 0
      %1057 = vmatprep.subr.bf16.mxu0 0
      %1058 = vmatpush1.bf16.msra.mxu0 0
      %1059 = vmatprep.mubr.bf16.mxu0 0
      %1060 = vmatmul.mubr.bf16.gmra.mrb[0].mxu0 %v210
      %v1061 = vpop.f32.mrb[0].mxu0
      %v1062 = vadd.f32 0.0, %v1061
      %v1063 = vpop.f32.mrb[0].mxu0
      %v1064 = vadd.f32 0.0, %v1063
      %v1065 = vpop.f32.mrb[0].mxu0
      %v1066 = vadd.f32 0.0, %v1065
      %v1067 = vpop.f32.mrb[0].mxu0
      %v1068 = vadd.f32 0.0, %v1067
      %1069 = vmatprep.mubr.bf16.mxu0 0
      %1070 = vmatmul.mubr.bf16.gmra.mrb[0].mxu0 %v213
      %v1071 = vpop.f32.mrb[0].mxu0
      %v1072 = vadd.f32 0.0, %v1071
      %v1073 = vpop.f32.mrb[0].mxu0
      %v1074 = vadd.f32 0.0, %v1073
      %v1075 = vpop.f32.mrb[0].mxu0
      %v1076 = vadd.f32 0.0, %v1075
      %v1077 = vpop.f32.mrb[0].mxu0
      %v1078 = vadd.f32 0.0, %v1077
      %1079 = vdwg.mxu0
      %v1080 = vmax.f32 %v990, %v1062
      %v1081 = vmax.f32 %v991, %v1064
      %v1082 = vmax.f32 %v992, %v1066
      %v1083 = vmax.f32 %v993, %v1068
      %v1084 = vmax.f32 %v994, %v1072
      %v1085 = vmax.f32 %v995, %v1074
      %v1086 = vmax.f32 %v996, %v1076
      %v1087 = vmax.f32 %v997, %v1078
      %s1088 = scalar_lea.vmem %s165, 320
      %v1089 = vld [vmem:[%s1088] sm:$0xff]
      %v1090 = vld [vmem:[%s1088 + $0x8] sm:$0xff]
      %v1091 = vld [vmem:[%s1088 + $0x10] sm:$0xff]
      %v1092 = vld [vmem:[%s1088 + $0x18] sm:$0x11]
      %v1097 = vunpack.c.l.b16 %v1089
      %v1098 = vunpack.c.h.b16 %v1089
      %v1099 = vunpack.c.l.b16 %v1090
      %v1100 = vunpack.c.h.b16 %v1090
      %v1101 = vunpack.c.l.b16 %v1091
      %v1102 = vunpack.c.h.b16 %v1091
      %v1103 = vunpack.c.l.b16 %v1092
      %v1104 = vunpack.c.h.b16 %v1092
      %v1105 = vpack.c.b16 %v1099, %v1097
      %v1106 = vpack.c.b16 %v1100, %v1098
      %v1107 = vpack.c.b16 %v1103, %v1101
      %v1108 = vpack.c.b16 %v1104, %v1102
      %v1112 = vand.u32 %v1107, %v218
      %v1115 = vand.u32 %v1108, %v218
      %1117 = vmatprep.subr.bf16.mxu0 %v1106
      %1118 = vmatpush1.bf16.msra.mxu0 %v1105
      %1119 = vmatprep.subr.bf16.mxu0 %v1115
      %1120 = vmatpush1.bf16.msra.mxu0 %v1112
      %1121 = vmatprep.subr.bf16.mxu0 0
      %1122 = vmatpush1.bf16.msra.mxu0 0
      %1123 = vmatprep.subr.bf16.mxu0 0
      %1124 = vmatpush1.bf16.msra.mxu0 0
      %1125 = vmatprep.subr.bf16.mxu0 0
      %1126 = vmatpush1.bf16.msra.mxu0 0
      %1127 = vmatprep.subr.bf16.mxu0 0
      %1128 = vmatpush1.bf16.msra.mxu0 0
      %1129 = vmatprep.subr.bf16.mxu0 0
      %1130 = vmatpush1.bf16.msra.mxu0 0
      %1131 = vmatprep.subr.bf16.mxu0 0
      %1132 = vmatpush1.bf16.msra.mxu0 0
      %1133 = vmatprep.subr.bf16.mxu0 0
      %1134 = vmatpush1.bf16.msra.mxu0 0
      %1135 = vmatprep.subr.bf16.mxu0 0
      %1136 = vmatpush1.bf16.msra.mxu0 0
      %1137 = vmatprep.subr.bf16.mxu0 0
      %1138 = vmatpush1.bf16.msra.mxu0 0
      %1139 = vmatprep.subr.bf16.mxu0 0
      %1140 = vmatpush1.bf16.msra.mxu0 0
      %1141 = vmatprep.subr.bf16.mxu0 0
      %1142 = vmatpush1.bf16.msra.mxu0 0
      %1143 = vmatprep.subr.bf16.mxu0 0
      %1144 = vmatpush1.bf16.msra.mxu0 0
      %1145 = vmatprep.subr.bf16.mxu0 0
      %1146 = vmatpush1.bf16.msra.mxu0 0
      %1147 = vmatprep.subr.bf16.mxu0 0
      %1148 = vmatpush1.bf16.msra.mxu0 0
      %1149 = vmatprep.mubr.bf16.mxu0 0
      %1150 = vmatmul.mubr.bf16.gmra.mrb[0].mxu0 %v210
      %v1151 = vpop.f32.mrb[0].mxu0
      %v1152 = vadd.f32 0.0, %v1151
      %v1153 = vpop.f32.mrb[0].mxu0
      %v1154 = vadd.f32 0.0, %v1153
      %v1155 = vpop.f32.mrb[0].mxu0
      %v1156 = vadd.f32 0.0, %v1155
      %v1157 = vpop.f32.mrb[0].mxu0
      %v1158 = vadd.f32 0.0, %v1157
      %1159 = vmatprep.mubr.bf16.mxu0 0
      %1160 = vmatmul.mubr.bf16.gmra.mrb[0].mxu0 %v213
      %v1161 = vpop.f32.mrb[0].mxu0
      %v1162 = vadd.f32 0.0, %v1161
      %v1163 = vpop.f32.mrb[0].mxu0
      %v1164 = vadd.f32 0.0, %v1163
      %v1165 = vpop.f32.mrb[0].mxu0
      %v1166 = vadd.f32 0.0, %v1165
      %v1167 = vpop.f32.mrb[0].mxu0
      %v1168 = vadd.f32 0.0, %v1167
      %1169 = vdwg.mxu0
      %v1170 = vmax.f32 %v1080, %v1152
      %v1171 = vmax.f32 %v1081, %v1154
      %v1172 = vmax.f32 %v1082, %v1156
      %v1173 = vmax.f32 %v1083, %v1158
      %v1174 = vmax.f32 %v1084, %v1162
      %v1175 = vmax.f32 %v1085, %v1164
      %v1176 = vmax.f32 %v1086, %v1166
      %v1177 = vmax.f32 %v1087, %v1168
      %s1178 = scalar_lea.vmem %s165, 352
      %v1179 = vld [vmem:[%s1178] sm:$0xff]
      %v1180 = vld [vmem:[%s1178 + $0x8] sm:$0xff]
      %v1181 = vld [vmem:[%s1178 + $0x10] sm:$0xff]
      %v1182 = vld [vmem:[%s1178 + $0x18] sm:$0x11]
      %v1187 = vunpack.c.l.b16 %v1179
      %v1188 = vunpack.c.h.b16 %v1179
      %v1189 = vunpack.c.l.b16 %v1180
      %v1190 = vunpack.c.h.b16 %v1180
      %v1191 = vunpack.c.l.b16 %v1181
      %v1192 = vunpack.c.h.b16 %v1181
      %v1193 = vunpack.c.l.b16 %v1182
      %v1194 = vunpack.c.h.b16 %v1182
      %v1195 = vpack.c.b16 %v1189, %v1187
      %v1196 = vpack.c.b16 %v1190, %v1188
      %v1197 = vpack.c.b16 %v1193, %v1191
      %v1198 = vpack.c.b16 %v1194, %v1192
      %v1202 = vand.u32 %v1197, %v218
      %v1205 = vand.u32 %v1198, %v218
      %1207 = vmatprep.subr.bf16.mxu0 %v1196
      %1208 = vmatpush1.bf16.msra.mxu0 %v1195
      %1209 = vmatprep.subr.bf16.mxu0 %v1205
      %1210 = vmatpush1.bf16.msra.mxu0 %v1202
      %1211 = vmatprep.subr.bf16.mxu0 0
      %1212 = vmatpush1.bf16.msra.mxu0 0
      %1213 = vmatprep.subr.bf16.mxu0 0
      %1214 = vmatpush1.bf16.msra.mxu0 0
      %1215 = vmatprep.subr.bf16.mxu0 0
      %1216 = vmatpush1.bf16.msra.mxu0 0
      %1217 = vmatprep.subr.bf16.mxu0 0
      %1218 = vmatpush1.bf16.msra.mxu0 0
      %1219 = vmatprep.subr.bf16.mxu0 0
      %1220 = vmatpush1.bf16.msra.mxu0 0
      %1221 = vmatprep.subr.bf16.mxu0 0
      %1222 = vmatpush1.bf16.msra.mxu0 0
      %1223 = vmatprep.subr.bf16.mxu0 0
      %1224 = vmatpush1.bf16.msra.mxu0 0
      %1225 = vmatprep.subr.bf16.mxu0 0
      %1226 = vmatpush1.bf16.msra.mxu0 0
      %1227 = vmatprep.subr.bf16.mxu0 0
      %1228 = vmatpush1.bf16.msra.mxu0 0
      %1229 = vmatprep.subr.bf16.mxu0 0
      %1230 = vmatpush1.bf16.msra.mxu0 0
      %1231 = vmatprep.subr.bf16.mxu0 0
      %1232 = vmatpush1.bf16.msra.mxu0 0
      %1233 = vmatprep.subr.bf16.mxu0 0
      %1234 = vmatpush1.bf16.msra.mxu0 0
      %1235 = vmatprep.subr.bf16.mxu0 0
      %1236 = vmatpush1.bf16.msra.mxu0 0
      %1237 = vmatprep.subr.bf16.mxu0 0
      %1238 = vmatpush1.bf16.msra.mxu0 0
      %1239 = vmatprep.mubr.bf16.mxu0 0
      %1240 = vmatmul.mubr.bf16.gmra.mrb[0].mxu0 %v210
      %v1241 = vpop.f32.mrb[0].mxu0
      %v1242 = vadd.f32 0.0, %v1241
      %v1243 = vpop.f32.mrb[0].mxu0
      %v1244 = vadd.f32 0.0, %v1243
      %v1245 = vpop.f32.mrb[0].mxu0
      %v1246 = vadd.f32 0.0, %v1245
      %v1247 = vpop.f32.mrb[0].mxu0
      %v1248 = vadd.f32 0.0, %v1247
      %1249 = vmatprep.mubr.bf16.mxu0 0
      %1250 = vmatmul.mubr.bf16.gmra.mrb[0].mxu0 %v213
      %v1251 = vpop.f32.mrb[0].mxu0
      %v1252 = vadd.f32 0.0, %v1251
      %v1253 = vpop.f32.mrb[0].mxu0
      %v1254 = vadd.f32 0.0, %v1253
      %v1255 = vpop.f32.mrb[0].mxu0
      %v1256 = vadd.f32 0.0, %v1255
      %v1257 = vpop.f32.mrb[0].mxu0
      %v1258 = vadd.f32 0.0, %v1257
      %1259 = vdwg.mxu0
      %v1260 = vmax.f32 %v1170, %v1242
      %v1261 = vmax.f32 %v1171, %v1244
      %v1262 = vmax.f32 %v1172, %v1246
      %v1263 = vmax.f32 %v1173, %v1248
      %v1264 = vmax.f32 %v1174, %v1252
      %v1265 = vmax.f32 %v1175, %v1254
      %v1266 = vmax.f32 %v1176, %v1256
      %v1267 = vmax.f32 %v1177, %v1258
      %s1268 = scalar_lea.vmem %s165, 384
      %v1269 = vld [vmem:[%s1268] sm:$0xff]
      %v1270 = vld [vmem:[%s1268 + $0x8] sm:$0xff]
      %v1271 = vld [vmem:[%s1268 + $0x10] sm:$0xff]
      %v1272 = vld [vmem:[%s1268 + $0x18] sm:$0x11]
      %v1277 = vunpack.c.l.b16 %v1269
      %v1278 = vunpack.c.h.b16 %v1269
      %v1279 = vunpack.c.l.b16 %v1270
      %v1280 = vunpack.c.h.b16 %v1270
      %v1281 = vunpack.c.l.b16 %v1271
      %v1282 = vunpack.c.h.b16 %v1271
      %v1283 = vunpack.c.l.b16 %v1272
      %v1284 = vunpack.c.h.b16 %v1272
      %v1285 = vpack.c.b16 %v1279, %v1277
      %v1286 = vpack.c.b16 %v1280, %v1278
      %v1287 = vpack.c.b16 %v1283, %v1281
      %v1288 = vpack.c.b16 %v1284, %v1282
      %v1292 = vand.u32 %v1287, %v218
      %v1295 = vand.u32 %v1288, %v218
      %1297 = vmatprep.subr.bf16.mxu0 %v1286
      %1298 = vmatpush1.bf16.msra.mxu0 %v1285
      %1299 = vmatprep.subr.bf16.mxu0 %v1295
      %1300 = vmatpush1.bf16.msra.mxu0 %v1292
      %1301 = vmatprep.subr.bf16.mxu0 0
      %1302 = vmatpush1.bf16.msra.mxu0 0
      %1303 = vmatprep.subr.bf16.mxu0 0
      %1304 = vmatpush1.bf16.msra.mxu0 0
      %1305 = vmatprep.subr.bf16.mxu0 0
      %1306 = vmatpush1.bf16.msra.mxu0 0
      %1307 = vmatprep.subr.bf16.mxu0 0
      %1308 = vmatpush1.bf16.msra.mxu0 0
      %1309 = vmatprep.subr.bf16.mxu0 0
      %1310 = vmatpush1.bf16.msra.mxu0 0
      %1311 = vmatprep.subr.bf16.mxu0 0
      %1312 = vmatpush1.bf16.msra.mxu0 0
      %1313 = vmatprep.subr.bf16.mxu0 0
      %1314 = vmatpush1.bf16.msra.mxu0 0
      %1315 = vmatprep.subr.bf16.mxu0 0
      %1316 = vmatpush1.bf16.msra.mxu0 0
      %1317 = vmatprep.subr.bf16.mxu0 0
      %1318 = vmatpush1.bf16.msra.mxu0 0
      %1319 = vmatprep.subr.bf16.mxu0 0
      %1320 = vmatpush1.bf16.msra.mxu0 0
      %1321 = vmatprep.subr.bf16.mxu0 0
      %1322 = vmatpush1.bf16.msra.mxu0 0
      %1323 = vmatprep.subr.bf16.mxu0 0
      %1324 = vmatpush1.bf16.msra.mxu0 0
      %1325 = vmatprep.subr.bf16.mxu0 0
      %1326 = vmatpush1.bf16.msra.mxu0 0
      %1327 = vmatprep.subr.bf16.mxu0 0
      %1328 = vmatpush1.bf16.msra.mxu0 0
      %1329 = vmatprep.mubr.bf16.mxu0 0
      %1330 = vmatmul.mubr.bf16.gmra.mrb[0].mxu0 %v210
      %v1331 = vpop.f32.mrb[0].mxu0
      %v1332 = vadd.f32 0.0, %v1331
      %v1333 = vpop.f32.mrb[0].mxu0
      %v1334 = vadd.f32 0.0, %v1333
      %v1335 = vpop.f32.mrb[0].mxu0
      %v1336 = vadd.f32 0.0, %v1335
      %v1337 = vpop.f32.mrb[0].mxu0
      %v1338 = vadd.f32 0.0, %v1337
      %1339 = vmatprep.mubr.bf16.mxu0 0
      %1340 = vmatmul.mubr.bf16.gmra.mrb[0].mxu0 %v213
      %v1341 = vpop.f32.mrb[0].mxu0
      %v1342 = vadd.f32 0.0, %v1341
      %v1343 = vpop.f32.mrb[0].mxu0
      %v1344 = vadd.f32 0.0, %v1343
      %v1345 = vpop.f32.mrb[0].mxu0
      %v1346 = vadd.f32 0.0, %v1345
      %v1347 = vpop.f32.mrb[0].mxu0
      %v1348 = vadd.f32 0.0, %v1347
      %1349 = vdwg.mxu0
      %v1350 = vmax.f32 %v1260, %v1332
      %v1351 = vmax.f32 %v1261, %v1334
      %v1352 = vmax.f32 %v1262, %v1336
      %v1353 = vmax.f32 %v1263, %v1338
      %v1354 = vmax.f32 %v1264, %v1342
      %v1355 = vmax.f32 %v1265, %v1344
      %v1356 = vmax.f32 %v1266, %v1346
      %v1357 = vmax.f32 %v1267, %v1348
      %s1358 = scalar_lea.vmem %s165, 416
      %v1359 = vld [vmem:[%s1358] sm:$0xff]
      %v1360 = vld [vmem:[%s1358 + $0x8] sm:$0xff]
      %v1361 = vld [vmem:[%s1358 + $0x10] sm:$0xff]
      %v1362 = vld [vmem:[%s1358 + $0x18] sm:$0x11]
      %v1367 = vunpack.c.l.b16 %v1359
      %v1368 = vunpack.c.h.b16 %v1359
      %v1369 = vunpack.c.l.b16 %v1360
      %v1370 = vunpack.c.h.b16 %v1360
      %v1371 = vunpack.c.l.b16 %v1361
      %v1372 = vunpack.c.h.b16 %v1361
      %v1373 = vunpack.c.l.b16 %v1362
      %v1374 = vunpack.c.h.b16 %v1362
      %v1375 = vpack.c.b16 %v1369, %v1367
      %v1376 = vpack.c.b16 %v1370, %v1368
      %v1377 = vpack.c.b16 %v1373, %v1371
      %v1378 = vpack.c.b16 %v1374, %v1372
      %v1382 = vand.u32 %v1377, %v218
      %v1385 = vand.u32 %v1378, %v218
      %1387 = vmatprep.subr.bf16.mxu0 %v1376
      %1388 = vmatpush1.bf16.msra.mxu0 %v1375
      %1389 = vmatprep.subr.bf16.mxu0 %v1385
      %1390 = vmatpush1.bf16.msra.mxu0 %v1382
      %1391 = vmatprep.subr.bf16.mxu0 0
      %1392 = vmatpush1.bf16.msra.mxu0 0
      %1393 = vmatprep.subr.bf16.mxu0 0
      %1394 = vmatpush1.bf16.msra.mxu0 0
      %1395 = vmatprep.subr.bf16.mxu0 0
      %1396 = vmatpush1.bf16.msra.mxu0 0
      %1397 = vmatprep.subr.bf16.mxu0 0
      %1398 = vmatpush1.bf16.msra.mxu0 0
      %1399 = vmatprep.subr.bf16.mxu0 0
      %1400 = vmatpush1.bf16.msra.mxu0 0
      %1401 = vmatprep.subr.bf16.mxu0 0
      %1402 = vmatpush1.bf16.msra.mxu0 0
      %1403 = vmatprep.subr.bf16.mxu0 0
      %1404 = vmatpush1.bf16.msra.mxu0 0
      %1405 = vmatprep.subr.bf16.mxu0 0
      %1406 = vmatpush1.bf16.msra.mxu0 0
      %1407 = vmatprep.subr.bf16.mxu0 0
      %1408 = vmatpush1.bf16.msra.mxu0 0
      %1409 = vmatprep.subr.bf16.mxu0 0
      %1410 = vmatpush1.bf16.msra.mxu0 0
      %1411 = vmatprep.subr.bf16.mxu0 0
      %1412 = vmatpush1.bf16.msra.mxu0 0
      %1413 = vmatprep.subr.bf16.mxu0 0
      %1414 = vmatpush1.bf16.msra.mxu0 0
      %1415 = vmatprep.subr.bf16.mxu0 0
      %1416 = vmatpush1.bf16.msra.mxu0 0
      %1417 = vmatprep.subr.bf16.mxu0 0
      %1418 = vmatpush1.bf16.msra.mxu0 0
      %1419 = vmatprep.mubr.bf16.mxu0 0
      %1420 = vmatmul.mubr.bf16.gmra.mrb[0].mxu0 %v210
      %v1421 = vpop.f32.mrb[0].mxu0
      %v1422 = vadd.f32 0.0, %v1421
      %v1423 = vpop.f32.mrb[0].mxu0
      %v1424 = vadd.f32 0.0, %v1423
      %v1425 = vpop.f32.mrb[0].mxu0
      %v1426 = vadd.f32 0.0, %v1425
      %v1427 = vpop.f32.mrb[0].mxu0
      %v1428 = vadd.f32 0.0, %v1427
      %1429 = vmatprep.mubr.bf16.mxu0 0
      %1430 = vmatmul.mubr.bf16.gmra.mrb[0].mxu0 %v213
      %v1431 = vpop.f32.mrb[0].mxu0
      %v1432 = vadd.f32 0.0, %v1431
      %v1433 = vpop.f32.mrb[0].mxu0
      %v1434 = vadd.f32 0.0, %v1433
      %v1435 = vpop.f32.mrb[0].mxu0
      %v1436 = vadd.f32 0.0, %v1435
      %v1437 = vpop.f32.mrb[0].mxu0
      %v1438 = vadd.f32 0.0, %v1437
      %1439 = vdwg.mxu0
      %v1440 = vmax.f32 %v1350, %v1422
      %v1441 = vmax.f32 %v1351, %v1424
      %v1442 = vmax.f32 %v1352, %v1426
      %v1443 = vmax.f32 %v1353, %v1428
      %v1444 = vmax.f32 %v1354, %v1432
      %v1445 = vmax.f32 %v1355, %v1434
      %v1446 = vmax.f32 %v1356, %v1436
      %v1447 = vmax.f32 %v1357, %v1438
      %s1448 = scalar_lea.vmem %s165, 448
      %v1449 = vld [vmem:[%s1448] sm:$0xff]
      %v1450 = vld [vmem:[%s1448 + $0x8] sm:$0xff]
      %v1451 = vld [vmem:[%s1448 + $0x10] sm:$0xff]
      %v1452 = vld [vmem:[%s1448 + $0x18] sm:$0x11]
      %v1457 = vunpack.c.l.b16 %v1449
      %v1458 = vunpack.c.h.b16 %v1449
      %v1459 = vunpack.c.l.b16 %v1450
      %v1460 = vunpack.c.h.b16 %v1450
      %v1461 = vunpack.c.l.b16 %v1451
      %v1462 = vunpack.c.h.b16 %v1451
      %v1463 = vunpack.c.l.b16 %v1452
      %v1464 = vunpack.c.h.b16 %v1452
      %v1465 = vpack.c.b16 %v1459, %v1457
      %v1466 = vpack.c.b16 %v1460, %v1458
      %v1467 = vpack.c.b16 %v1463, %v1461
      %v1468 = vpack.c.b16 %v1464, %v1462
      %v1472 = vand.u32 %v1467, %v218
      %v1475 = vand.u32 %v1468, %v218
      %1477 = vmatprep.subr.bf16.mxu0 %v1466
      %1478 = vmatpush1.bf16.msra.mxu0 %v1465
      %1479 = vmatprep.subr.bf16.mxu0 %v1475
      %1480 = vmatpush1.bf16.msra.mxu0 %v1472
      %1481 = vmatprep.subr.bf16.mxu0 0
      %1482 = vmatpush1.bf16.msra.mxu0 0
      %1483 = vmatprep.subr.bf16.mxu0 0
      %1484 = vmatpush1.bf16.msra.mxu0 0
      %1485 = vmatprep.subr.bf16.mxu0 0
      %1486 = vmatpush1.bf16.msra.mxu0 0
      %1487 = vmatprep.subr.bf16.mxu0 0
      %1488 = vmatpush1.bf16.msra.mxu0 0
      %1489 = vmatprep.subr.bf16.mxu0 0
      %1490 = vmatpush1.bf16.msra.mxu0 0
      %1491 = vmatprep.subr.bf16.mxu0 0
      %1492 = vmatpush1.bf16.msra.mxu0 0
      %1493 = vmatprep.subr.bf16.mxu0 0
      %1494 = vmatpush1.bf16.msra.mxu0 0
      %1495 = vmatprep.subr.bf16.mxu0 0
      %1496 = vmatpush1.bf16.msra.mxu0 0
      %1497 = vmatprep.subr.bf16.mxu0 0
      %1498 = vmatpush1.bf16.msra.mxu0 0
      %1499 = vmatprep.subr.bf16.mxu0 0
      %1500 = vmatpush1.bf16.msra.mxu0 0
      %1501 = vmatprep.subr.bf16.mxu0 0
      %1502 = vmatpush1.bf16.msra.mxu0 0
      %1503 = vmatprep.subr.bf16.mxu0 0
      %1504 = vmatpush1.bf16.msra.mxu0 0
      %1505 = vmatprep.subr.bf16.mxu0 0
      %1506 = vmatpush1.bf16.msra.mxu0 0
      %1507 = vmatprep.subr.bf16.mxu0 0
      %1508 = vmatpush1.bf16.msra.mxu0 0
      %1509 = vmatprep.mubr.bf16.mxu0 0
      %1510 = vmatmul.mubr.bf16.gmra.mrb[0].mxu0 %v210
      %v1511 = vpop.f32.mrb[0].mxu0
      %v1512 = vadd.f32 0.0, %v1511
      %v1513 = vpop.f32.mrb[0].mxu0
      %v1514 = vadd.f32 0.0, %v1513
      %v1515 = vpop.f32.mrb[0].mxu0
      %v1516 = vadd.f32 0.0, %v1515
      %v1517 = vpop.f32.mrb[0].mxu0
      %v1518 = vadd.f32 0.0, %v1517
      %1519 = vmatprep.mubr.bf16.mxu0 0
      %1520 = vmatmul.mubr.bf16.gmra.mrb[0].mxu0 %v213
      %v1521 = vpop.f32.mrb[0].mxu0
      %v1522 = vadd.f32 0.0, %v1521
      %v1523 = vpop.f32.mrb[0].mxu0
      %v1524 = vadd.f32 0.0, %v1523
      %v1525 = vpop.f32.mrb[0].mxu0
      %v1526 = vadd.f32 0.0, %v1525
      %v1527 = vpop.f32.mrb[0].mxu0
      %v1528 = vadd.f32 0.0, %v1527
      %1529 = vdwg.mxu0
      %v1530 = vmax.f32 %v1440, %v1512
      %v1531 = vmax.f32 %v1441, %v1514
      %v1532 = vmax.f32 %v1442, %v1516
      %v1533 = vmax.f32 %v1443, %v1518
      %v1534 = vmax.f32 %v1444, %v1522
      %v1535 = vmax.f32 %v1445, %v1524
      %v1536 = vmax.f32 %v1446, %v1526
      %v1537 = vmax.f32 %v1447, %v1528
      %s1538 = scalar_lea.vmem %s165, 480
      %v1539 = vld [vmem:[%s1538] sm:$0xff]
      %v1540 = vld [vmem:[%s1538 + $0x8] sm:$0xff]
      %v1541 = vld [vmem:[%s1538 + $0x10] sm:$0xff]
      %v1542 = vld [vmem:[%s1538 + $0x18] sm:$0x11]
      %v1547 = vunpack.c.l.b16 %v1539
      %v1548 = vunpack.c.h.b16 %v1539
      %v1549 = vunpack.c.l.b16 %v1540
      %v1550 = vunpack.c.h.b16 %v1540
      %v1551 = vunpack.c.l.b16 %v1541
      %v1552 = vunpack.c.h.b16 %v1541
      %v1553 = vunpack.c.l.b16 %v1542
      %v1554 = vunpack.c.h.b16 %v1542
      %v1555 = vpack.c.b16 %v1549, %v1547
      %v1556 = vpack.c.b16 %v1550, %v1548
      %v1557 = vpack.c.b16 %v1553, %v1551
      %v1558 = vpack.c.b16 %v1554, %v1552
      %v1562 = vand.u32 %v1557, %v218
      %v1565 = vand.u32 %v1558, %v218
      %1567 = vmatprep.subr.bf16.mxu0 %v1556
      %1568 = vmatpush1.bf16.msra.mxu0 %v1555
      %1569 = vmatprep.subr.bf16.mxu0 %v1565
      %1570 = vmatpush1.bf16.msra.mxu0 %v1562
      %1571 = vmatprep.subr.bf16.mxu0 0
      %1572 = vmatpush1.bf16.msra.mxu0 0
      %1573 = vmatprep.subr.bf16.mxu0 0
      %1574 = vmatpush1.bf16.msra.mxu0 0
      %1575 = vmatprep.subr.bf16.mxu0 0
      %1576 = vmatpush1.bf16.msra.mxu0 0
      %1577 = vmatprep.subr.bf16.mxu0 0
      %1578 = vmatpush1.bf16.msra.mxu0 0
      %1579 = vmatprep.subr.bf16.mxu0 0
      %1580 = vmatpush1.bf16.msra.mxu0 0
      %1581 = vmatprep.subr.bf16.mxu0 0
      %1582 = vmatpush1.bf16.msra.mxu0 0
      %1583 = vmatprep.subr.bf16.mxu0 0
      %1584 = vmatpush1.bf16.msra.mxu0 0
      %1585 = vmatprep.subr.bf16.mxu0 0
      %1586 = vmatpush1.bf16.msra.mxu0 0
      %1587 = vmatprep.subr.bf16.mxu0 0
      %1588 = vmatpush1.bf16.msra.mxu0 0
      %1589 = vmatprep.subr.bf16.mxu0 0
      %1590 = vmatpush1.bf16.msra.mxu0 0
      %1591 = vmatprep.subr.bf16.mxu0 0
      %1592 = vmatpush1.bf16.msra.mxu0 0
      %1593 = vmatprep.subr.bf16.mxu0 0
      %1594 = vmatpush1.bf16.msra.mxu0 0
      %1595 = vmatprep.subr.bf16.mxu0 0
      %1596 = vmatpush1.bf16.msra.mxu0 0
      %1597 = vmatprep.subr.bf16.mxu0 0
      %1598 = vmatpush1.bf16.msra.mxu0 0
      %1599 = vmatprep.mubr.bf16.mxu0 0
      %1600 = vmatmul.mubr.bf16.gmra.mrb[0].mxu0 %v210
      %v1601 = vpop.f32.mrb[0].mxu0
      %v1602 = vadd.f32 0.0, %v1601
      %v1603 = vpop.f32.mrb[0].mxu0
      %v1604 = vadd.f32 0.0, %v1603
      %v1605 = vpop.f32.mrb[0].mxu0
      %v1606 = vadd.f32 0.0, %v1605
      %v1607 = vpop.f32.mrb[0].mxu0
      %v1608 = vadd.f32 0.0, %v1607
      %1609 = vmatprep.mubr.bf16.mxu0 0
      %1610 = vmatmul.mubr.bf16.gmra.mrb[0].mxu0 %v213
      %v1611 = vpop.f32.mrb[0].mxu0
      %v1612 = vadd.f32 0.0, %v1611
      %v1613 = vpop.f32.mrb[0].mxu0
      %v1614 = vadd.f32 0.0, %v1613
      %v1615 = vpop.f32.mrb[0].mxu0
      %v1616 = vadd.f32 0.0, %v1615
      %v1617 = vpop.f32.mrb[0].mxu0
      %v1618 = vadd.f32 0.0, %v1617
      %1619 = vdwg.mxu0
      %v1620 = vmax.f32 %v1530, %v1602
      %v1621 = vmax.f32 %v1531, %v1604
      %v1622 = vmax.f32 %v1532, %v1606
      %v1623 = vmax.f32 %v1533, %v1608
      %v1624 = vmax.f32 %v1534, %v1612
      %v1625 = vmax.f32 %v1535, %v1614
      %v1626 = vmax.f32 %v1536, %v1616
      %v1627 = vmax.f32 %v1537, %v1618
      %v1628 = vld [vmem:[%s2] sm:$0xff]
      %v1629 = vld [vmem:[%s2 + $0x8] sm:$0xff]
      %v1630 = vld [vmem:[%s2 + $0x10] sm:$0xff]
      %v1631 = vld [vmem:[%s2 + $0x18] sm:$0xff]
      %1633 = vset.pattern.permute.xlu0 0
      %1634 = vperm.xlu0 %1633, %v1628
      %v1635 = vpop.permute.xlu0 %1634
      %1638 = vset.pattern.permute.xlu0 0
      %1639 = vperm.xlu0 %1638, %v1629
      %v1640 = vpop.permute.xlu0 %1639
      %1643 = vset.pattern.permute.xlu0 0
      %1644 = vperm.xlu0 %1643, %v1630
      %v1645 = vpop.permute.xlu0 %1644
      %1648 = vset.pattern.permute.xlu0 0
      %1649 = vperm.xlu0 %1648, %v1631
      %v1650 = vpop.permute.xlu0 %1649
      %v1652 = vadd.f32 %v1620, %v1635
      %v1653 = vadd.f32 %v1621, %v1635
      %v1654 = vadd.f32 %v1622, %v1640
      %v1655 = vadd.f32 %v1623, %v1640
      %v1656 = vadd.f32 %v1624, %v1645
      %v1657 = vadd.f32 %v1625, %v1645
      %v1658 = vadd.f32 %v1626, %v1650
      %v1659 = vadd.f32 %v1627, %v1650
      %vm1660 = vcmp.gt.f32.partialorder %v1652, 0.0
      %vm1661 = vcmp.gt.f32.partialorder %v1653, 0.0
      %vm1662 = vcmp.gt.f32.partialorder %v1654, 0.0
      %vm1663 = vcmp.gt.f32.partialorder %v1655, 0.0
      %vm1664 = vcmp.gt.f32.partialorder %v1656, 0.0
      %vm1665 = vcmp.gt.f32.partialorder %v1657, 0.0
      %vm1666 = vcmp.gt.f32.partialorder %v1658, 0.0
      %vm1667 = vcmp.gt.f32.partialorder %v1659, 0.0
      %v1668 = vmul.f32 %v1652, 0.01
      %v1669 = vmul.f32 %v1653, 0.01
      %v1670 = vmul.f32 %v1654, 0.01
      %v1671 = vmul.f32 %v1655, 0.01
      %v1672 = vmul.f32 %v1656, 0.01
      %v1673 = vmul.f32 %v1657, 0.01
      %v1674 = vmul.f32 %v1658, 0.01
      %v1675 = vmul.f32 %v1659, 0.01
      %v1676 = vsel %vm1660, %v1652, %v1668
      %v1677 = vsel %vm1661, %v1653, %v1669
      %v1678 = vsel %vm1662, %v1654, %v1670
      %v1679 = vsel %vm1663, %v1655, %v1671
      %v1680 = vsel %vm1664, %v1656, %v1672
      %v1681 = vsel %vm1665, %v1657, %v1673
      %v1682 = vsel %vm1666, %v1658, %v1674
      %v1683 = vsel %vm1667, %v1659, %v1675
      %v1684 = vpack.c.bf16 %v1678, %v1676
      %v1685 = vpack.c.bf16 %v1679, %v1677
      %v1686 = vpack.c.bf16 %v1682, %v1680
      %v1687 = vpack.c.bf16 %v1683, %v1681
      %v1692 = vunpack.c.l.b16 %v1684
      %v1693 = vunpack.c.l.b16 %v1685
      %v1694 = vunpack.c.h.b16 %v1684
      %v1695 = vunpack.c.h.b16 %v1685
      %v1696 = vunpack.c.l.b16 %v1686
      %v1697 = vunpack.c.l.b16 %v1687
      %v1698 = vunpack.c.h.b16 %v1686
      %v1699 = vunpack.c.h.b16 %v1687
      %v1700 = vpack.c.b16 %v1693, %v1692
      %v1701 = vpack.c.b16 %v1695, %v1694
      %v1702 = vpack.c.b16 %v1697, %v1696
      %v1703 = vpack.c.b16 %v1699, %v1698
      %1708 = vst [vmem:[%s170] sm:$0xff] %v1700
      %1709 = vst [vmem:[%s170 + $0x8] sm:$0xff] %v1701
      %1710 = vst [vmem:[%s170 + $0x10] sm:$0xff] %v1702
      %1711 = vst [vmem:[%s170 + $0x18] sm:$0xff] %v1703
      %p1712 = scmp.lt.s32.totalorder %s14, 1
      %s1713 = scalar_select %p1712, %s14, 1
      %s1714 = smul.addr %s1713, 8
      %s1715 = smul.addr %s1714, 4
      %s1716 = scalar_lea.vmem %s3, %s1715
      // Predicated region
      $region33: #{cnn_forward.3} parent=31 // pred_check
        %p1717 = pneg %p100
      $region34: #{cnn_forward.3} parent=31 // pred_check_branch
        %1719 = sbr.rel (%p1717) target = $region36
      $region35: #{cnn_forward.3} parent=31 // pred_region
        _
      $region36: #{cnn_forward.3} parent=31 // pred_fallthru
        _
    $region32: #{cnn_forward.3} parent=5 // pred_fallthru
      _
    %p1720 = scmp.le.s32.totalorder 2, %s9
    // Predicated region
    $region37: #{cnn_forward.3} parent=5 // pred_check
      %p1721 = pneg %p1720
    $region38: #{cnn_forward.3} parent=5 // pred_check_branch
      %1723 = sbr.rel (%p1721) target = $region40
    $region39: #{cnn_forward.3} parent=5 // pred_region
      %s1724 = ssub.s32 %s9, 2
      // Predicated region
      $region41: #{cnn_forward.3} parent=39 // pred_check
        %p1725 = pneg %p106
      $region42: #{cnn_forward.3} parent=39 // pred_check_branch
        %1727 = sbr.rel (%p1725) target = $region44
      $region43: #{cnn_forward.3} parent=39 // pred_region
        %p1728 = scmp.lt.s32.totalorder %s15, 1
        %s1729 = scalar_select %p1728, %s15, 1
        %s1730 = smul.addr %s1729, 8
        %s1731 = smul.addr %s1730, 4
        %s1732 = scalar_lea.vmem %s3, %s1731
      $region44: #{cnn_forward.3} parent=39 // pred_fallthru
        _
    $region40: #{cnn_forward.3} parent=5 // pred_fallthru
      _
  $region6: #{cnn_forward.3} parent=0 // loop_footer
    %s13 = sadd.s32 1, %s9
  $region7: #{cnn_forward.3} parent=0 // loop_footer_branch
    %8 = sbr.rel target = $region3
  $region8: #{cnn_forward.3} parent=0 // loop_exit
    _

// kernel: cnn_forward.4
$region0: #{cnn_forward.4}
  #allocation0 [shape = 'u32[]', space=smem, size = 0x4, offset = 0x4, fixed_abs, tag = 'smem constant byte address 0x4 - core index']
  #allocation1 [shape = 'u32[144,128]{1,0:T(1,128)}', space=vmem, size = 0x12000, scoped, tag = 'internal scratch']
  %s0 = inlined_call_operand.vmem [shape: bf16[2,4,600,128], index: 0, kind: input, shape index: {}]
  %s1 = inlined_call_operand.vmem [shape: bf16[64,600], index: 1, kind: input, shape index: {}]
  %s2 = inlined_call_operand.vmem [shape: f32[64,1], index: 2, kind: input, shape index: {}]
  %s3 = inlined_call_operand.vmem [shape: f32[2,64,128], index: 3, kind: output, shape index: {}]
  %s4 = sld [smem:[#allocation0]]
  $region45: #{cnn_forward.4} parent=0
    _
  %s6 = ssub.s32 1, %s4
  %s7 = scalar_select 0, %s6, %s4
  loop: start=0, step=1, limit=4
  $region2: #{cnn_forward.4} parent=0 // loop_pre_header
    _
  $region3: #{cnn_forward.4} parent=0 // loop_header
    %s9 = sphi 0, %s13
    %p10 = scmp.ge.s32.totalorder %s9, 4
    %s19 = sphi 0, %s21
    %s22 = sphi 0, %s19
    %s23 = sphi 0, %s22
    %s39 = sphi 0, %s23
    %s43 = sphi 0, %s43
    %s45 = sphi 0, %s43
    %s46 = sphi 0, %s45
    %s60 = sphi 0, %s46
    %s64 = sphi 0, %s64
    %s66 = sphi 0, %s64
    %s67 = sphi 0, %s66
    %s81 = sphi 0, %s67
    %s87 = sphi 0, %s89
    %s90 = sphi 0, %s87
    %s91 = sphi 0, %s90
    %s107 = sphi 0, %s91
  $region4: #{cnn_forward.4} parent=0 // loop_header_branch
    %12 = sbr.rel (%p10) target = $region8
  $region5: #{cnn_forward.4} parent=0 // loop_body
    %s14 = ssub.s32 %s9, 1
    %s15 = ssub.s32 %s9, 2
    %s16 = sadd.s32 %s9, 1
    %s17 = ssub.s32 %s9, %s16
    %p18 = scmp.eq.s32.totalorder %s17, 0
    %s20 = sadd.s32 %s19, 1
    %s21 = scalar_select %p18, %s19, %s20
    %p24 = pneg %p18
    %p25 = scmp.eq.s32.totalorder %s9, 1
    %p26 = por %p24, %p25
    %p27 = scmp.ne.s32.totalorder %s19, %s22
    %p28 = scmp.eq.s32.totalorder %s9, 0
    %p29 = por %p27, %p28
    %p30 = scmp.ne.s32.totalorder %s19, %s22
    %p31 = scmp.eq.s32.totalorder %s14, 1
    %p32 = por %p30, %p31
    %p33 = scmp.ne.s32.totalorder %s22, %s23
    %p34 = scmp.eq.s32.totalorder %s14, 0
    %p35 = por %p33, %p34
    %p36 = scmp.ne.s32.totalorder %s22, %s23
    %p37 = scmp.eq.s32.totalorder %s15, 1
    %p38 = por %p36, %p37
    %p40 = scmp.ne.s32.totalorder %s23, %s39
    %p41 = scmp.eq.s32.totalorder %s15, 0
    %p42 = por %p40, %p41
    %s44 = sadd.s32 %s43, 1
    %p47 = scmp.eq.s32.totalorder %s9, 1
    %p48 = scmp.ne.s32.totalorder %s43, %s45
    %p49 = scmp.eq.s32.totalorder %s9, 0
    %p50 = por %p48, %p49
    %p51 = scmp.ne.s32.totalorder %s43, %s45
    %p52 = scmp.eq.s32.totalorder %s14, 1
    %p53 = por %p51, %p52
    %p54 = scmp.ne.s32.totalorder %s45, %s46
    %p55 = scmp.eq.s32.totalorder %s14, 0
    %p56 = por %p54, %p55
    %p57 = scmp.ne.s32.totalorder %s45, %s46
    %p58 = scmp.eq.s32.totalorder %s15, 1
    %p59 = por %p57, %p58
    %p61 = scmp.ne.s32.totalorder %s46, %s60
    %p62 = scmp.eq.s32.totalorder %s15, 0
    %p63 = por %p61, %p62
    %s65 = sadd.s32 %s64, 1
    %p68 = scmp.eq.s32.totalorder %s9, 1
    %p69 = scmp.ne.s32.totalorder %s64, %s66
    %p70 = scmp.eq.s32.totalorder %s9, 0
    %p71 = por %p69, %p70
    %p72 = scmp.ne.s32.totalorder %s64, %s66
    %p73 = scmp.eq.s32.totalorder %s14, 1
    %p74 = por %p72, %p73
    %p75 = scmp.ne.s32.totalorder %s66, %s67
    %p76 = scmp.eq.s32.totalorder %s14, 0
    %p77 = por %p75, %p76
    %p78 = scmp.ne.s32.totalorder %s66, %s67
    %p79 = scmp.eq.s32.totalorder %s15, 1
    %p80 = por %p78, %p79
    %p82 = scmp.ne.s32.totalorder %s67, %s81
    %p83 = scmp.eq.s32.totalorder %s15, 0
    %p84 = por %p82, %p83
    %s85 = ssub.s32 %s9, %s16
    %p86 = scmp.eq.s32.totalorder %s85, 0
    %s88 = sadd.s32 %s87, 1
    %s89 = scalar_select %p86, %s87, %s88
    %p92 = pneg %p86
    %p93 = scmp.eq.s32.totalorder %s9, 1
    %p94 = por %p92, %p93
    %p95 = scmp.ne.s32.totalorder %s87, %s90
    %p96 = scmp.eq.s32.totalorder %s9, 0
    %p97 = por %p95, %p96
    %p98 = scmp.ne.s32.totalorder %s87, %s90
    %p99 = scmp.eq.s32.totalorder %s14, 1
    %p100 = por %p98, %p99
    %p101 = scmp.ne.s32.totalorder %s90, %s91
    %p102 = scmp.eq.s32.totalorder %s14, 0
    %p103 = por %p101, %p102
    %p104 = scmp.ne.s32.totalorder %s90, %s91
    %p105 = scmp.eq.s32.totalorder %s15, 1
    %p106 = por %p104, %p105
    %p108 = scmp.ne.s32.totalorder %s91, %s107
    %p109 = scmp.eq.s32.totalorder %s15, 0
    %p110 = por %p108, %p109
    %p111 = scmp.le.s32.totalorder 1, %s9
    %p112 = scmp.lt.s32.totalorder %s9, 3
    %p113 = pnand %p111, %p112
    %p114 = pneg %p113
    // Predicated region
    $region9: #{cnn_forward.4} parent=5 // pred_check
      _
    $region10: #{cnn_forward.4} parent=5 // pred_check_branch
      %116 = sbr.rel (%p113) target = $region12
    $region11: #{cnn_forward.4} parent=5 // pred_region
      %s117 = ssub.s32 %s9, 1
      // Predicated region
      $region13: #{cnn_forward.4} parent=11 // pred_check
        %p118 = pneg %p56
      $region14: #{cnn_forward.4} parent=11 // pred_check_branch
        %120 = sbr.rel (%p118) target = $region16
      $region15: #{cnn_forward.4} parent=11 // pred_region
        _
      $region16: #{cnn_forward.4} parent=11 // pred_fallthru
        _
      // Predicated region
      $region17: #{cnn_forward.4} parent=11 // pred_check
        %p121 = pneg %p77
      $region18: #{cnn_forward.4} parent=11 // pred_check_branch
        %123 = sbr.rel (%p121) target = $region20
      $region19: #{cnn_forward.4} parent=11 // pred_region
        _
      $region20: #{cnn_forward.4} parent=11 // pred_fallthru
        _
    $region12: #{cnn_forward.4} parent=5 // pred_fallthru
      _
    %p124 = scmp.lt.s32.totalorder %s9, 2
    // Predicated region
    $region21: #{cnn_forward.4} parent=5 // pred_check
      %p125 = pneg %p124
    $region22: #{cnn_forward.4} parent=5 // pred_check_branch
      %127 = sbr.rel (%p125) target = $region24
    $region23: #{cnn_forward.4} parent=5 // pred_region
      // Predicated region
      $region25: #{cnn_forward.4} parent=23 // pred_check
        %p128 = pneg %p29
      $region26: #{cnn_forward.4} parent=23 // pred_check_branch
        %130 = sbr.rel (%p128) target = $region28
      $region27: #{cnn_forward.4} parent=23 // pred_region
        %p131 = scmp.lt.s32.totalorder %s9, 1
        %s132 = scalar_select %p131, %s9, 1
        %s133 = smul.addr %s132, 300
        %s134 = smul.addr %s133, 4
        %s135 = scalar_lea.vmem %s0, %s134
      $region28: #{cnn_forward.4} parent=23 // pred_fallthru
        _
    $region24: #{cnn_forward.4} parent=5 // pred_fallthru
      _
    %p136 = scmp.le.s32.totalorder 1, %s9
    %p137 = scmp.lt.s32.totalorder %s9, 3
    %p138 = pnand %p136, %p137
    %p139 = pneg %p138
    // Predicated region
    $region29: #{cnn_forward.4} parent=5 // pred_check
      _
    $region30: #{cnn_forward.4} parent=5 // pred_check_branch
      %141 = sbr.rel (%p138) target = $region32
    $region31: #{cnn_forward.4} parent=5 // pred_region
      %s142 = ssub.s32 %s9, 1
      %p143 = scmp.lt.s32.totalorder %s14, 1
      %s144 = scalar_select %p143, %s14, 1
      %s145 = smul.addr %s144, 300
      %s146 = smul.addr %s145, 4
      %s147 = scalar_lea.vmem %s0, %s146
      %p148 = pneg %p35
      %p149 = pneg %p32
      %p150 = pneg %p56
      %p151 = pneg %p53
      %p152 = pneg %p77
      %p153 = pneg %p74
      %p154 = pneg %p103
      %p155 = pneg %p100
      %p156 = scmp.lt.s32.totalorder %s14, 1
      %s157 = scalar_select %p156, %s14, 1
      %s158 = smul.addr %s157, 8
      %s159 = smul.addr %s158, 8
      %s160 = scalar_lea.vmem %s3, %s159
      %p161 = scmp.lt.s32.totalorder %s14, 1
      %s162 = scalar_select %p161, %s14, 1
      %s163 = smul.addr %s162, 300
      %s164 = smul.addr %s163, 4
      %s165 = scalar_lea.vmem %s0, %s164
      %p166 = scmp.lt.s32.totalorder %s14, 1
      %s167 = scalar_select %p166, %s14, 1
      %s168 = smul.addr %s167, 8
      %s169 = smul.addr %s168, 8
      %s170 = scalar_lea.vmem %s3, %s169
      %v172 = vld [vmem:[%s1] sm:$0xff]
      %v173 = vld [vmem:[%s1 + $0x8] sm:$0xff]
      %v174 = vld [vmem:[%s1 + $0x10] sm:$0xf]
      %v175 = vld [vmem:[%s1 + $0x14] sm:$0xff]
      %v176 = vld [vmem:[%s1 + $0x1c] sm:$0xff]
      %v177 = vld [vmem:[%s1 + $0x24] sm:$0xf]
      %v178 = vld [vmem:[%s1 + $0x28] sm:$0xff]
      %v179 = vld [vmem:[%s1 + $0x30] sm:$0xff]
      %v180 = vld [vmem:[%s1 + $0x38] sm:$0xf]
      %v181 = vld [vmem:[%s1 + $0x3c] sm:$0xff]
      %v182 = vld [vmem:[%s1 + $0x44] sm:$0xff]
      %v183 = vld [vmem:[%s1 + $0x4c] sm:$0xf]
      %v184 = vld [vmem:[%s1 + $0x50] sm:$0xff]
      %v185 = vld [vmem:[%s1 + $0x58] sm:$0xff]
      %v186 = vld [vmem:[%s1 + $0x60] sm:$0xf]
      %v187 = vld [vmem:[%s1 + $0x64] sm:$0xff]
      %v188 = vld [vmem:[%s1 + $0x6c] sm:$0xff]
      %v189 = vld [vmem:[%s1 + $0x74] sm:$0xf]
      %v190 = vld [vmem:[%s1 + $0x78] sm:$0xff]
      %v191 = vld [vmem:[%s1 + $0x80] sm:$0xff]
      %v192 = vld [vmem:[%s1 + $0x88] sm:$0xf]
      %v193 = vld [vmem:[%s1 + $0x8c] sm:$0xff]
      %v194 = vld [vmem:[%s1 + $0x94] sm:$0xff]
      %v195 = vld [vmem:[%s1 + $0x9c] sm:$0xf]
      %v196 = vld [vmem:[%s165] sm:$0xf]
      %v197 = vld [vmem:[%s165 + $0x4] sm:$0xf]
      %v198 = vld [vmem:[%s165 + $0x8] sm:$0xf]
      %v199 = vld [vmem:[%s165 + $0xc] sm:$0xf]
      %v200 = vld [vmem:[%s165 + $0x10] sm:$0xf]
      %v201 = vld [vmem:[%s165 + $0x14] sm:$0xf]
      %v202 = vld [vmem:[%s165 + $0x18] sm:$0xf]
      %v203 = vld [vmem:[%s165 + $0x1c] sm:$0xf]
      %v204 = vld [vmem:[%s165 + $0x20] sm:$0xf]
      %v205 = vld [vmem:[%s165 + $0x24] sm:$0xf]
      %v206 = vld [vmem:[%s165 + $0x28] sm:$0xf]
      %v207 = vld [vmem:[%s165 + $0x2c] sm:$0xf]
      %v208 = vld [vmem:[%s165 + $0x30] sm:$0xf]
      %v209 = vld [vmem:[%s165 + $0x34] sm:$0xf]
      %v210 = vld [vmem:[%s165 + $0x38] sm:$0xf]
      %v211 = vld [vmem:[%s165 + $0x3c] sm:$0xf]
      %v212 = vld [vmem:[%s165 + $0x40] sm:$0xf]
      %v213 = vld [vmem:[%s165 + $0x44] sm:$0xf]
      %v214 = vld [vmem:[%s165 + $0x48] sm:$0xf]
      %v215 = vld [vmem:[%s165 + $0x4c] sm:$0xf]
      %v216 = vld [vmem:[%s165 + $0x50] sm:$0xf]
      %v217 = vld [vmem:[%s165 + $0x54] sm:$0xf]
      %v218 = vld [vmem:[%s165 + $0x58] sm:$0xf]
      %v219 = vld [vmem:[%s165 + $0x5c] sm:$0xf]
      %v220 = vld [vmem:[%s165 + $0x60] sm:$0xf]
      %v221 = vld [vmem:[%s165 + $0x64] sm:$0xf]
      %v222 = vld [vmem:[%s165 + $0x68] sm:$0xf]
      %v223 = vld [vmem:[%s165 + $0x6c] sm:$0xf]
      %v224 = vld [vmem:[%s165 + $0x70] sm:$0xf]
      %v225 = vld [vmem:[%s165 + $0x74] sm:$0xf]
      %v226 = vld [vmem:[%s165 + $0x78] sm:$0xf]
      %v227 = vld [vmem:[%s165 + $0x7c] sm:$0xf]
      %v228 = vld [vmem:[%s165 + $0x80] sm:$0xf]
      %v229 = vld [vmem:[%s165 + $0x84] sm:$0xf]
      %v230 = vld [vmem:[%s165 + $0x88] sm:$0xf]
      %v231 = vld [vmem:[%s165 + $0x8c] sm:$0xf]
      %v232 = vld [vmem:[%s165 + $0x90] sm:$0xf]
      %v233 = vld [vmem:[%s165 + $0x94] sm:$0xf]
      %v234 = vld [vmem:[%s165 + $0x98] sm:$0xf]
      %v235 = vld [vmem:[%s165 + $0x9c] sm:$0xf]
      %v236 = vld [vmem:[%s165 + $0xa0] sm:$0xf]
      %v237 = vld [vmem:[%s165 + $0xa4] sm:$0xf]
      %v238 = vld [vmem:[%s165 + $0xa8] sm:$0xf]
      %v239 = vld [vmem:[%s165 + $0xac] sm:$0xf]
      %v240 = vld [vmem:[%s165 + $0xb0] sm:$0xf]
      %v241 = vld [vmem:[%s165 + $0xb4] sm:$0xf]
      %v242 = vld [vmem:[%s165 + $0xb8] sm:$0xf]
      %v243 = vld [vmem:[%s165 + $0xbc] sm:$0xf]
      %v244 = vld [vmem:[%s165 + $0xc0] sm:$0xf]
      %v245 = vld [vmem:[%s165 + $0xc4] sm:$0xf]
      %v246 = vld [vmem:[%s165 + $0xc8] sm:$0xf]
      %v247 = vld [vmem:[%s165 + $0xcc] sm:$0xf]
      %v248 = vld [vmem:[%s165 + $0xd0] sm:$0xf]
      %v249 = vld [vmem:[%s165 + $0xd4] sm:$0xf]
      %v250 = vld [vmem:[%s165 + $0xd8] sm:$0xf]
      %v251 = vld [vmem:[%s165 + $0xdc] sm:$0xf]
      %v252 = vld [vmem:[%s165 + $0xe0] sm:$0xf]
      %v253 = vld [vmem:[%s165 + $0xe4] sm:$0xf]
      %v254 = vld [vmem:[%s165 + $0xe8] sm:$0xf]
      %v255 = vld [vmem:[%s165 + $0xec] sm:$0xf]
      %v256 = vld [vmem:[%s165 + $0xf0] sm:$0xf]
      %v257 = vld [vmem:[%s165 + $0xf4] sm:$0xf]
      %v258 = vld [vmem:[%s165 + $0xf8] sm:$0xf]
      %v259 = vld [vmem:[%s165 + $0xfc] sm:$0xf]
      %v260 = vld [vmem:[%s165 + $0x100] sm:$0xf]
      %v261 = vld [vmem:[%s165 + $0x104] sm:$0xf]
      %v262 = vld [vmem:[%s165 + $0x108] sm:$0xf]
      %v263 = vld [vmem:[%s165 + $0x10c] sm:$0xf]
      %v264 = vld [vmem:[%s165 + $0x110] sm:$0xf]
      %v265 = vld [vmem:[%s165 + $0x114] sm:$0xf]
      %v266 = vld [vmem:[%s165 + $0x118] sm:$0xf]
      %v267 = vld [vmem:[%s165 + $0x11c] sm:$0xf]
      %v268 = vld [vmem:[%s165 + $0x120] sm:$0xf]
      %v269 = vld [vmem:[%s165 + $0x124] sm:$0xf]
      %v270 = vld [vmem:[%s165 + $0x128] sm:$0xf]
      %v295 = vunpack.c.l.b16 %v172
      %v296 = vunpack.c.h.b16 %v172
      %v297 = vunpack.c.l.b16 %v173
      %v298 = vunpack.c.h.b16 %v173
      %v299 = vunpack.c.l.b16 %v174
      %v300 = vunpack.c.l.b16 %v175
      %v301 = vunpack.c.h.b16 %v175
      %v302 = vunpack.c.l.b16 %v176
      %v303 = vunpack.c.h.b16 %v176
      %v304 = vunpack.c.l.b16 %v177
      %v305 = vunpack.c.l.b16 %v178
      %v306 = vunpack.c.h.b16 %v178
      %v307 = vunpack.c.l.b16 %v179
      %v308 = vunpack.c.h.b16 %v179
      %v309 = vunpack.c.l.b16 %v180
      %v310 = vunpack.c.l.b16 %v181
      %v311 = vunpack.c.h.b16 %v181
      %v312 = vunpack.c.l.b16 %v182
      %v313 = vunpack.c.h.b16 %v182
      %v314 = vunpack.c.l.b16 %v183
      %v315 = vunpack.c.l.b16 %v184
      %v316 = vunpack.c.h.b16 %v184
      %v317 = vunpack.c.l.b16 %v185
      %v318 = vunpack.c.h.b16 %v185
      %v319 = vunpack.c.l.b16 %v186
      %v320 = vunpack.c.l.b16 %v187
      %v321 = vunpack.c.h.b16 %v187
      %v322 = vunpack.c.l.b16 %v188
      %v323 = vunpack.c.h.b16 %v188
      %v324 = vunpack.c.l.b16 %v189
      %v325 = vunpack.c.l.b16 %v190
      %v326 = vunpack.c.h.b16 %v190
      %v327 = vunpack.c.l.b16 %v191
      %v328 = vunpack.c.h.b16 %v191
      %v329 = vunpack.c.l.b16 %v192
      %v330 = vunpack.c.l.b16 %v193
      %v331 = vunpack.c.h.b16 %v193
      %v332 = vunpack.c.l.b16 %v194
      %v333 = vunpack.c.h.b16 %v194
      %v334 = vunpack.c.l.b16 %v195
      %v335 = vpack.c.b16 %v300, %v295
      %v336 = vpack.c.b16 %v301, %v296
      %v337 = vpack.c.b16 %v302, %v297
      %v338 = vpack.c.b16 %v303, %v298
      %v339 = vpack.c.b16 %v304, %v299
      %v340 = vpack.c.b16 %v310, %v305
      %v341 = vpack.c.b16 %v311, %v306
      %v342 = vpack.c.b16 %v312, %v307
      %v343 = vpack.c.b16 %v313, %v308
      %v344 = vpack.c.b16 %v314, %v309
      %v345 = vpack.c.b16 %v320, %v315
      %v346 = vpack.c.b16 %v321, %v316
      %v347 = vpack.c.b16 %v322, %v317
      %v348 = vpack.c.b16 %v323, %v318
      %v349 = vpack.c.b16 %v324, %v319
      %v350 = vpack.c.b16 %v330, %v325
      %v351 = vpack.c.b16 %v331, %v326
      %v352 = vpack.c.b16 %v332, %v327
      %v353 = vpack.c.b16 %v333, %v328
      %v354 = vpack.c.b16 %v334, %v329
      %v446 = vunpack.c.l.b16 %v196
      %v447 = vunpack.c.l.b16 %v197
      %v448 = vunpack.c.l.b16 %v198
      %v449 = vunpack.c.l.b16 %v199
      %v450 = vunpack.c.l.b16 %v200
      %v451 = vunpack.c.l.b16 %v201
      %v452 = vunpack.c.l.b16 %v202
      %v453 = vunpack.c.l.b16 %v203
      %v454 = vunpack.c.l.b16 %v204
      %v455 = vunpack.c.l.b16 %v205
      %v456 = vunpack.c.l.b16 %v206
      %v457 = vunpack.c.l.b16 %v207
      %v458 = vunpack.c.l.b16 %v208
      %v459 = vunpack.c.l.b16 %v209
      %v460 = vunpack.c.l.b16 %v210
      %v461 = vunpack.c.l.b16 %v211
      %v462 = vunpack.c.l.b16 %v212
      %v463 = vunpack.c.l.b16 %v213
      %v464 = vunpack.c.l.b16 %v214
      %v465 = vunpack.c.l.b16 %v215
      %v466 = vunpack.c.l.b16 %v216
      %v467 = vunpack.c.l.b16 %v217
      %v468 = vunpack.c.l.b16 %v218
      %v469 = vunpack.c.l.b16 %v219
      %v470 = vunpack.c.l.b16 %v220
      %v471 = vunpack.c.l.b16 %v221
      %v472 = vunpack.c.l.b16 %v222
      %v473 = vunpack.c.l.b16 %v223
      %v474 = vunpack.c.l.b16 %v224
      %v475 = vunpack.c.l.b16 %v225
      %v476 = vunpack.c.l.b16 %v226
      %v477 = vunpack.c.l.b16 %v227
      %v478 = vunpack.c.l.b16 %v228
      %v479 = vunpack.c.l.b16 %v229
      %v480 = vunpack.c.l.b16 %v230
      %v481 = vunpack.c.l.b16 %v231
      %v482 = vunpack.c.l.b16 %v232
      %v483 = vunpack.c.l.b16 %v233
      %v484 = vunpack.c.l.b16 %v234
      %v485 = vunpack.c.l.b16 %v235
      %v486 = vunpack.c.l.b16 %v236
      %v487 = vunpack.c.l.b16 %v237
      %v488 = vunpack.c.l.b16 %v238
      %v489 = vunpack.c.l.b16 %v239
      %v490 = vunpack.c.l.b16 %v240
      %v491 = vunpack.c.l.b16 %v241
      %v492 = vunpack.c.l.b16 %v242
      %v493 = vunpack.c.l.b16 %v243
      %v494 = vunpack.c.l.b16 %v244
      %v495 = vunpack.c.l.b16 %v245
      %v496 = vunpack.c.l.b16 %v246
      %v497 = vunpack.c.l.b16 %v247
      %v498 = vunpack.c.l.b16 %v248
      %v499 = vunpack.c.l.b16 %v249
      %v500 = vunpack.c.l.b16 %v250
      %v501 = vunpack.c.l.b16 %v251
      %v502 = vunpack.c.l.b16 %v252
      %v503 = vunpack.c.l.b16 %v253
      %v504 = vunpack.c.l.b16 %v254
      %v505 = vunpack.c.l.b16 %v255
      %v506 = vunpack.c.l.b16 %v256
      %v507 = vunpack.c.l.b16 %v257
      %v508 = vunpack.c.l.b16 %v258
      %v509 = vunpack.c.l.b16 %v259
      %v510 = vunpack.c.l.b16 %v260
      %v511 = vunpack.c.l.b16 %v261
      %v512 = vunpack.c.l.b16 %v262
      %v513 = vunpack.c.l.b16 %v263
      %v514 = vunpack.c.l.b16 %v264
      %v515 = vunpack.c.l.b16 %v265
      %v516 = vunpack.c.l.b16 %v266
      %v517 = vunpack.c.l.b16 %v267
      %v518 = vunpack.c.l.b16 %v268
      %v519 = vunpack.c.l.b16 %v269
      %v520 = vunpack.c.l.b16 %v270
      %v521 = vpack.c.b16 %v447, %v446
      %v522 = vpack.c.b16 %v449, %v448
      %v523 = vpack.c.b16 %v451, %v450
      %v524 = vpack.c.b16 %v453, %v452
      %v525 = vpack.c.b16 %v455, %v454
      %v526 = vpack.c.b16 %v457, %v456
      %v527 = vpack.c.b16 %v459, %v458
      %v528 = vpack.c.b16 %v461, %v460
      %v529 = vpack.c.b16 %v463, %v462
      %v530 = vpack.c.b16 %v465, %v464
      %v531 = vpack.c.b16 %v467, %v466
      %v532 = vpack.c.b16 %v469, %v468
      %v533 = vpack.c.b16 %v471, %v470
      %v534 = vpack.c.b16 %v473, %v472
      %v535 = vpack.c.b16 %v475, %v474
      %v536 = vpack.c.b16 %v477, %v476
      %v537 = vpack.c.b16 %v479, %v478
      %v538 = vpack.c.b16 %v481, %v480
      %v539 = vpack.c.b16 %v483, %v482
      %v540 = vpack.c.b16 %v485, %v484
      %v541 = vpack.c.b16 %v487, %v486
      %v542 = vpack.c.b16 %v489, %v488
      %v543 = vpack.c.b16 %v491, %v490
      %v544 = vpack.c.b16 %v493, %v492
      %v545 = vpack.c.b16 %v495, %v494
      %v546 = vpack.c.b16 %v497, %v496
      %v547 = vpack.c.b16 %v499, %v498
      %v548 = vpack.c.b16 %v501, %v500
      %v549 = vpack.c.b16 %v503, %v502
      %v550 = vpack.c.b16 %v505, %v504
      %v551 = vpack.c.b16 %v507, %v506
      %v552 = vpack.c.b16 %v509, %v508
      %v553 = vpack.c.b16 %v511, %v510
      %v554 = vpack.c.b16 %v513, %v512
      %v555 = vpack.c.b16 %v515, %v514
      %v556 = vpack.c.b16 %v517, %v516
      %v557 = vpack.c.b16 %v519, %v518
      %v558 = vpack.c.b16 %v520, %v520
      %vm596 = vcmask 719872
      %v598 = vsel %vm596, %v339, 0
      %v601 = vsel %vm596, %v344, 0
      %v604 = vsel %vm596, %v349, 0
      %v607 = vsel %vm596, %v354, 0
      %vm609 = vcmask 1043456
      %v611 = vsel %vm609, %v558, 0
      %613 = vmatprep.subr.bf16.mxu0 0
      %614 = vmatpush1.bf16.msra.mxu0 %v521
      %615 = vmatprep.subr.bf16.mxu0 0
      %616 = vmatpush1.bf16.msra.mxu0 %v522
      %617 = vmatprep.subr.bf16.mxu0 0
      %618 = vmatpush1.bf16.msra.mxu0 %v523
      %619 = vmatprep.subr.bf16.mxu0 0
      %620 = vmatpush1.bf16.msra.mxu0 %v524
      %621 = vmatprep.subr.bf16.mxu0 0
      %622 = vmatpush1.bf16.msra.mxu0 %v525
      %623 = vmatprep.subr.bf16.mxu0 0
      %624 = vmatpush1.bf16.msra.mxu0 %v526
      %625 = vmatprep.subr.bf16.mxu0 0
      %626 = vmatpush1.bf16.msra.mxu0 %v527
      %627 = vmatprep.subr.bf16.mxu0 0
      %628 = vmatpush1.bf16.msra.mxu0 %v528
      %629 = vmatprep.subr.bf16.mxu0 0
      %630 = vmatpush1.bf16.msra.mxu0 %v529
      %631 = vmatprep.subr.bf16.mxu0 0
      %632 = vmatpush1.bf16.msra.mxu0 %v530
      %633 = vmatprep.subr.bf16.mxu0 0
      %634 = vmatpush1.bf16.msra.mxu0 %v531
      %635 = vmatprep.subr.bf16.mxu0 0
      %636 = vmatpush1.bf16.msra.mxu0 %v532
      %637 = vmatprep.subr.bf16.mxu0 0
      %638 = vmatpush1.bf16.msra.mxu0 %v533
      %639 = vmatprep.subr.bf16.mxu0 0
      %640 = vmatpush1.bf16.msra.mxu0 %v534
      %641 = vmatprep.subr.bf16.mxu0 0
      %642 = vmatpush1.bf16.msra.mxu0 %v535
      %643 = vmatprep.subr.bf16.mxu0 0
      %644 = vmatpush1.bf16.msra.mxu0 %v536
      %645 = vmatprep.mubr.bf16.mxu0 %v336
      %646 = vmatmul.mubr.bf16.gmra.mrb[0].mxu0 %v335
      %v647 = vpop.f32.mrb[0].mxu0
      %v648 = vadd.f32 0.0, %v647
      %v649 = vpop.f32.mrb[0].mxu0
      %v650 = vpop.f32.mrb[0].mxu0
      %v651 = vadd.f32 0.0, %v650
      %v652 = vpop.f32.mrb[0].mxu0
      %653 = vmatprep.mubr.bf16.mxu0 %v341
      %654 = vmatmul.mubr.bf16.gmra.mrb[0].mxu0 %v340
      %v655 = vpop.f32.mrb[0].mxu0
      %v656 = vadd.f32 0.0, %v655
      %v657 = vpop.f32.mrb[0].mxu0
      %v658 = vpop.f32.mrb[0].mxu0
      %v659 = vadd.f32 0.0, %v658
      %v660 = vpop.f32.mrb[0].mxu0
      %661 = vmatprep.mubr.bf16.mxu0 %v346
      %662 = vmatmul.mubr.bf16.gmra.mrb[0].mxu0 %v345
      %v663 = vpop.f32.mrb[0].mxu0
      %v664 = vadd.f32 0.0, %v663
      %v665 = vpop.f32.mrb[0].mxu0
      %v666 = vpop.f32.mrb[0].mxu0
      %v667 = vadd.f32 0.0, %v666
      %v668 = vpop.f32.mrb[0].mxu0
      %669 = vmatprep.mubr.bf16.mxu0 %v351
      %670 = vmatmul.mubr.bf16.gmra.mrb[0].mxu0 %v350
      %v671 = vpop.f32.mrb[0].mxu0
      %v672 = vadd.f32 0.0, %v671
      %v673 = vpop.f32.mrb[0].mxu0
      %v674 = vpop.f32.mrb[0].mxu0
      %v675 = vadd.f32 0.0, %v674
      %v676 = vpop.f32.mrb[0].mxu0
      %677 = vdwg.mxu0
      %678 = vmatprep.subr.bf16.mxu0 0
      %679 = vmatpush1.bf16.msra.mxu0 %v537
      %680 = vmatprep.subr.bf16.mxu0 0
      %681 = vmatpush1.bf16.msra.mxu0 %v538
      %682 = vmatprep.subr.bf16.mxu0 0
      %683 = vmatpush1.bf16.msra.mxu0 %v539
      %684 = vmatprep.subr.bf16.mxu0 0
      %685 = vmatpush1.bf16.msra.mxu0 %v540
      %686 = vmatprep.subr.bf16.mxu0 0
      %687 = vmatpush1.bf16.msra.mxu0 %v541
      %688 = vmatprep.subr.bf16.mxu0 0
      %689 = vmatpush1.bf16.msra.mxu0 %v542
      %690 = vmatprep.subr.bf16.mxu0 0
      %691 = vmatpush1.bf16.msra.mxu0 %v543
      %692 = vmatprep.subr.bf16.mxu0 0
      %693 = vmatpush1.bf16.msra.mxu0 %v544
      %694 = vmatprep.subr.bf16.mxu0 0
      %695 = vmatpush1.bf16.msra.mxu0 %v545
      %696 = vmatprep.subr.bf16.mxu0 0
      %697 = vmatpush1.bf16.msra.mxu0 %v546
      %698 = vmatprep.subr.bf16.mxu0 0
      %699 = vmatpush1.bf16.msra.mxu0 %v547
      %700 = vmatprep.subr.bf16.mxu0 0
      %701 = vmatpush1.bf16.msra.mxu0 %v548
      %702 = vmatprep.subr.bf16.mxu0 0
      %703 = vmatpush1.bf16.msra.mxu0 %v549
      %704 = vmatprep.subr.bf16.mxu0 0
      %705 = vmatpush1.bf16.msra.mxu0 %v550
      %706 = vmatprep.subr.bf16.mxu0 0
      %707 = vmatpush1.bf16.msra.mxu0 %v551
      %708 = vmatprep.subr.bf16.mxu0 0
      %709 = vmatpush1.bf16.msra.mxu0 %v552
      %710 = vmatprep.mubr.bf16.mxu0 %v338
      %711 = vmatmul.mubr.bf16.gmra.mrb[0].mxu0 %v337
      %v712 = vpop.f32.mrb[0].mxu0
      %v713 = vadd.f32 %v648, %v712
      %v714 = vpop.f32.mrb[0].mxu0
      %v715 = vpop.f32.mrb[0].mxu0
      %v716 = vadd.f32 %v651, %v715
      %v717 = vpop.f32.mrb[0].mxu0
      %718 = vmatprep.mubr.bf16.mxu0 %v343
      %719 = vmatmul.mubr.bf16.gmra.mrb[0].mxu0 %v342
      %v720 = vpop.f32.mrb[0].mxu0
      %v721 = vadd.f32 %v656, %v720
      %v722 = vpop.f32.mrb[0].mxu0
      %v723 = vpop.f32.mrb[0].mxu0
      %v724 = vadd.f32 %v659, %v723
      %v725 = vpop.f32.mrb[0].mxu0
      %726 = vmatprep.mubr.bf16.mxu0 %v348
      %727 = vmatmul.mubr.bf16.gmra.mrb[0].mxu0 %v347
      %v728 = vpop.f32.mrb[0].mxu0
      %v729 = vadd.f32 %v664, %v728
      %v730 = vpop.f32.mrb[0].mxu0
      %v731 = vpop.f32.mrb[0].mxu0
      %v732 = vadd.f32 %v667, %v731
      %v733 = vpop.f32.mrb[0].mxu0
      %734 = vmatprep.mubr.bf16.mxu0 %v353
      %735 = vmatmul.mubr.bf16.gmra.mrb[0].mxu0 %v352
      %v736 = vpop.f32.mrb[0].mxu0
      %v737 = vadd.f32 %v672, %v736
      %v738 = vpop.f32.mrb[0].mxu0
      %v739 = vpop.f32.mrb[0].mxu0
      %v740 = vadd.f32 %v675, %v739
      %v741 = vpop.f32.mrb[0].mxu0
      %742 = vdwg.mxu0
      %743 = vmatprep.subr.bf16.mxu0 0
      %744 = vmatpush1.bf16.msra.mxu0 %v553
      %745 = vmatprep.subr.bf16.mxu0 0
      %746 = vmatpush1.bf16.msra.mxu0 %v554
      %747 = vmatprep.subr.bf16.mxu0 0
      %748 = vmatpush1.bf16.msra.mxu0 %v555
      %749 = vmatprep.subr.bf16.mxu0 0
      %750 = vmatpush1.bf16.msra.mxu0 %v556
      %751 = vmatprep.subr.bf16.mxu0 0
      %752 = vmatpush1.bf16.msra.mxu0 %v557
      %753 = vmatprep.subr.bf16.mxu0 0
      %754 = vmatpush1.bf16.msra.mxu0 %v611
      %755 = vmatprep.subr.bf16.mxu0 0
      %756 = vmatpush1.bf16.msra.mxu0 0
      %757 = vmatprep.subr.bf16.mxu0 0
      %758 = vmatpush1.bf16.msra.mxu0 0
      %759 = vmatprep.subr.bf16.mxu0 0
      %760 = vmatpush1.bf16.msra.mxu0 0
      %761 = vmatprep.subr.bf16.mxu0 0
      %762 = vmatpush1.bf16.msra.mxu0 0
      %763 = vmatprep.subr.bf16.mxu0 0
      %764 = vmatpush1.bf16.msra.mxu0 0
      %765 = vmatprep.subr.bf16.mxu0 0
      %766 = vmatpush1.bf16.msra.mxu0 0
      %767 = vmatprep.subr.bf16.mxu0 0
      %768 = vmatpush1.bf16.msra.mxu0 0
      %769 = vmatprep.subr.bf16.mxu0 0
      %770 = vmatpush1.bf16.msra.mxu0 0
      %771 = vmatprep.subr.bf16.mxu0 0
      %772 = vmatpush1.bf16.msra.mxu0 0
      %773 = vmatprep.subr.bf16.mxu0 0
      %774 = vmatpush1.bf16.msra.mxu0 0
      %775 = vmatprep.mubr.bf16.mxu0 0
      %776 = vmatmul.mubr.bf16.gmra.mrb[0].mxu0 %v598
      %v777 = vpop.f32.mrb[0].mxu0
      %v778 = vadd.f32 %v713, %v777
      %v779 = vpop.f32.mrb[0].mxu0
      %v780 = vpop.f32.mrb[0].mxu0
      %v781 = vadd.f32 %v716, %v780
      %v782 = vpop.f32.mrb[0].mxu0
      %783 = vmatprep.mubr.bf16.mxu0 0
      %784 = vmatmul.mubr.bf16.gmra.mrb[0].mxu0 %v601
      %v785 = vpop.f32.mrb[0].mxu0
      %v786 = vadd.f32 %v721, %v785
      %v787 = vpop.f32.mrb[0].mxu0
      %v788 = vpop.f32.mrb[0].mxu0
      %v789 = vadd.f32 %v724, %v788
      %v790 = vpop.f32.mrb[0].mxu0
      %791 = vmatprep.mubr.bf16.mxu0 0
      %792 = vmatmul.mubr.bf16.gmra.mrb[0].mxu0 %v604
      %v793 = vpop.f32.mrb[0].mxu0
      %v794 = vadd.f32 %v729, %v793
      %v795 = vpop.f32.mrb[0].mxu0
      %v796 = vpop.f32.mrb[0].mxu0
      %v797 = vadd.f32 %v732, %v796
      %v798 = vpop.f32.mrb[0].mxu0
      %799 = vmatprep.mubr.bf16.mxu0 0
      %800 = vmatmul.mubr.bf16.gmra.mrb[0].mxu0 %v607
      %v801 = vpop.f32.mrb[0].mxu0
      %v802 = vadd.f32 %v737, %v801
      %v803 = vpop.f32.mrb[0].mxu0
      %v804 = vpop.f32.mrb[0].mxu0
      %v805 = vadd.f32 %v740, %v804
      %v806 = vpop.f32.mrb[0].mxu0
      %807 = vdwg.mxu0
      %s808 = scalar_lea.vmem %s165, 300
      %v809 = vld [vmem:[%s808] sm:$0xf]
      %v810 = vld [vmem:[%s808 + $0x4] sm:$0xf]
      %v811 = vld [vmem:[%s808 + $0x8] sm:$0xf]
      %v812 = vld [vmem:[%s808 + $0xc] sm:$0xf]
      %v813 = vld [vmem:[%s808 + $0x10] sm:$0xf]
      %v814 = vld [vmem:[%s808 + $0x14] sm:$0xf]
      %v815 = vld [vmem:[%s808 + $0x18] sm:$0xf]
      %v816 = vld [vmem:[%s808 + $0x1c] sm:$0xf]
      %v817 = vld [vmem:[%s808 + $0x20] sm:$0xf]
      %v818 = vld [vmem:[%s808 + $0x24] sm:$0xf]
      %v819 = vld [vmem:[%s808 + $0x28] sm:$0xf]
      %v820 = vld [vmem:[%s808 + $0x2c] sm:$0xf]
      %v821 = vld [vmem:[%s808 + $0x30] sm:$0xf]
      %v822 = vld [vmem:[%s808 + $0x34] sm:$0xf]
      %v823 = vld [vmem:[%s808 + $0x38] sm:$0xf]
      %v824 = vld [vmem:[%s808 + $0x3c] sm:$0xf]
      %v825 = vld [vmem:[%s808 + $0x40] sm:$0xf]
      %v826 = vld [vmem:[%s808 + $0x44] sm:$0xf]
      %v827 = vld [vmem:[%s808 + $0x48] sm:$0xf]
      %v828 = vld [vmem:[%s808 + $0x4c] sm:$0xf]
      %v829 = vld [vmem:[%s808 + $0x50] sm:$0xf]
      %v830 = vld [vmem:[%s808 + $0x54] sm:$0xf]
      %v831 = vld [vmem:[%s808 + $0x58] sm:$0xf]
      %v832 = vld [vmem:[%s808 + $0x5c] sm:$0xf]
      %v833 = vld [vmem:[%s808 + $0x60] sm:$0xf]
      %v834 = vld [vmem:[%s808 + $0x64] sm:$0xf]
      %v835 = vld [vmem:[%s808 + $0x68] sm:$0xf]
      %v836 = vld [vmem:[%s808 + $0x6c] sm:$0xf]
      %v837 = vld [vmem:[%s808 + $0x70] sm:$0xf]
      %v838 = vld [vmem:[%s808 + $0x74] sm:$0xf]
      %v839 = vld [vmem:[%s808 + $0x78] sm:$0xf]
      %v840 = vld [vmem:[%s808 + $0x7c] sm:$0xf]
      %v841 = vld [vmem:[%s808 + $0x80] sm:$0xf]
      %v842 = vld [vmem:[%s808 + $0x84] sm:$0xf]
      %v843 = vld [vmem:[%s808 + $0x88] sm:$0xf]
      %v844 = vld [vmem:[%s808 + $0x8c] sm:$0xf]
      %v845 = vld [vmem:[%s808 + $0x90] sm:$0xf]
      %v846 = vld [vmem:[%s808 + $0x94] sm:$0xf]
      %v847 = vld [vmem:[%s808 + $0x98] sm:$0xf]
      %v848 = vld [vmem:[%s808 + $0x9c] sm:$0xf]
      %v849 = vld [vmem:[%s808 + $0xa0] sm:$0xf]
      %v850 = vld [vmem:[%s808 + $0xa4] sm:$0xf]
      %v851 = vld [vmem:[%s808 + $0xa8] sm:$0xf]
      %v852 = vld [vmem:[%s808 + $0xac] sm:$0xf]
      %v853 = vld [vmem:[%s808 + $0xb0] sm:$0xf]
      %v854 = vld [vmem:[%s808 + $0xb4] sm:$0xf]
      %v855 = vld [vmem:[%s808 + $0xb8] sm:$0xf]
      %v856 = vld [vmem:[%s808 + $0xbc] sm:$0xf]
      %v857 = vld [vmem:[%s808 + $0xc0] sm:$0xf]
      %v858 = vld [vmem:[%s808 + $0xc4] sm:$0xf]
      %v859 = vld [vmem:[%s808 + $0xc8] sm:$0xf]
      %v860 = vld [vmem:[%s808 + $0xcc] sm:$0xf]
      %v861 = vld [vmem:[%s808 + $0xd0] sm:$0xf]
      %v862 = vld [vmem:[%s808 + $0xd4] sm:$0xf]
      %v863 = vld [vmem:[%s808 + $0xd8] sm:$0xf]
      %v864 = vld [vmem:[%s808 + $0xdc] sm:$0xf]
      %v865 = vld [vmem:[%s808 + $0xe0] sm:$0xf]
      %v866 = vld [vmem:[%s808 + $0xe4] sm:$0xf]
      %v867 = vld [vmem:[%s808 + $0xe8] sm:$0xf]
      %v868 = vld [vmem:[%s808 + $0xec] sm:$0xf]
      %v869 = vld [vmem:[%s808 + $0xf0] sm:$0xf]
      %v870 = vld [vmem:[%s808 + $0xf4] sm:$0xf]
      %v871 = vld [vmem:[%s808 + $0xf8] sm:$0xf]
      %v872 = vld [vmem:[%s808 + $0xfc] sm:$0xf]
      %v873 = vld [vmem:[%s808 + $0x100] sm:$0xf]
      %v874 = vld [vmem:[%s808 + $0x104] sm:$0xf]
      %v875 = vld [vmem:[%s808 + $0x108] sm:$0xf]
      %v876 = vld [vmem:[%s808 + $0x10c] sm:$0xf]
      %v877 = vld [vmem:[%s808 + $0x110] sm:$0xf]
      %v878 = vld [vmem:[%s808 + $0x114] sm:$0xf]
      %v879 = vld [vmem:[%s808 + $0x118] sm:$0xf]
      %v880 = vld [vmem:[%s808 + $0x11c] sm:$0xf]
      %v881 = vld [vmem:[%s808 + $0x120] sm:$0xf]
      %v882 = vld [vmem:[%s808 + $0x124] sm:$0xf]
      %v883 = vld [vmem:[%s808 + $0x128] sm:$0xf]
      %v959 = vunpack.c.l.b16 %v809
      %v960 = vunpack.c.l.b16 %v810
      %v961 = vunpack.c.l.b16 %v811
      %v962 = vunpack.c.l.b16 %v812
      %v963 = vunpack.c.l.b16 %v813
      %v964 = vunpack.c.l.b16 %v814
      %v965 = vunpack.c.l.b16 %v815
      %v966 = vunpack.c.l.b16 %v816
      %v967 = vunpack.c.l.b16 %v817
      %v968 = vunpack.c.l.b16 %v818
      %v969 = vunpack.c.l.b16 %v819
      %v970 = vunpack.c.l.b16 %v820
      %v971 = vunpack.c.l.b16 %v821
      %v972 = vunpack.c.l.b16 %v822
      %v973 = vunpack.c.l.b16 %v823
      %v974 = vunpack.c.l.b16 %v824
      %v975 = vunpack.c.l.b16 %v825
      %v976 = vunpack.c.l.b16 %v826
      %v977 = vunpack.c.l.b16 %v827
      %v978 = vunpack.c.l.b16 %v828
      %v979 = vunpack.c.l.b16 %v829
      %v980 = vunpack.c.l.b16 %v830
      %v981 = vunpack.c.l.b16 %v831
      %v982 = vunpack.c.l.b16 %v832
      %v983 = vunpack.c.l.b16 %v833
      %v984 = vunpack.c.l.b16 %v834
      %v985 = vunpack.c.l.b16 %v835
      %v986 = vunpack.c.l.b16 %v836
      %v987 = vunpack.c.l.b16 %v837
      %v988 = vunpack.c.l.b16 %v838
      %v989 = vunpack.c.l.b16 %v839
      %v990 = vunpack.c.l.b16 %v840
      %v991 = vunpack.c.l.b16 %v841
      %v992 = vunpack.c.l.b16 %v842
      %v993 = vunpack.c.l.b16 %v843
      %v994 = vunpack.c.l.b16 %v844
      %v995 = vunpack.c.l.b16 %v845
      %v996 = vunpack.c.l.b16 %v846
      %v997 = vunpack.c.l.b16 %v847
      %v998 = vunpack.c.l.b16 %v848
      %v999 = vunpack.c.l.b16 %v849
      %v1000 = vunpack.c.l.b16 %v850
      %v1001 = vunpack.c.l.b16 %v851
      %v1002 = vunpack.c.l.b16 %v852
      %v1003 = vunpack.c.l.b16 %v853
      %v1004 = vunpack.c.l.b16 %v854
      %v1005 = vunpack.c.l.b16 %v855
      %v1006 = vunpack.c.l.b16 %v856
      %v1007 = vunpack.c.l.b16 %v857
      %v1008 = vunpack.c.l.b16 %v858
      %v1009 = vunpack.c.l.b16 %v859
      %v1010 = vunpack.c.l.b16 %v860
      %v1011 = vunpack.c.l.b16 %v861
      %v1012 = vunpack.c.l.b16 %v862
      %v1013 = vunpack.c.l.b16 %v863
      %v1014 = vunpack.c.l.b16 %v864
      %v1015 = vunpack.c.l.b16 %v865
      %v1016 = vunpack.c.l.b16 %v866
      %v1017 = vunpack.c.l.b16 %v867
      %v1018 = vunpack.c.l.b16 %v868
      %v1019 = vunpack.c.l.b16 %v869
      %v1020 = vunpack.c.l.b16 %v870
      %v1021 = vunpack.c.l.b16 %v871
      %v1022 = vunpack.c.l.b16 %v872
      %v1023 = vunpack.c.l.b16 %v873
      %v1024 = vunpack.c.l.b16 %v874
      %v1025 = vunpack.c.l.b16 %v875
      %v1026 = vunpack.c.l.b16 %v876
      %v1027 = vunpack.c.l.b16 %v877
      %v1028 = vunpack.c.l.b16 %v878
      %v1029 = vunpack.c.l.b16 %v879
      %v1030 = vunpack.c.l.b16 %v880
      %v1031 = vunpack.c.l.b16 %v881
      %v1032 = vunpack.c.l.b16 %v882
      %v1033 = vunpack.c.l.b16 %v883
      %v1034 = vpack.c.b16 %v960, %v959
      %v1035 = vpack.c.b16 %v962, %v961
      %v1036 = vpack.c.b16 %v964, %v963
      %v1037 = vpack.c.b16 %v966, %v965
      %v1038 = vpack.c.b16 %v968, %v967
      %v1039 = vpack.c.b16 %v970, %v969
      %v1040 = vpack.c.b16 %v972, %v971
      %v1041 = vpack.c.b16 %v974, %v973
      %v1042 = vpack.c.b16 %v976, %v975
      %v1043 = vpack.c.b16 %v978, %v977
      %v1044 = vpack.c.b16 %v980, %v979
      %v1045 = vpack.c.b16 %v982, %v981
      %v1046 = vpack.c.b16 %v984, %v983
      %v1047 = vpack.c.b16 %v986, %v985
      %v1048 = vpack.c.b16 %v988, %v987
      %v1049 = vpack.c.b16 %v990, %v989
      %v1050 = vpack.c.b16 %v992, %v991
      %v1051 = vpack.c.b16 %v994, %v993
      %v1052 = vpack.c.b16 %v996, %v995
      %v1053 = vpack.c.b16 %v998, %v997
      %v1054 = vpack.c.b16 %v1000, %v999
      %v1055 = vpack.c.b16 %v1002, %v1001
      %v1056 = vpack.c.b16 %v1004, %v1003
      %v1057 = vpack.c.b16 %v1006, %v1005
      %v1058 = vpack.c.b16 %v1008, %v1007
      %v1059 = vpack.c.b16 %v1010, %v1009
      %v1060 = vpack.c.b16 %v1012, %v1011
      %v1061 = vpack.c.b16 %v1014, %v1013
      %v1062 = vpack.c.b16 %v1016, %v1015
      %v1063 = vpack.c.b16 %v1018, %v1017
      %v1064 = vpack.c.b16 %v1020, %v1019
      %v1065 = vpack.c.b16 %v1022, %v1021
      %v1066 = vpack.c.b16 %v1024, %v1023
      %v1067 = vpack.c.b16 %v1026, %v1025
      %v1068 = vpack.c.b16 %v1028, %v1027
      %v1069 = vpack.c.b16 %v1030, %v1029
      %v1070 = vpack.c.b16 %v1032, %v1031
      %v1071 = vpack.c.b16 %v1033, %v1033
      %v1110 = vsel %vm609, %v1071, 0
      %1112 = vmatprep.subr.bf16.mxu0 0
      %1113 = vmatpush1.bf16.msra.mxu0 %v1034
      %1114 = vmatprep.subr.bf16.mxu0 0
      %1115 = vmatpush1.bf16.msra.mxu0 %v1035
      %1116 = vmatprep.subr.bf16.mxu0 0
      %1117 = vmatpush1.bf16.msra.mxu0 %v1036
      %1118 = vmatprep.subr.bf16.mxu0 0
      %1119 = vmatpush1.bf16.msra.mxu0 %v1037
      %1120 = vmatprep.subr.bf16.mxu0 0
      %1121 = vmatpush1.bf16.msra.mxu0 %v1038
      %1122 = vmatprep.subr.bf16.mxu0 0
      %1123 = vmatpush1.bf16.msra.mxu0 %v1039
      %1124 = vmatprep.subr.bf16.mxu0 0
      %1125 = vmatpush1.bf16.msra.mxu0 %v1040
      %1126 = vmatprep.subr.bf16.mxu0 0
      %1127 = vmatpush1.bf16.msra.mxu0 %v1041
      %1128 = vmatprep.subr.bf16.mxu0 0
      %1129 = vmatpush1.bf16.msra.mxu0 %v1042
      %1130 = vmatprep.subr.bf16.mxu0 0
      %1131 = vmatpush1.bf16.msra.mxu0 %v1043
      %1132 = vmatprep.subr.bf16.mxu0 0
      %1133 = vmatpush1.bf16.msra.mxu0 %v1044
      %1134 = vmatprep.subr.bf16.mxu0 0
      %1135 = vmatpush1.bf16.msra.mxu0 %v1045
      %1136 = vmatprep.subr.bf16.mxu0 0
      %1137 = vmatpush1.bf16.msra.mxu0 %v1046
      %1138 = vmatprep.subr.bf16.mxu0 0
      %1139 = vmatpush1.bf16.msra.mxu0 %v1047
      %1140 = vmatprep.subr.bf16.mxu0 0
      %1141 = vmatpush1.bf16.msra.mxu0 %v1048
      %1142 = vmatprep.subr.bf16.mxu0 0
      %1143 = vmatpush1.bf16.msra.mxu0 %v1049
      %1144 = vmatprep.mubr.bf16.mxu0 %v336
      %1145 = vmatmul.mubr.bf16.gmra.mrb[0].mxu0 %v335
      %v1146 = vpop.f32.mrb[0].mxu0
      %v1147 = vadd.f32 0.0, %v1146
      %v1148 = vpop.f32.mrb[0].mxu0
      %v1149 = vpop.f32.mrb[0].mxu0
      %v1150 = vadd.f32 0.0, %v1149
      %v1151 = vpop.f32.mrb[0].mxu0
      %1152 = vmatprep.mubr.bf16.mxu0 %v341
      %1153 = vmatmul.mubr.bf16.gmra.mrb[0].mxu0 %v340
      %v1154 = vpop.f32.mrb[0].mxu0
      %v1155 = vadd.f32 0.0, %v1154
      %v1156 = vpop.f32.mrb[0].mxu0
      %v1157 = vpop.f32.mrb[0].mxu0
      %v1158 = vadd.f32 0.0, %v1157
      %v1159 = vpop.f32.mrb[0].mxu0
      %1160 = vmatprep.mubr.bf16.mxu0 %v346
      %1161 = vmatmul.mubr.bf16.gmra.mrb[0].mxu0 %v345
      %v1162 = vpop.f32.mrb[0].mxu0
      %v1163 = vadd.f32 0.0, %v1162
      %v1164 = vpop.f32.mrb[0].mxu0
      %v1165 = vpop.f32.mrb[0].mxu0
      %v1166 = vadd.f32 0.0, %v1165
      %v1167 = vpop.f32.mrb[0].mxu0
      %1168 = vmatprep.mubr.bf16.mxu0 %v351
      %1169 = vmatmul.mubr.bf16.gmra.mrb[0].mxu0 %v350
      %v1170 = vpop.f32.mrb[0].mxu0
      %v1171 = vadd.f32 0.0, %v1170
      %v1172 = vpop.f32.mrb[0].mxu0
      %v1173 = vpop.f32.mrb[0].mxu0
      %v1174 = vadd.f32 0.0, %v1173
      %v1175 = vpop.f32.mrb[0].mxu0
      %1176 = vdwg.mxu0
      %1177 = vmatprep.subr.bf16.mxu0 0
      %1178 = vmatpush1.bf16.msra.mxu0 %v1050
      %1179 = vmatprep.subr.bf16.mxu0 0
      %1180 = vmatpush1.bf16.msra.mxu0 %v1051
      %1181 = vmatprep.subr.bf16.mxu0 0
      %1182 = vmatpush1.bf16.msra.mxu0 %v1052
      %1183 = vmatprep.subr.bf16.mxu0 0
      %1184 = vmatpush1.bf16.msra.mxu0 %v1053
      %1185 = vmatprep.subr.bf16.mxu0 0
      %1186 = vmatpush1.bf16.msra.mxu0 %v1054
      %1187 = vmatprep.subr.bf16.mxu0 0
      %1188 = vmatpush1.bf16.msra.mxu0 %v1055
      %1189 = vmatprep.subr.bf16.mxu0 0
      %1190 = vmatpush1.bf16.msra.mxu0 %v1056
      %1191 = vmatprep.subr.bf16.mxu0 0
      %1192 = vmatpush1.bf16.msra.mxu0 %v1057
      %1193 = vmatprep.subr.bf16.mxu0 0
      %1194 = vmatpush1.bf16.msra.mxu0 %v1058
      %1195 = vmatprep.subr.bf16.mxu0 0
      %1196 = vmatpush1.bf16.msra.mxu0 %v1059
      %1197 = vmatprep.subr.bf16.mxu0 0
      %1198 = vmatpush1.bf16.msra.mxu0 %v1060
      %1199 = vmatprep.subr.bf16.mxu0 0
      %1200 = vmatpush1.bf16.msra.mxu0 %v1061
      %1201 = vmatprep.subr.bf16.mxu0 0
      %1202 = vmatpush1.bf16.msra.mxu0 %v1062
      %1203 = vmatprep.subr.bf16.mxu0 0
      %1204 = vmatpush1.bf16.msra.mxu0 %v1063
      %1205 = vmatprep.subr.bf16.mxu0 0
      %1206 = vmatpush1.bf16.msra.mxu0 %v1064
      %1207 = vmatprep.subr.bf16.mxu0 0
      %1208 = vmatpush1.bf16.msra.mxu0 %v1065
      %1209 = vmatprep.mubr.bf16.mxu0 %v338
      %1210 = vmatmul.mubr.bf16.gmra.mrb[0].mxu0 %v337
      %v1211 = vpop.f32.mrb[0].mxu0
      %v1212 = vadd.f32 %v1147, %v1211
      %v1213 = vpop.f32.mrb[0].mxu0
      %v1214 = vpop.f32.mrb[0].mxu0
      %v1215 = vadd.f32 %v1150, %v1214
      %v1216 = vpop.f32.mrb[0].mxu0
      %1217 = vmatprep.mubr.bf16.mxu0 %v343
      %1218 = vmatmul.mubr.bf16.gmra.mrb[0].mxu0 %v342
      %v1219 = vpop.f32.mrb[0].mxu0
      %v1220 = vadd.f32 %v1155, %v1219
      %v1221 = vpop.f32.mrb[0].mxu0
      %v1222 = vpop.f32.mrb[0].mxu0
      %v1223 = vadd.f32 %v1158, %v1222
      %v1224 = vpop.f32.mrb[0].mxu0
      %1225 = vmatprep.mubr.bf16.mxu0 %v348
      %1226 = vmatmul.mubr.bf16.gmra.mrb[0].mxu0 %v347
      %v1227 = vpop.f32.mrb[0].mxu0
      %v1228 = vadd.f32 %v1163, %v1227
      %v1229 = vpop.f32.mrb[0].mxu0
      %v1230 = vpop.f32.mrb[0].mxu0
      %v1231 = vadd.f32 %v1166, %v1230
      %v1232 = vpop.f32.mrb[0].mxu0
      %1233 = vmatprep.mubr.bf16.mxu0 %v353
      %1234 = vmatmul.mubr.bf16.gmra.mrb[0].mxu0 %v352
      %v1235 = vpop.f32.mrb[0].mxu0
      %v1236 = vadd.f32 %v1171, %v1235
      %v1237 = vpop.f32.mrb[0].mxu0
      %v1238 = vpop.f32.mrb[0].mxu0
      %v1239 = vadd.f32 %v1174, %v1238
      %v1240 = vpop.f32.mrb[0].mxu0
      %1241 = vdwg.mxu0
      %1242 = vmatprep.subr.bf16.mxu0 0
      %1243 = vmatpush1.bf16.msra.mxu0 %v1066
      %1244 = vmatprep.subr.bf16.mxu0 0
      %1245 = vmatpush1.bf16.msra.mxu0 %v1067
      %1246 = vmatprep.subr.bf16.mxu0 0
      %1247 = vmatpush1.bf16.msra.mxu0 %v1068
      %1248 = vmatprep.subr.bf16.mxu0 0
      %1249 = vmatpush1.bf16.msra.mxu0 %v1069
      %1250 = vmatprep.subr.bf16.mxu0 0
      %1251 = vmatpush1.bf16.msra.mxu0 %v1070
      %1252 = vmatprep.subr.bf16.mxu0 0
      %1253 = vmatpush1.bf16.msra.mxu0 %v1110
      %1254 = vmatprep.subr.bf16.mxu0 0
      %1255 = vmatpush1.bf16.msra.mxu0 0
      %1256 = vmatprep.subr.bf16.mxu0 0
      %1257 = vmatpush1.bf16.msra.mxu0 0
      %1258 = vmatprep.subr.bf16.mxu0 0
      %1259 = vmatpush1.bf16.msra.mxu0 0
      %1260 = vmatprep.subr.bf16.mxu0 0
      %1261 = vmatpush1.bf16.msra.mxu0 0
      %1262 = vmatprep.subr.bf16.mxu0 0
      %1263 = vmatpush1.bf16.msra.mxu0 0
      %1264 = vmatprep.subr.bf16.mxu0 0
      %1265 = vmatpush1.bf16.msra.mxu0 0
      %1266 = vmatprep.subr.bf16.mxu0 0
      %1267 = vmatpush1.bf16.msra.mxu0 0
      %1268 = vmatprep.subr.bf16.mxu0 0
      %1269 = vmatpush1.bf16.msra.mxu0 0
      %1270 = vmatprep.subr.bf16.mxu0 0
      %1271 = vmatpush1.bf16.msra.mxu0 0
      %1272 = vmatprep.subr.bf16.mxu0 0
      %1273 = vmatpush1.bf16.msra.mxu0 0
      %1274 = vmatprep.mubr.bf16.mxu0 0
      %1275 = vmatmul.mubr.bf16.gmra.mrb[0].mxu0 %v598
      %v1276 = vpop.f32.mrb[0].mxu0
      %v1277 = vadd.f32 %v1212, %v1276
      %v1278 = vpop.f32.mrb[0].mxu0
      %v1279 = vpop.f32.mrb[0].mxu0
      %v1280 = vadd.f32 %v1215, %v1279
      %v1281 = vpop.f32.mrb[0].mxu0
      %1282 = vmatprep.mubr.bf16.mxu0 0
      %1283 = vmatmul.mubr.bf16.gmra.mrb[0].mxu0 %v601
      %v1284 = vpop.f32.mrb[0].mxu0
      %v1285 = vadd.f32 %v1220, %v1284
      %v1286 = vpop.f32.mrb[0].mxu0
      %v1287 = vpop.f32.mrb[0].mxu0
      %v1288 = vadd.f32 %v1223, %v1287
      %v1289 = vpop.f32.mrb[0].mxu0
      %1290 = vmatprep.mubr.bf16.mxu0 0
      %1291 = vmatmul.mubr.bf16.gmra.mrb[0].mxu0 %v604
      %v1292 = vpop.f32.mrb[0].mxu0
      %v1293 = vadd.f32 %v1228, %v1292
      %v1294 = vpop.f32.mrb[0].mxu0
      %v1295 = vpop.f32.mrb[0].mxu0
      %v1296 = vadd.f32 %v1231, %v1295
      %v1297 = vpop.f32.mrb[0].mxu0
      %1298 = vmatprep.mubr.bf16.mxu0 0
      %1299 = vmatmul.mubr.bf16.gmra.mrb[0].mxu0 %v607
      %v1300 = vpop.f32.mrb[0].mxu0
      %v1301 = vadd.f32 %v1236, %v1300
      %v1302 = vpop.f32.mrb[0].mxu0
      %v1303 = vpop.f32.mrb[0].mxu0
      %v1304 = vadd.f32 %v1239, %v1303
      %v1305 = vpop.f32.mrb[0].mxu0
      %1306 = vdwg.mxu0
      %v1307 = vmax.f32 %v778, %v1277
      %v1308 = vmax.f32 %v781, %v1280
      %v1309 = vmax.f32 %v786, %v1285
      %v1310 = vmax.f32 %v789, %v1288
      %v1311 = vmax.f32 %v794, %v1293
      %v1312 = vmax.f32 %v797, %v1296
      %v1313 = vmax.f32 %v802, %v1301
      %v1314 = vmax.f32 %v805, %v1304
      %s1315 = scalar_lea.vmem %s165, 600
      %v1316 = vld [vmem:[%s1315] sm:$0xf]
      %v1317 = vld [vmem:[%s1315 + $0x4] sm:$0xf]
      %v1318 = vld [vmem:[%s1315 + $0x8] sm:$0xf]
      %v1319 = vld [vmem:[%s1315 + $0xc] sm:$0xf]
      %v1320 = vld [vmem:[%s1315 + $0x10] sm:$0xf]
      %v1321 = vld [vmem:[%s1315 + $0x14] sm:$0xf]
      %v1322 = vld [vmem:[%s1315 + $0x18] sm:$0xf]
      %v1323 = vld [vmem:[%s1315 + $0x1c] sm:$0xf]
      %v1324 = vld [vmem:[%s1315 + $0x20] sm:$0xf]
      %v1325 = vld [vmem:[%s1315 + $0x24] sm:$0xf]
      %v1326 = vld [vmem:[%s1315 + $0x28] sm:$0xf]
      %v1327 = vld [vmem:[%s1315 + $0x2c] sm:$0xf]
      %v1328 = vld [vmem:[%s1315 + $0x30] sm:$0xf]
      %v1329 = vld [vmem:[%s1315 + $0x34] sm:$0xf]
      %v1330 = vld [vmem:[%s1315 + $0x38] sm:$0xf]
      %v1331 = vld [vmem:[%s1315 + $0x3c] sm:$0xf]
      %v1332 = vld [vmem:[%s1315 + $0x40] sm:$0xf]
      %v1333 = vld [vmem:[%s1315 + $0x44] sm:$0xf]
      %v1334 = vld [vmem:[%s1315 + $0x48] sm:$0xf]
      %v1335 = vld [vmem:[%s1315 + $0x4c] sm:$0xf]
      %v1336 = vld [vmem:[%s1315 + $0x50] sm:$0xf]
      %v1337 = vld [vmem:[%s1315 + $0x54] sm:$0xf]
      %v1338 = vld [vmem:[%s1315 + $0x58] sm:$0xf]
      %v1339 = vld [vmem:[%s1315 + $0x5c] sm:$0xf]
      %v1340 = vld [vmem:[%s1315 + $0x60] sm:$0xf]
      %v1341 = vld [vmem:[%s1315 + $0x64] sm:$0xf]
      %v1342 = vld [vmem:[%s1315 + $0x68] sm:$0xf]
      %v1343 = vld [vmem:[%s1315 + $0x6c] sm:$0xf]
      %v1344 = vld [vmem:[%s1315 + $0x70] sm:$0xf]
      %v1345 = vld [vmem:[%s1315 + $0x74] sm:$0xf]
      %v1346 = vld [vmem:[%s1315 + $0x78] sm:$0xf]
      %v1347 = vld [vmem:[%s1315 + $0x7c] sm:$0xf]
      %v1348 = vld [vmem:[%s1315 + $0x80] sm:$0xf]
      %v1349 = vld [vmem:[%s1315 + $0x84] sm:$0xf]
      %v1350 = vld [vmem:[%s1315 + $0x88] sm:$0xf]
      %v1351 = vld [vmem:[%s1315 + $0x8c] sm:$0xf]
      %v1352 = vld [vmem:[%s1315 + $0x90] sm:$0xf]
      %v1353 = vld [vmem:[%s1315 + $0x94] sm:$0xf]
      %v1354 = vld [vmem:[%s1315 + $0x98] sm:$0xf]
      %v1355 = vld [vmem:[%s1315 + $0x9c] sm:$0xf]
      %v1356 = vld [vmem:[%s1315 + $0xa0] sm:$0xf]
      %v1357 = vld [vmem:[%s1315 + $0xa4] sm:$0xf]
      %v1358 = vld [vmem:[%s1315 + $0xa8] sm:$0xf]
      %v1359 = vld [vmem:[%s1315 + $0xac] sm:$0xf]
      %v1360 = vld [vmem:[%s1315 + $0xb0] sm:$0xf]
      %v1361 = vld [vmem:[%s1315 + $0xb4] sm:$0xf]
      %v1362 = vld [vmem:[%s1315 + $0xb8] sm:$0xf]
      %v1363 = vld [vmem:[%s1315 + $0xbc] sm:$0xf]
      %v1364 = vld [vmem:[%s1315 + $0xc0] sm:$0xf]
      %v1365 = vld [vmem:[%s1315 + $0xc4] sm:$0xf]
      %v1366 = vld [vmem:[%s1315 + $0xc8] sm:$0xf]
      %v1367 = vld [vmem:[%s1315 + $0xcc] sm:$0xf]
      %v1368 = vld [vmem:[%s1315 + $0xd0] sm:$0xf]
      %v1369 = vld [vmem:[%s1315 + $0xd4] sm:$0xf]
      %v1370 = vld [vmem:[%s1315 + $0xd8] sm:$0xf]
      %v1371 = vld [vmem:[%s1315 + $0xdc] sm:$0xf]
      %v1372 = vld [vmem:[%s1315 + $0xe0] sm:$0xf]
      %v1373 = vld [vmem:[%s1315 + $0xe4] sm:$0xf]
      %v1374 = vld [vmem:[%s1315 + $0xe8] sm:$0xf]
      %v1375 = vld [vmem:[%s1315 + $0xec] sm:$0xf]
      %v1376 = vld [vmem:[%s1315 + $0xf0] sm:$0xf]
      %v1377 = vld [vmem:[%s1315 + $0xf4] sm:$0xf]
      %v1378 = vld [vmem:[%s1315 + $0xf8] sm:$0xf]
      %v1379 = vld [vmem:[%s1315 + $0xfc] sm:$0xf]
      %v1380 = vld [vmem:[%s1315 + $0x100] sm:$0xf]
      %v1381 = vld [vmem:[%s1315 + $0x104] sm:$0xf]
      %v1382 = vld [vmem:[%s1315 + $0x108] sm:$0xf]
      %v1383 = vld [vmem:[%s1315 + $0x10c] sm:$0xf]
      %v1384 = vld [vmem:[%s1315 + $0x110] sm:$0xf]
      %v1385 = vld [vmem:[%s1315 + $0x114] sm:$0xf]
      %v1386 = vld [vmem:[%s1315 + $0x118] sm:$0xf]
      %v1387 = vld [vmem:[%s1315 + $0x11c] sm:$0xf]
      %v1388 = vld [vmem:[%s1315 + $0x120] sm:$0xf]
      %v1389 = vld [vmem:[%s1315 + $0x124] sm:$0xf]
      %v1390 = vld [vmem:[%s1315 + $0x128] sm:$0xf]
      %v1466 = vunpack.c.l.b16 %v1316
      %v1467 = vunpack.c.l.b16 %v1317
      %v1468 = vunpack.c.l.b16 %v1318
      %v1469 = vunpack.c.l.b16 %v1319
      %v1470 = vunpack.c.l.b16 %v1320
      %v1471 = vunpack.c.l.b16 %v1321
      %v1472 = vunpack.c.l.b16 %v1322
      %v1473 = vunpack.c.l.b16 %v1323
      %v1474 = vunpack.c.l.b16 %v1324
      %v1475 = vunpack.c.l.b16 %v1325
      %v1476 = vunpack.c.l.b16 %v1326
      %v1477 = vunpack.c.l.b16 %v1327
      %v1478 = vunpack.c.l.b16 %v1328
      %v1479 = vunpack.c.l.b16 %v1329
      %v1480 = vunpack.c.l.b16 %v1330
      %v1481 = vunpack.c.l.b16 %v1331
      %v1482 = vunpack.c.l.b16 %v1332
      %v1483 = vunpack.c.l.b16 %v1333
      %v1484 = vunpack.c.l.b16 %v1334
      %v1485 = vunpack.c.l.b16 %v1335
      %v1486 = vunpack.c.l.b16 %v1336
      %v1487 = vunpack.c.l.b16 %v1337
      %v1488 = vunpack.c.l.b16 %v1338
      %v1489 = vunpack.c.l.b16 %v1339
      %v1490 = vunpack.c.l.b16 %v1340
      %v1491 = vunpack.c.l.b16 %v1341
      %v1492 = vunpack.c.l.b16 %v1342
      %v1493 = vunpack.c.l.b16 %v1343
      %v1494 = vunpack.c.l.b16 %v1344
      %v1495 = vunpack.c.l.b16 %v1345
      %v1496 = vunpack.c.l.b16 %v1346
      %v1497 = vunpack.c.l.b16 %v1347
      %v1498 = vunpack.c.l.b16 %v1348
      %v1499 = vunpack.c.l.b16 %v1349
      %v1500 = vunpack.c.l.b16 %v1350
      %v1501 = vunpack.c.l.b16 %v1351
      %v1502 = vunpack.c.l.b16 %v1352
      %v1503 = vunpack.c.l.b16 %v1353
      %v1504 = vunpack.c.l.b16 %v1354
      %v1505 = vunpack.c.l.b16 %v1355
      %v1506 = vunpack.c.l.b16 %v1356
      %v1507 = vunpack.c.l.b16 %v1357
      %v1508 = vunpack.c.l.b16 %v1358
      %v1509 = vunpack.c.l.b16 %v1359
      %v1510 = vunpack.c.l.b16 %v1360
      %v1511 = vunpack.c.l.b16 %v1361
      %v1512 = vunpack.c.l.b16 %v1362
      %v1513 = vunpack.c.l.b16 %v1363
      %v1514 = vunpack.c.l.b16 %v1364
      %v1515 = vunpack.c.l.b16 %v1365
      %v1516 = vunpack.c.l.b16 %v1366
      %v1517 = vunpack.c.l.b16 %v1367
      %v1518 = vunpack.c.l.b16 %v1368
      %v1519 = vunpack.c.l.b16 %v1369
      %v1520 = vunpack.c.l.b16 %v1370
      %v1521 = vunpack.c.l.b16 %v1371
      %v1522 = vunpack.c.l.b16 %v1372
      %v1523 = vunpack.c.l.b16 %v1373
      %v1524 = vunpack.c.l.b16 %v1374
      %v1525 = vunpack.c.l.b16 %v1375
      %v1526 = vunpack.c.l.b16 %v1376
      %v1527 = vunpack.c.l.b16 %v1377
      %v1528 = vunpack.c.l.b16 %v1378
      %v1529 = vunpack.c.l.b16 %v1379
      %v1530 = vunpack.c.l.b16 %v1380
      %v1531 = vunpack.c.l.b16 %v1381
      %v1532 = vunpack.c.l.b16 %v1382
      %v1533 = vunpack.c.l.b16 %v1383
      %v1534 = vunpack.c.l.b16 %v1384
      %v1535 = vunpack.c.l.b16 %v1385
      %v1536 = vunpack.c.l.b16 %v1386
      %v1537 = vunpack.c.l.b16 %v1387
      %v1538 = vunpack.c.l.b16 %v1388
      %v1539 = vunpack.c.l.b16 %v1389
      %v1540 = vunpack.c.l.b16 %v1390
      %v1541 = vpack.c.b16 %v1467, %v1466
      %v1542 = vpack.c.b16 %v1469, %v1468
      %v1543 = vpack.c.b16 %v1471, %v1470
      %v1544 = vpack.c.b16 %v1473, %v1472
      %v1545 = vpack.c.b16 %v1475, %v1474
      %v1546 = vpack.c.b16 %v1477, %v1476
      %v1547 = vpack.c.b16 %v1479, %v1478
      %v1548 = vpack.c.b16 %v1481, %v1480
      %v1549 = vpack.c.b16 %v1483, %v1482
      %v1550 = vpack.c.b16 %v1485, %v1484
      %v1551 = vpack.c.b16 %v1487, %v1486
      %v1552 = vpack.c.b16 %v1489, %v1488
      %v1553 = vpack.c.b16 %v1491, %v1490
      %v1554 = vpack.c.b16 %v1493, %v1492
      %v1555 = vpack.c.b16 %v1495, %v1494
      %v1556 = vpack.c.b16 %v1497, %v1496
      %v1557 = vpack.c.b16 %v1499, %v1498
      %v1558 = vpack.c.b16 %v1501, %v1500
      %v1559 = vpack.c.b16 %v1503, %v1502
      %v1560 = vpack.c.b16 %v1505, %v1504
      %v1561 = vpack.c.b16 %v1507, %v1506
      %v1562 = vpack.c.b16 %v1509, %v1508
      %v1563 = vpack.c.b16 %v1511, %v1510
      %v1564 = vpack.c.b16 %v1513, %v1512
      %v1565 = vpack.c.b16 %v1515, %v1514
      %v1566 = vpack.c.b16 %v1517, %v1516
      %v1567 = vpack.c.b16 %v1519, %v1518
      %v1568 = vpack.c.b16 %v1521, %v1520
      %v1569 = vpack.c.b16 %v1523, %v1522
      %v1570 = vpack.c.b16 %v1525, %v1524
      %v1571 = vpack.c.b16 %v1527, %v1526
      %v1572 = vpack.c.b16 %v1529, %v1528
      %v1573 = vpack.c.b16 %v1531, %v1530
      %v1574 = vpack.c.b16 %v1533, %v1532
      %v1575 = vpack.c.b16 %v1535, %v1534
      %v1576 = vpack.c.b16 %v1537, %v1536
      %v1577 = vpack.c.b16 %v1539, %v1538
      %v1578 = vpack.c.b16 %v1540, %v1540
      %v1617 = vsel %vm609, %v1578, 0
      %1619 = vmatprep.subr.bf16.mxu0 0
      %1620 = vmatpush1.bf16.msra.mxu0 %v1541
      %1621 = vmatprep.subr.bf16.mxu0 0
      %1622 = vmatpush1.bf16.msra.mxu0 %v1542
      %1623 = vmatprep.subr.bf16.mxu0 0
      %1624 = vmatpush1.bf16.msra.mxu0 %v1543
      %1625 = vmatprep.subr.bf16.mxu0 0
      %1626 = vmatpush1.bf16.msra.mxu0 %v1544
      %1627 = vmatprep.subr.bf16.mxu0 0
      %1628 = vmatpush1.bf16.msra.mxu0 %v1545
      %1629 = vmatprep.subr.bf16.mxu0 0
      %1630 = vmatpush1.bf16.msra.mxu0 %v1546
      %1631 = vmatprep.subr.bf16.mxu0 0
      %1632 = vmatpush1.bf16.msra.mxu0 %v1547
      %1633 = vmatprep.subr.bf16.mxu0 0
      %1634 = vmatpush1.bf16.msra.mxu0 %v1548
      %1635 = vmatprep.subr.bf16.mxu0 0
      %1636 = vmatpush1.bf16.msra.mxu0 %v1549
      %1637 = vmatprep.subr.bf16.mxu0 0
      %1638 = vmatpush1.bf16.msra.mxu0 %v1550
      %1639 = vmatprep.subr.bf16.mxu0 0
      %1640 = vmatpush1.bf16.msra.mxu0 %v1551
      %1641 = vmatprep.subr.bf16.mxu0 0
      %1642 = vmatpush1.bf16.msra.mxu0 %v1552
      %1643 = vmatprep.subr.bf16.mxu0 0
      %1644 = vmatpush1.bf16.msra.mxu0 %v1553
      %1645 = vmatprep.subr.bf16.mxu0 0
      %1646 = vmatpush1.bf16.msra.mxu0 %v1554
      %1647 = vmatprep.subr.bf16.mxu0 0
      %1648 = vmatpush1.bf16.msra.mxu0 %v1555
      %1649 = vmatprep.subr.bf16.mxu0 0
      %1650 = vmatpush1.bf16.msra.mxu0 %v1556
      %1651 = vmatprep.mubr.bf16.mxu0 %v336
      %1652 = vmatmul.mubr.bf16.gmra.mrb[0].mxu0 %v335
      %v1653 = vpop.f32.mrb[0].mxu0
      %v1654 = vadd.f32 0.0, %v1653
      %v1655 = vpop.f32.mrb[0].mxu0
      %v1656 = vpop.f32.mrb[0].mxu0
      %v1657 = vadd.f32 0.0, %v1656
      %v1658 = vpop.f32.mrb[0].mxu0
      %1659 = vmatprep.mubr.bf16.mxu0 %v341
      %1660 = vmatmul.mubr.bf16.gmra.mrb[0].mxu0 %v340
      %v1661 = vpop.f32.mrb[0].mxu0
      %v1662 = vadd.f32 0.0, %v1661
      %v1663 = vpop.f32.mrb[0].mxu0
      %v1664 = vpop.f32.mrb[0].mxu0
      %v1665 = vadd.f32 0.0, %v1664
      %v1666 = vpop.f32.mrb[0].mxu0
      %1667 = vmatprep.mubr.bf16.mxu0 %v346
      %1668 = vmatmul.mubr.bf16.gmra.mrb[0].mxu0 %v345
      %v1669 = vpop.f32.mrb[0].mxu0
      %v1670 = vadd.f32 0.0, %v1669
      %v1671 = vpop.f32.mrb[0].mxu0
      %v1672 = vpop.f32.mrb[0].mxu0
      %v1673 = vadd.f32 0.0, %v1672
      %v1674 = vpop.f32.mrb[0].mxu0
      %1675 = vmatprep.mubr.bf16.mxu0 %v351
      %1676 = vmatmul.mubr.bf16.gmra.mrb[0].mxu0 %v350
      %v1677 = vpop.f32.mrb[0].mxu0
      %v1678 = vadd.f32 0.0, %v1677
      %v1679 = vpop.f32.mrb[0].mxu0
      %v1680 = vpop.f32.mrb[0].mxu0
      %v1681 = vadd.f32 0.0, %v1680
      %v1682 = vpop.f32.mrb[0].mxu0
      %1683 = vdwg.mxu0
      %1684 = vmatprep.subr.bf16.mxu0 0
      %1685 = vmatpush1.bf16.msra.mxu0 %v1557
      %1686 = vmatprep.subr.bf16.mxu0 0
      %1687 = vmatpush1.bf16.msra.mxu0 %v1558
      %1688 = vmatprep.subr.bf16.mxu0 0
      %1689 = vmatpush1.bf16.msra.mxu0 %v1559
      %1690 = vmatprep.subr.bf16.mxu0 0
      %1691 = vmatpush1.bf16.msra.mxu0 %v1560
      %1692 = vmatprep.subr.bf16.mxu0 0
      %1693 = vmatpush1.bf16.msra.mxu0 %v1561
      %1694 = vmatprep.subr.bf16.mxu0 0
      %1695 = vmatpush1.bf16.msra.mxu0 %v1562
      %1696 = vmatprep.subr.bf16.mxu0 0
      %1697 = vmatpush1.bf16.msra.mxu0 %v1563
      %1698 = vmatprep.subr.bf16.mxu0 0
      %1699 = vmatpush1.bf16.msra.mxu0 %v1564
      %1700 = vmatprep.subr.bf16.mxu0 0
      %1701 = vmatpush1.bf16.msra.mxu0 %v1565
      %1702 = vmatprep.subr.bf16.mxu0 0
      %1703 = vmatpush1.bf16.msra.mxu0 %v1566
      %1704 = vmatprep.subr.bf16.mxu0 0
      %1705 = vmatpush1.bf16.msra.mxu0 %v1567
      %1706 = vmatprep.subr.bf16.mxu0 0
      %1707 = vmatpush1.bf16.msra.mxu0 %v1568
      %1708 = vmatprep.subr.bf16.mxu0 0
      %1709 = vmatpush1.bf16.msra.mxu0 %v1569
      %1710 = vmatprep.subr.bf16.mxu0 0
      %1711 = vmatpush1.bf16.msra.mxu0 %v1570
      %1712 = vmatprep.subr.bf16.mxu0 0
      %1713 = vmatpush1.bf16.msra.mxu0 %v1571
      %1714 = vmatprep.subr.bf16.mxu0 0
      %1715 = vmatpush1.bf16.msra.mxu0 %v1572
      %1716 = vmatprep.mubr.bf16.mxu0 %v338
      %1717 = vmatmul.mubr.bf16.gmra.mrb[0].mxu0 %v337
      %v1718 = vpop.f32.mrb[0].mxu0
      %v1719 = vadd.f32 %v1654, %v1718
      %v1720 = vpop.f32.mrb[0].mxu0
      %v1721 = vpop.f32.mrb[0].mxu0
      %v1722 = vadd.f32 %v1657, %v1721
      %v1723 = vpop.f32.mrb[0].mxu0
      %1724 = vmatprep.mubr.bf16.mxu0 %v343
      %1725 = vmatmul.mubr.bf16.gmra.mrb[0].mxu0 %v342
      %v1726 = vpop.f32.mrb[0].mxu0
      %v1727 = vadd.f32 %v1662, %v1726
      %v1728 = vpop.f32.mrb[0].mxu0
      %v1729 = vpop.f32.mrb[0].mxu0
      %v1730 = vadd.f32 %v1665, %v1729
      %v1731 = vpop.f32.mrb[0].mxu0
      %1732 = vmatprep.mubr.bf16.mxu0 %v348
      %1733 = vmatmul.mubr.bf16.gmra.mrb[0].mxu0 %v347
      %v1734 = vpop.f32.mrb[0].mxu0
      %v1735 = vadd.f32 %v1670, %v1734
      %v1736 = vpop.f32.mrb[0].mxu0
      %v1737 = vpop.f32.mrb[0].mxu0
      %v1738 = vadd.f32 %v1673, %v1737
      %v1739 = vpop.f32.mrb[0].mxu0
      %1740 = vmatprep.mubr.bf16.mxu0 %v353
      %1741 = vmatmul.mubr.bf16.gmra.mrb[0].mxu0 %v352
      %v1742 = vpop.f32.mrb[0].mxu0
      %v1743 = vadd.f32 %v1678, %v1742
      %v1744 = vpop.f32.mrb[0].mxu0
      %v1745 = vpop.f32.mrb[0].mxu0
      %v1746 = vadd.f32 %v1681, %v1745
      %v1747 = vpop.f32.mrb[0].mxu0
      %1748 = vdwg.mxu0
      %1749 = vmatprep.subr.bf16.mxu0 0
      %1750 = vmatpush1.bf16.msra.mxu0 %v1573
      %1751 = vmatprep.subr.bf16.mxu0 0
      %1752 = vmatpush1.bf16.msra.mxu0 %v1574
      %1753 = vmatprep.subr.bf16.mxu0 0
      %1754 = vmatpush1.bf16.msra.mxu0 %v1575
      %1755 = vmatprep.subr.bf16.mxu0 0
      %1756 = vmatpush1.bf16.msra.mxu0 %v1576
      %1757 = vmatprep.subr.bf16.mxu0 0
      %1758 = vmatpush1.bf16.msra.mxu0 %v1577
      %1759 = vmatprep.subr.bf16.mxu0 0
      %1760 = vmatpush1.bf16.msra.mxu0 %v1617
      %1761 = vmatprep.subr.bf16.mxu0 0
      %1762 = vmatpush1.bf16.msra.mxu0 0
      %1763 = vmatprep.subr.bf16.mxu0 0
      %1764 = vmatpush1.bf16.msra.mxu0 0
      %1765 = vmatprep.subr.bf16.mxu0 0
      %1766 = vmatpush1.bf16.msra.mxu0 0
      %1767 = vmatprep.subr.bf16.mxu0 0
      %1768 = vmatpush1.bf16.msra.mxu0 0
      %1769 = vmatprep.subr.bf16.mxu0 0
      %1770 = vmatpush1.bf16.msra.mxu0 0
      %1771 = vmatprep.subr.bf16.mxu0 0
      %1772 = vmatpush1.bf16.msra.mxu0 0
      %1773 = vmatprep.subr.bf16.mxu0 0
      %1774 = vmatpush1.bf16.msra.mxu0 0
      %1775 = vmatprep.subr.bf16.mxu0 0
      %1776 = vmatpush1.bf16.msra.mxu0 0
      %1777 = vmatprep.subr.bf16.mxu0 0
      %1778 = vmatpush1.bf16.msra.mxu0 0
      %1779 = vmatprep.subr.bf16.mxu0 0
      %1780 = vmatpush1.bf16.msra.mxu0 0
      %1781 = vmatprep.mubr.bf16.mxu0 0
      %1782 = vmatmul.mubr.bf16.gmra.mrb[0].mxu0 %v598
      %v1783 = vpop.f32.mrb[0].mxu0
      %v1784 = vadd.f32 %v1719, %v1783
      %v1785 = vpop.f32.mrb[0].mxu0
      %v1786 = vpop.f32.mrb[0].mxu0
      %v1787 = vadd.f32 %v1722, %v1786
      %v1788 = vpop.f32.mrb[0].mxu0
      %1789 = vmatprep.mubr.bf16.mxu0 0
      %1790 = vmatmul.mubr.bf16.gmra.mrb[0].mxu0 %v601
      %v1791 = vpop.f32.mrb[0].mxu0
      %v1792 = vadd.f32 %v1727, %v1791
      %v1793 = vpop.f32.mrb[0].mxu0
      %v1794 = vpop.f32.mrb[0].mxu0
      %v1795 = vadd.f32 %v1730, %v1794
      %v1796 = vpop.f32.mrb[0].mxu0
      %1797 = vmatprep.mubr.bf16.mxu0 0
      %1798 = vmatmul.mubr.bf16.gmra.mrb[0].mxu0 %v604
      %v1799 = vpop.f32.mrb[0].mxu0
      %v1800 = vadd.f32 %v1735, %v1799
      %v1801 = vpop.f32.mrb[0].mxu0
      %v1802 = vpop.f32.mrb[0].mxu0
      %v1803 = vadd.f32 %v1738, %v1802
      %v1804 = vpop.f32.mrb[0].mxu0
      %1805 = vmatprep.mubr.bf16.mxu0 0
      %1806 = vmatmul.mubr.bf16.gmra.mrb[0].mxu0 %v607
      %v1807 = vpop.f32.mrb[0].mxu0
      %v1808 = vadd.f32 %v1743, %v1807
      %v1809 = vpop.f32.mrb[0].mxu0
      %v1810 = vpop.f32.mrb[0].mxu0
      %v1811 = vadd.f32 %v1746, %v1810
      %v1812 = vpop.f32.mrb[0].mxu0
      %1813 = vdwg.mxu0
      %v1814 = vmax.f32 %v1307, %v1784
      %v1815 = vmax.f32 %v1308, %v1787
      %v1816 = vmax.f32 %v1309, %v1792
      %v1817 = vmax.f32 %v1310, %v1795
      %v1818 = vmax.f32 %v1311, %v1800
      %v1819 = vmax.f32 %v1312, %v1803
      %v1820 = vmax.f32 %v1313, %v1808
      %v1821 = vmax.f32 %v1314, %v1811
      %s1822 = scalar_lea.vmem %s165, 900
      %v1823 = vld [vmem:[%s1822] sm:$0xf]
      %v1824 = vld [vmem:[%s1822 + $0x4] sm:$0xf]
      %v1825 = vld [vmem:[%s1822 + $0x8] sm:$0xf]
      %v1826 = vld [vmem:[%s1822 + $0xc] sm:$0xf]
      %v1827 = vld [vmem:[%s1822 + $0x10] sm:$0xf]
      %v1828 = vld [vmem:[%s1822 + $0x14] sm:$0xf]
      %v1829 = vld [vmem:[%s1822 + $0x18] sm:$0xf]
      %v1830 = vld [vmem:[%s1822 + $0x1c] sm:$0xf]
      %v1831 = vld [vmem:[%s1822 + $0x20] sm:$0xf]
      %v1832 = vld [vmem:[%s1822 + $0x24] sm:$0xf]
      %v1833 = vld [vmem:[%s1822 + $0x28] sm:$0xf]
      %v1834 = vld [vmem:[%s1822 + $0x2c] sm:$0xf]
      %v1835 = vld [vmem:[%s1822 + $0x30] sm:$0xf]
      %v1836 = vld [vmem:[%s1822 + $0x34] sm:$0xf]
      %v1837 = vld [vmem:[%s1822 + $0x38] sm:$0xf]
      %v1838 = vld [vmem:[%s1822 + $0x3c] sm:$0xf]
      %v1839 = vld [vmem:[%s1822 + $0x40] sm:$0xf]
      %v1840 = vld [vmem:[%s1822 + $0x44] sm:$0xf]
      %v1841 = vld [vmem:[%s1822 + $0x48] sm:$0xf]
      %v1842 = vld [vmem:[%s1822 + $0x4c] sm:$0xf]
      %v1843 = vld [vmem:[%s1822 + $0x50] sm:$0xf]
      %v1844 = vld [vmem:[%s1822 + $0x54] sm:$0xf]
      %v1845 = vld [vmem:[%s1822 + $0x58] sm:$0xf]
      %v1846 = vld [vmem:[%s1822 + $0x5c] sm:$0xf]
      %v1847 = vld [vmem:[%s1822 + $0x60] sm:$0xf]
      %v1848 = vld [vmem:[%s1822 + $0x64] sm:$0xf]
      %v1849 = vld [vmem:[%s1822 + $0x68] sm:$0xf]
      %v1850 = vld [vmem:[%s1822 + $0x6c] sm:$0xf]
      %v1851 = vld [vmem:[%s1822 + $0x70] sm:$0xf]
      %v1852 = vld [vmem:[%s1822 + $0x74] sm:$0xf]
      %v1853 = vld [vmem:[%s1822 + $0x78] sm:$0xf]
      %v1854 = vld [vmem:[%s1822 + $0x7c] sm:$0xf]
      %v1855 = vld [vmem:[%s1822 + $0x80] sm:$0xf]
      %v1856 = vld [vmem:[%s1822 + $0x84] sm:$0xf]
      %v1857 = vld [vmem:[%s1822 + $0x88] sm:$0xf]
      %v1858 = vld [vmem:[%s1822 + $0x8c] sm:$0xf]
      %v1859 = vld [vmem:[%s1822 + $0x90] sm:$0xf]
      %v1860 = vld [vmem:[%s1822 + $0x94] sm:$0xf]
      %v1861 = vld [vmem:[%s1822 + $0x98] sm:$0xf]
      %v1862 = vld [vmem:[%s1822 + $0x9c] sm:$0xf]
      %v1863 = vld [vmem:[%s1822 + $0xa0] sm:$0xf]
      %v1864 = vld [vmem:[%s1822 + $0xa4] sm:$0xf]
      %v1865 = vld [vmem:[%s1822 + $0xa8] sm:$0xf]
      %v1866 = vld [vmem:[%s1822 + $0xac] sm:$0xf]
      %v1867 = vld [vmem:[%s1822 + $0xb0] sm:$0xf]
      %v1868 = vld [vmem:[%s1822 + $0xb4] sm:$0xf]
      %v1869 = vld [vmem:[%s1822 + $0xb8] sm:$0xf]
      %v1870 = vld [vmem:[%s1822 + $0xbc] sm:$0xf]
      %v1871 = vld [vmem:[%s1822 + $0xc0] sm:$0xf]
      %v1872 = vld [vmem:[%s1822 + $0xc4] sm:$0xf]
      %v1873 = vld [vmem:[%s1822 + $0xc8] sm:$0xf]
      %v1874 = vld [vmem:[%s1822 + $0xcc] sm:$0xf]
      %v1875 = vld [vmem:[%s1822 + $0xd0] sm:$0xf]
      %v1876 = vld [vmem:[%s1822 + $0xd4] sm:$0xf]
      %v1877 = vld [vmem:[%s1822 + $0xd8] sm:$0xf]
      %v1878 = vld [vmem:[%s1822 + $0xdc] sm:$0xf]
      %v1879 = vld [vmem:[%s1822 + $0xe0] sm:$0xf]
      %v1880 = vld [vmem:[%s1822 + $0xe4] sm:$0xf]
      %v1881 = vld [vmem:[%s1822 + $0xe8] sm:$0xf]
      %v1882 = vld [vmem:[%s1822 + $0xec] sm:$0xf]
      %v1883 = vld [vmem:[%s1822 + $0xf0] sm:$0xf]
      %v1884 = vld [vmem:[%s1822 + $0xf4] sm:$0xf]
      %v1885 = vld [vmem:[%s1822 + $0xf8] sm:$0xf]
      %v1886 = vld [vmem:[%s1822 + $0xfc] sm:$0xf]
      %v1887 = vld [vmem:[%s1822 + $0x100] sm:$0xf]
      %v1888 = vld [vmem:[%s1822 + $0x104] sm:$0xf]
      %v1889 = vld [vmem:[%s1822 + $0x108] sm:$0xf]
      %v1890 = vld [vmem:[%s1822 + $0x10c] sm:$0xf]
      %v1891 = vld [vmem:[%s1822 + $0x110] sm:$0xf]
      %v1892 = vld [vmem:[%s1822 + $0x114] sm:$0xf]
      %v1893 = vld [vmem:[%s1822 + $0x118] sm:$0xf]
      %v1894 = vld [vmem:[%s1822 + $0x11c] sm:$0xf]
      %v1895 = vld [vmem:[%s1822 + $0x120] sm:$0xf]
      %v1896 = vld [vmem:[%s1822 + $0x124] sm:$0xf]
      %v1897 = vld [vmem:[%s1822 + $0x128] sm:$0xf]
      %v1973 = vunpack.c.l.b16 %v1823
      %v1974 = vunpack.c.l.b16 %v1824
      %v1975 = vunpack.c.l.b16 %v1825
      %v1976 = vunpack.c.l.b16 %v1826
      %v1977 = vunpack.c.l.b16 %v1827
      %v1978 = vunpack.c.l.b16 %v1828
      %v1979 = vunpack.c.l.b16 %v1829
      %v1980 = vunpack.c.l.b16 %v1830
      %v1981 = vunpack.c.l.b16 %v1831
      %v1982 = vunpack.c.l.b16 %v1832
      %v1983 = vunpack.c.l.b16 %v1833
      %v1984 = vunpack.c.l.b16 %v1834
      %v1985 = vunpack.c.l.b16 %v1835
      %v1986 = vunpack.c.l.b16 %v1836
      %v1987 = vunpack.c.l.b16 %v1837
      %v1988 = vunpack.c.l.b16 %v1838
      %v1989 = vunpack.c.l.b16 %v1839
      %v1990 = vunpack.c.l.b16 %v1840
      %v1991 = vunpack.c.l.b16 %v1841
      %v1992 = vunpack.c.l.b16 %v1842
      %v1993 = vunpack.c.l.b16 %v1843
      %v1994 = vunpack.c.l.b16 %v1844
      %v1995 = vunpack.c.l.b16 %v1845
      %v1996 = vunpack.c.l.b16 %v1846
      %v1997 = vunpack.c.l.b16 %v1847
      %v1998 = vunpack.c.l.b16 %v1848
      %v1999 = vunpack.c.l.b16 %v1849
      %v2000 = vunpack.c.l.b16 %v1850
      %v2001 = vunpack.c.l.b16 %v1851
      %v2002 = vunpack.c.l.b16 %v1852
      %v2003 = vunpack.c.l.b16 %v1853
      %v2004 = vunpack.c.l.b16 %v1854
      %v2005 = vunpack.c.l.b16 %v1855
      %v2006 = vunpack.c.l.b16 %v1856
      %v2007 = vunpack.c.l.b16 %v1857
      %v2008 = vunpack.c.l.b16 %v1858
      %v2009 = vunpack.c.l.b16 %v1859
      %v2010 = vunpack.c.l.b16 %v1860
      %v2011 = vunpack.c.l.b16 %v1861
      %v2012 = vunpack.c.l.b16 %v1862
      %v2013 = vunpack.c.l.b16 %v1863
      %v2014 = vunpack.c.l.b16 %v1864
      %v2015 = vunpack.c.l.b16 %v1865
      %v2016 = vunpack.c.l.b16 %v1866
      %v2017 = vunpack.c.l.b16 %v1867
      %v2018 = vunpack.c.l.b16 %v1868
      %v2019 = vunpack.c.l.b16 %v1869
      %v2020 = vunpack.c.l.b16 %v1870
      %v2021 = vunpack.c.l.b16 %v1871
      %v2022 = vunpack.c.l.b16 %v1872
      %v2023 = vunpack.c.l.b16 %v1873
      %v2024 = vunpack.c.l.b16 %v1874
      %v2025 = vunpack.c.l.b16 %v1875
      %v2026 = vunpack.c.l.b16 %v1876
      %v2027 = vunpack.c.l.b16 %v1877
      %v2028 = vunpack.c.l.b16 %v1878
      %v2029 = vunpack.c.l.b16 %v1879
      %v2030 = vunpack.c.l.b16 %v1880
      %v2031 = vunpack.c.l.b16 %v1881
      %v2032 = vunpack.c.l.b16 %v1882
      %v2033 = vunpack.c.l.b16 %v1883
      %v2034 = vunpack.c.l.b16 %v1884
      %v2035 = vunpack.c.l.b16 %v1885
      %v2036 = vunpack.c.l.b16 %v1886
      %v2037 = vunpack.c.l.b16 %v1887
      %v2038 = vunpack.c.l.b16 %v1888
      %v2039 = vunpack.c.l.b16 %v1889
      %v2040 = vunpack.c.l.b16 %v1890
      %v2041 = vunpack.c.l.b16 %v1891
      %v2042 = vunpack.c.l.b16 %v1892
      %v2043 = vunpack.c.l.b16 %v1893
      %v2044 = vunpack.c.l.b16 %v1894
      %v2045 = vunpack.c.l.b16 %v1895
      %v2046 = vunpack.c.l.b16 %v1896
      %v2047 = vunpack.c.l.b16 %v1897
      %v2048 = vpack.c.b16 %v1974, %v1973
      %v2049 = vpack.c.b16 %v1976, %v1975
      %v2050 = vpack.c.b16 %v1978, %v1977
      %v2051 = vpack.c.b16 %v1980, %v1979
      %v2052 = vpack.c.b16 %v1982, %v1981
      %v2053 = vpack.c.b16 %v1984, %v1983
      %v2054 = vpack.c.b16 %v1986, %v1985
      %v2055 = vpack.c.b16 %v1988, %v1987
      %v2056 = vpack.c.b16 %v1990, %v1989
      %v2057 = vpack.c.b16 %v1992, %v1991
      %v2058 = vpack.c.b16 %v1994, %v1993
      %v2059 = vpack.c.b16 %v1996, %v1995
      %v2060 = vpack.c.b16 %v1998, %v1997
      %v2061 = vpack.c.b16 %v2000, %v1999
      %v2062 = vpack.c.b16 %v2002, %v2001
      %v2063 = vpack.c.b16 %v2004, %v2003
      %v2064 = vpack.c.b16 %v2006, %v2005
      %v2065 = vpack.c.b16 %v2008, %v2007
      %v2066 = vpack.c.b16 %v2010, %v2009
      %v2067 = vpack.c.b16 %v2012, %v2011
      %v2068 = vpack.c.b16 %v2014, %v2013
      %v2069 = vpack.c.b16 %v2016, %v2015
      %v2070 = vpack.c.b16 %v2018, %v2017
      %v2071 = vpack.c.b16 %v2020, %v2019
      %v2072 = vpack.c.b16 %v2022, %v2021
      %v2073 = vpack.c.b16 %v2024, %v2023
      %v2074 = vpack.c.b16 %v2026, %v2025
      %v2075 = vpack.c.b16 %v2028, %v2027
      %v2076 = vpack.c.b16 %v2030, %v2029
      %v2077 = vpack.c.b16 %v2032, %v2031
      %v2078 = vpack.c.b16 %v2034, %v2033
      %v2079 = vpack.c.b16 %v2036, %v2035
      %v2080 = vpack.c.b16 %v2038, %v2037
      %v2081 = vpack.c.b16 %v2040, %v2039
      %v2082 = vpack.c.b16 %v2042, %v2041
      %v2083 = vpack.c.b16 %v2044, %v2043
      %v2084 = vpack.c.b16 %v2046, %v2045
      %v2085 = vpack.c.b16 %v2047, %v2047
      %v2124 = vsel %vm609, %v2085, 0
      %2126 = vmatprep.subr.bf16.mxu0 0
      %2127 = vmatpush1.bf16.msra.mxu0 %v2048
      %2128 = vmatprep.subr.bf16.mxu0 0
      %2129 = vmatpush1.bf16.msra.mxu0 %v2049
      %2130 = vmatprep.subr.bf16.mxu0 0
      %2131 = vmatpush1.bf16.msra.mxu0 %v2050
      %2132 = vmatprep.subr.bf16.mxu0 0
      %2133 = vmatpush1.bf16.msra.mxu0 %v2051
      %2134 = vmatprep.subr.bf16.mxu0 0
      %2135 = vmatpush1.bf16.msra.mxu0 %v2052
      %2136 = vmatprep.subr.bf16.mxu0 0
      %2137 = vmatpush1.bf16.msra.mxu0 %v2053
      %2138 = vmatprep.subr.bf16.mxu0 0
      %2139 = vmatpush1.bf16.msra.mxu0 %v2054
      %2140 = vmatprep.subr.bf16.mxu0 0
      %2141 = vmatpush1.bf16.msra.mxu0 %v2055
      %2142 = vmatprep.subr.bf16.mxu0 0
      %2143 = vmatpush1.bf16.msra.mxu0 %v2056
      %2144 = vmatprep.subr.bf16.mxu0 0
      %2145 = vmatpush1.bf16.msra.mxu0 %v2057
      %2146 = vmatprep.subr.bf16.mxu0 0
      %2147 = vmatpush1.bf16.msra.mxu0 %v2058
      %2148 = vmatprep.subr.bf16.mxu0 0
      %2149 = vmatpush1.bf16.msra.mxu0 %v2059
      %2150 = vmatprep.subr.bf16.mxu0 0
      %2151 = vmatpush1.bf16.msra.mxu0 %v2060
      %2152 = vmatprep.subr.bf16.mxu0 0
      %2153 = vmatpush1.bf16.msra.mxu0 %v2061
      %2154 = vmatprep.subr.bf16.mxu0 0
      %2155 = vmatpush1.bf16.msra.mxu0 %v2062
      %2156 = vmatprep.subr.bf16.mxu0 0
      %2157 = vmatpush1.bf16.msra.mxu0 %v2063
      %2158 = vmatprep.mubr.bf16.mxu0 %v336
      %2159 = vmatmul.mubr.bf16.gmra.mrb[0].mxu0 %v335
      %v2160 = vpop.f32.mrb[0].mxu0
      %v2161 = vadd.f32 0.0, %v2160
      %v2162 = vpop.f32.mrb[0].mxu0
      %v2163 = vpop.f32.mrb[0].mxu0
      %v2164 = vadd.f32 0.0, %v2163
      %v2165 = vpop.f32.mrb[0].mxu0
      %2166 = vmatprep.mubr.bf16.mxu0 %v341
      %2167 = vmatmul.mubr.bf16.gmra.mrb[0].mxu0 %v340
      %v2168 = vpop.f32.mrb[0].mxu0
      %v2169 = vadd.f32 0.0, %v2168
      %v2170 = vpop.f32.mrb[0].mxu0
      %v2171 = vpop.f32.mrb[0].mxu0
      %v2172 = vadd.f32 0.0, %v2171
      %v2173 = vpop.f32.mrb[0].mxu0
      %2174 = vmatprep.mubr.bf16.mxu0 %v346
      %2175 = vmatmul.mubr.bf16.gmra.mrb[0].mxu0 %v345
      %v2176 = vpop.f32.mrb[0].mxu0
      %v2177 = vadd.f32 0.0, %v2176
      %v2178 = vpop.f32.mrb[0].mxu0
      %v2179 = vpop.f32.mrb[0].mxu0
      %v2180 = vadd.f32 0.0, %v2179
      %v2181 = vpop.f32.mrb[0].mxu0
      %2182 = vmatprep.mubr.bf16.mxu0 %v351
      %2183 = vmatmul.mubr.bf16.gmra.mrb[0].mxu0 %v350
      %v2184 = vpop.f32.mrb[0].mxu0
      %v2185 = vadd.f32 0.0, %v2184
      %v2186 = vpop.f32.mrb[0].mxu0
      %v2187 = vpop.f32.mrb[0].mxu0
      %v2188 = vadd.f32 0.0, %v2187
      %v2189 = vpop.f32.mrb[0].mxu0
      %2190 = vdwg.mxu0
      %2191 = vmatprep.subr.bf16.mxu0 0
      %2192 = vmatpush1.bf16.msra.mxu0 %v2064
      %2193 = vmatprep.subr.bf16.mxu0 0
      %2194 = vmatpush1.bf16.msra.mxu0 %v2065
      %2195 = vmatprep.subr.bf16.mxu0 0
      %2196 = vmatpush1.bf16.msra.mxu0 %v2066
      %2197 = vmatprep.subr.bf16.mxu0 0
      %2198 = vmatpush1.bf16.msra.mxu0 %v2067
      %2199 = vmatprep.subr.bf16.mxu0 0
      %2200 = vmatpush1.bf16.msra.mxu0 %v2068
      %2201 = vmatprep.subr.bf16.mxu0 0
      %2202 = vmatpush1.bf16.msra.mxu0 %v2069
      %2203 = vmatprep.subr.bf16.mxu0 0
      %2204 = vmatpush1.bf16.msra.mxu0 %v2070
      %2205 = vmatprep.subr.bf16.mxu0 0
      %2206 = vmatpush1.bf16.msra.mxu0 %v2071
      %2207 = vmatprep.subr.bf16.mxu0 0
      %2208 = vmatpush1.bf16.msra.mxu0 %v2072
      %2209 = vmatprep.subr.bf16.mxu0 0
      %2210 = vmatpush1.bf16.msra.mxu0 %v2073
      %2211 = vmatprep.subr.bf16.mxu0 0
      %2212 = vmatpush1.bf16.msra.mxu0 %v2074
      %2213 = vmatprep.subr.bf16.mxu0 0
      %2214 = vmatpush1.bf16.msra.mxu0 %v2075
      %2215 = vmatprep.subr.bf16.mxu0 0
      %2216 = vmatpush1.bf16.msra.mxu0 %v2076
      %2217 = vmatprep.subr.bf16.mxu0 0
      %2218 = vmatpush1.bf16.msra.mxu0 %v2077
      %2219 = vmatprep.subr.bf16.mxu0 0
      %2220 = vmatpush1.bf16.msra.mxu0 %v2078
      %2221 = vmatprep.subr.bf16.mxu0 0
      %2222 = vmatpush1.bf16.msra.mxu0 %v2079
      %2223 = vmatprep.mubr.bf16.mxu0 %v338
      %2224 = vmatmul.mubr.bf16.gmra.mrb[0].mxu0 %v337
      %v2225 = vpop.f32.mrb[0].mxu0
      %v2226 = vadd.f32 %v2161, %v2225
      %v2227 = vpop.f32.mrb[0].mxu0
      %v2228 = vpop.f32.mrb[0].mxu0
      %v2229 = vadd.f32 %v2164, %v2228
      %v2230 = vpop.f32.mrb[0].mxu0
      %2231 = vmatprep.mubr.bf16.mxu0 %v343
      %2232 = vmatmul.mubr.bf16.gmra.mrb[0].mxu0 %v342
      %v2233 = vpop.f32.mrb[0].mxu0
      %v2234 = vadd.f32 %v2169, %v2233
      %v2235 = vpop.f32.mrb[0].mxu0
      %v2236 = vpop.f32.mrb[0].mxu0
      %v2237 = vadd.f32 %v2172, %v2236
      %v2238 = vpop.f32.mrb[0].mxu0
      %2239 = vmatprep.mubr.bf16.mxu0 %v348
      %2240 = vmatmul.mubr.bf16.gmra.mrb[0].mxu0 %v347
      %v2241 = vpop.f32.mrb[0].mxu0
      %v2242 = vadd.f32 %v2177, %v2241
      %v2243 = vpop.f32.mrb[0].mxu0
      %v2244 = vpop.f32.mrb[0].mxu0
      %v2245 = vadd.f32 %v2180, %v2244
      %v2246 = vpop.f32.mrb[0].mxu0
      %2247 = vmatprep.mubr.bf16.mxu0 %v353
      %2248 = vmatmul.mubr.bf16.gmra.mrb[0].mxu0 %v352
      %v2249 = vpop.f32.mrb[0].mxu0
      %v2250 = vadd.f32 %v2185, %v2249
      %v2251 = vpop.f32.mrb[0].mxu0
      %v2252 = vpop.f32.mrb[0].mxu0
      %v2253 = vadd.f32 %v2188, %v2252
      %v2254 = vpop.f32.mrb[0].mxu0
      %2255 = vdwg.mxu0
      %2256 = vmatprep.subr.bf16.mxu0 0
      %2257 = vmatpush1.bf16.msra.mxu0 %v2080
      %2258 = vmatprep.subr.bf16.mxu0 0
      %2259 = vmatpush1.bf16.msra.mxu0 %v2081
      %2260 = vmatprep.subr.bf16.mxu0 0
      %2261 = vmatpush1.bf16.msra.mxu0 %v2082
      %2262 = vmatprep.subr.bf16.mxu0 0
      %2263 = vmatpush1.bf16.msra.mxu0 %v2083
      %2264 = vmatprep.subr.bf16.mxu0 0
      %2265 = vmatpush1.bf16.msra.mxu0 %v2084
      %2266 = vmatprep.subr.bf16.mxu0 0
      %2267 = vmatpush1.bf16.msra.mxu0 %v2124
      %2268 = vmatprep.subr.bf16.mxu0 0
      %2269 = vmatpush1.bf16.msra.mxu0 0
      %2270 = vmatprep.subr.bf16.mxu0 0
      %2271 = vmatpush1.bf16.msra.mxu0 0
      %2272 = vmatprep.subr.bf16.mxu0 0
      %2273 = vmatpush1.bf16.msra.mxu0 0
      %2274 = vmatprep.subr.bf16.mxu0 0
      %2275 = vmatpush1.bf16.msra.mxu0 0
      %2276 = vmatprep.subr.bf16.mxu0 0
      %2277 = vmatpush1.bf16.msra.mxu0 0
      %2278 = vmatprep.subr.bf16.mxu0 0
      %2279 = vmatpush1.bf16.msra.mxu0 0
      %2280 = vmatprep.subr.bf16.mxu0 0
      %2281 = vmatpush1.bf16.msra.mxu0 0
      %2282 = vmatprep.subr.bf16.mxu0 0
      %2283 = vmatpush1.bf16.msra.mxu0 0
      %2284 = vmatprep.subr.bf16.mxu0 0
      %2285 = vmatpush1.bf16.msra.mxu0 0
      %2286 = vmatprep.subr.bf16.mxu0 0
      %2287 = vmatpush1.bf16.msra.mxu0 0
      %2288 = vmatprep.mubr.bf16.mxu0 0
      %2289 = vmatmul.mubr.bf16.gmra.mrb[0].mxu0 %v598
      %v2290 = vpop.f32.mrb[0].mxu0
      %v2291 = vadd.f32 %v2226, %v2290
      %v2292 = vpop.f32.mrb[0].mxu0
      %v2293 = vpop.f32.mrb[0].mxu0
      %v2294 = vadd.f32 %v2229, %v2293
      %v2295 = vpop.f32.mrb[0].mxu0
      %2296 = vmatprep.mubr.bf16.mxu0 0
      %2297 = vmatmul.mubr.bf16.gmra.mrb[0].mxu0 %v601
      %v2298 = vpop.f32.mrb[0].mxu0
      %v2299 = vadd.f32 %v2234, %v2298
      %v2300 = vpop.f32.mrb[0].mxu0
      %v2301 = vpop.f32.mrb[0].mxu0
      %v2302 = vadd.f32 %v2237, %v2301
      %v2303 = vpop.f32.mrb[0].mxu0
      %2304 = vmatprep.mubr.bf16.mxu0 0
      %2305 = vmatmul.mubr.bf16.gmra.mrb[0].mxu0 %v604
      %v2306 = vpop.f32.mrb[0].mxu0
      %v2307 = vadd.f32 %v2242, %v2306
      %v2308 = vpop.f32.mrb[0].mxu0
      %v2309 = vpop.f32.mrb[0].mxu0
      %v2310 = vadd.f32 %v2245, %v2309
      %v2311 = vpop.f32.mrb[0].mxu0
      %2312 = vmatprep.mubr.bf16.mxu0 0
      %2313 = vmatmul.mubr.bf16.gmra.mrb[0].mxu0 %v607
      %v2314 = vpop.f32.mrb[0].mxu0
      %v2315 = vadd.f32 %v2250, %v2314
      %v2316 = vpop.f32.mrb[0].mxu0
      %v2317 = vpop.f32.mrb[0].mxu0
      %v2318 = vadd.f32 %v2253, %v2317
      %v2319 = vpop.f32.mrb[0].mxu0
      %2320 = vdwg.mxu0
      %v2321 = vmax.f32 %v1814, %v2291
      %v2322 = vmax.f32 %v1815, %v2294
      %v2323 = vmax.f32 %v1816, %v2299
      %v2324 = vmax.f32 %v1817, %v2302
      %v2325 = vmax.f32 %v1818, %v2307
      %v2326 = vmax.f32 %v1819, %v2310
      %v2327 = vmax.f32 %v1820, %v2315
      %v2328 = vmax.f32 %v1821, %v2318
      %v2329 = vld [vmem:[%s2] sm:$0xff]
      %v2330 = vld [vmem:[%s2 + $0x8] sm:$0xff]
      %v2331 = vld [vmem:[%s2 + $0x10] sm:$0xff]
      %v2332 = vld [vmem:[%s2 + $0x18] sm:$0xff]
      %v2333 = vld [vmem:[%s2 + $0x20] sm:$0xff]
      %v2334 = vld [vmem:[%s2 + $0x28] sm:$0xff]
      %v2335 = vld [vmem:[%s2 + $0x30] sm:$0xff]
      %v2336 = vld [vmem:[%s2 + $0x38] sm:$0xff]
      %2338 = vset.pattern.permute.xlu0 0
      %2339 = vperm.xlu0 %2338, %v2329
      %v2340 = vpop.permute.xlu0 %2339
      %2343 = vset.pattern.permute.xlu0 0
      %2344 = vperm.xlu0 %2343, %v2330
      %v2345 = vpop.permute.xlu0 %2344
      %2348 = vset.pattern.permute.xlu0 0
      %2349 = vperm.xlu0 %2348, %v2331
      %v2350 = vpop.permute.xlu0 %2349
      %2353 = vset.pattern.permute.xlu0 0
      %2354 = vperm.xlu0 %2353, %v2332
      %v2355 = vpop.permute.xlu0 %2354
      %2358 = vset.pattern.permute.xlu0 0
      %2359 = vperm.xlu0 %2358, %v2333
      %v2360 = vpop.permute.xlu0 %2359
      %2363 = vset.pattern.permute.xlu0 0
      %2364 = vperm.xlu0 %2363, %v2334
      %v2365 = vpop.permute.xlu0 %2364
      %2368 = vset.pattern.permute.xlu0 0
      %2369 = vperm.xlu0 %2368, %v2335
      %v2370 = vpop.permute.xlu0 %2369
      %2373 = vset.pattern.permute.xlu0 0
      %2374 = vperm.xlu0 %2373, %v2336
      %v2375 = vpop.permute.xlu0 %2374
      %v2377 = vadd.f32 %v2321, %v2340
      %v2378 = vadd.f32 %v2322, %v2345
      %v2379 = vadd.f32 %v2323, %v2350
      %v2380 = vadd.f32 %v2324, %v2355
      %v2381 = vadd.f32 %v2325, %v2360
      %v2382 = vadd.f32 %v2326, %v2365
      %v2383 = vadd.f32 %v2327, %v2370
      %v2384 = vadd.f32 %v2328, %v2375
      %vm2385 = vcmp.gt.f32.partialorder %v2377, 0.0
      %vm2386 = vcmp.gt.f32.partialorder %v2378, 0.0
      %vm2387 = vcmp.gt.f32.partialorder %v2379, 0.0
      %vm2388 = vcmp.gt.f32.partialorder %v2380, 0.0
      %vm2389 = vcmp.gt.f32.partialorder %v2381, 0.0
      %vm2390 = vcmp.gt.f32.partialorder %v2382, 0.0
      %vm2391 = vcmp.gt.f32.partialorder %v2383, 0.0
      %vm2392 = vcmp.gt.f32.partialorder %v2384, 0.0
      %v2393 = vmul.f32 %v2377, 0.01
      %v2394 = vmul.f32 %v2378, 0.01
      %v2395 = vmul.f32 %v2379, 0.01
      %v2396 = vmul.f32 %v2380, 0.01
      %v2397 = vmul.f32 %v2381, 0.01
      %v2398 = vmul.f32 %v2382, 0.01
      %v2399 = vmul.f32 %v2383, 0.01
      %v2400 = vmul.f32 %v2384, 0.01
      %v2401 = vsel %vm2385, %v2377, %v2393
      %v2402 = vsel %vm2386, %v2378, %v2394
      %v2403 = vsel %vm2387, %v2379, %v2395
      %v2404 = vsel %vm2388, %v2380, %v2396
      %v2405 = vsel %vm2389, %v2381, %v2397
      %v2406 = vsel %vm2390, %v2382, %v2398
      %v2407 = vsel %vm2391, %v2383, %v2399
      %v2408 = vsel %vm2392, %v2384, %v2400
      %2409 = vst [vmem:[%s170] sm:$0xff] %v2401
      %2410 = vst [vmem:[%s170 + $0x8] sm:$0xff] %v2402
      %2411 = vst [vmem:[%s170 + $0x10] sm:$0xff] %v2403
      %2412 = vst [vmem:[%s170 + $0x18] sm:$0xff] %v2404
      %2413 = vst [vmem:[%s170 + $0x20] sm:$0xff] %v2405
      %2414 = vst [vmem:[%s170 + $0x28] sm:$0xff] %v2406
      %2415 = vst [vmem:[%s170 + $0x30] sm:$0xff] %v2407
      %2416 = vst [vmem:[%s170 + $0x38] sm:$0xff] %v2408
      %p2417 = scmp.lt.s32.totalorder %s14, 1
      %s2418 = scalar_select %p2417, %s14, 1
      %s2419 = smul.addr %s2418, 8
      %s2420 = smul.addr %s2419, 8
      %s2421 = scalar_lea.vmem %s3, %s2420
      // Predicated region
      $region33: #{cnn_forward.4} parent=31 // pred_check
        %p2422 = pneg %p100
      $region34: #{cnn_forward.4} parent=31 // pred_check_branch
        %2424 = sbr.rel (%p2422) target = $region36
      $region35: #{cnn_forward.4} parent=31 // pred_region
        _
      $region36: #{cnn_forward.4} parent=31 // pred_fallthru
        _
    $region32: #{cnn_forward.4} parent=5 // pred_fallthru
      _
    %p2425 = scmp.le.s32.totalorder 2, %s9
    // Predicated region
    $region37: #{cnn_forward.4} parent=5 // pred_check
      %p2426 = pneg %p2425
    $region38: #{cnn_forward.4} parent=5 // pred_check_branch
      %2428 = sbr.rel (%p2426) target = $region40
    $region39: #{cnn_forward.4} parent=5 // pred_region
      %s2429 = ssub.s32 %s9, 2
      // Predicated region
      $region41: #{cnn_forward.4} parent=39 // pred_check
        %p2430 = pneg %p106
      $region42: #{cnn_forward.4} parent=39 // pred_check_branch
        %2432 = sbr.rel (%p2430) target = $region44
      $region43: #{cnn_forward.4} parent=39 // pred_region
        %p2433 = scmp.lt.s32.totalorder %s15, 1
        %s2434 = scalar_select %p2433, %s15, 1
        %s2435 = smul.addr %s2434, 8
        %s2436 = smul.addr %s2435, 8
        %s2437 = scalar_lea.vmem %s3, %s2436
      $region44: #{cnn_forward.4} parent=39 // pred_fallthru
        _
    $region40: #{cnn_forward.4} parent=5 // pred_fallthru
      _
  $region6: #{cnn_forward.4} parent=0 // loop_footer
    %s13 = sadd.s32 1, %s9
  $region7: #{cnn_forward.4} parent=0 // loop_footer_branch
    %8 = sbr.rel target = $region3
  $region8: #{cnn_forward.4} parent=0 // loop_exit
    _

// kernel: cnn_forward.5
$region0: #{cnn_forward.5}
  #allocation0 [shape = 'u32[]', space=smem, size = 0x4, offset = 0x4, fixed_abs, tag = 'smem constant byte address 0x4 - core index']
  #allocation1 [shape = 'u32[144,128]{1,0:T(1,128)}', space=vmem, size = 0x12000, scoped, tag = 'internal scratch']
  %s0 = inlined_call_operand.vmem [shape: bf16[16,2944], index: 0, kind: input, shape index: {}]
  %s1 = inlined_call_operand.vmem [shape: bf16[2944,128], index: 1, kind: input, shape index: {}]
  %s2 = inlined_call_operand.vmem [shape: f32[1,128], index: 2, kind: input, shape index: {}]
  %s3 = inlined_call_operand.vmem [shape: bf16[128,128], index: 3, kind: input, shape index: {}]
  %s4 = inlined_call_operand.vmem [shape: f32[1,128], index: 4, kind: input, shape index: {}]
  %s5 = inlined_call_operand.vmem [shape: f32[16,128], index: 5, kind: output, shape index: {}]
  %s6 = sld [smem:[#allocation0]]
  $region30: #{cnn_forward.5} parent=0
    _
  %s8 = ssub.s32 1, %s6
  %s9 = scalar_select 0, %s8, %s6
  // Predicated region
  $region2: #{cnn_forward.5} parent=0 // pred_check
    _
  $region3: #{cnn_forward.5} parent=0 // pred_check_branch
    %11 = sbr.rel (0) target = $region5
  $region4: #{cnn_forward.5} parent=0 // pred_region
    _
  $region5: #{cnn_forward.5} parent=0 // pred_fallthru
    _
  // Predicated region
  $region6: #{cnn_forward.5} parent=0 // pred_check
    _
  $region7: #{cnn_forward.5} parent=0 // pred_check_branch
    %13 = sbr.rel (0) target = $region9
  $region8: #{cnn_forward.5} parent=0 // pred_region
    _
  $region9: #{cnn_forward.5} parent=0 // pred_fallthru
    _
  // Predicated region
  $region10: #{cnn_forward.5} parent=0 // pred_check
    _
  $region11: #{cnn_forward.5} parent=0 // pred_check_branch
    %15 = sbr.rel (0) target = $region13
  $region12: #{cnn_forward.5} parent=0 // pred_region
    _
  $region13: #{cnn_forward.5} parent=0 // pred_fallthru
    _
  // Predicated region
  $region14: #{cnn_forward.5} parent=0 // pred_check
    _
  $region15: #{cnn_forward.5} parent=0 // pred_check_branch
    %17 = sbr.rel (0) target = $region17
  $region16: #{cnn_forward.5} parent=0 // pred_region
    _
  $region17: #{cnn_forward.5} parent=0 // pred_fallthru
    _
  // Predicated region
  $region18: #{cnn_forward.5} parent=0 // pred_check
    _
  $region19: #{cnn_forward.5} parent=0 // pred_check_branch
    %19 = sbr.rel (0) target = $region21
  $region20: #{cnn_forward.5} parent=0 // pred_region
    _
  $region21: #{cnn_forward.5} parent=0 // pred_fallthru
    _
  %v21 = vld [vmem:[%s0] sm:$0xff]
  %v22 = vld [vmem:[%s0 + $0x8] sm:$0xff]
  %v23 = vld [vmem:[%s0 + $0x10] sm:$0xff]
  %v24 = vld [vmem:[%s0 + $0x18] sm:$0xff]
  %v25 = vld [vmem:[%s0 + $0x20] sm:$0xff]
  %v26 = vld [vmem:[%s0 + $0x28] sm:$0xff]
  %v27 = vld [vmem:[%s0 + $0x30] sm:$0xff]
  %v28 = vld [vmem:[%s0 + $0x38] sm:$0xff]
  %v29 = vld [vmem:[%s0 + $0x40] sm:$0xff]
  %v30 = vld [vmem:[%s0 + $0x48] sm:$0xff]
  %v31 = vld [vmem:[%s0 + $0x50] sm:$0xff]
  %v32 = vld [vmem:[%s0 + $0x58] sm:$0xf]
  %v33 = vld [vmem:[%s0 + $0x5c] sm:$0xff]
  %v34 = vld [vmem:[%s0 + $0x64] sm:$0xff]
  %v35 = vld [vmem:[%s0 + $0x6c] sm:$0xff]
  %v36 = vld [vmem:[%s0 + $0x74] sm:$0xff]
  %v37 = vld [vmem:[%s0 + $0x7c] sm:$0xff]
  %v38 = vld [vmem:[%s0 + $0x84] sm:$0xff]
  %v39 = vld [vmem:[%s0 + $0x8c] sm:$0xff]
  %v40 = vld [vmem:[%s0 + $0x94] sm:$0xff]
  %v41 = vld [vmem:[%s0 + $0x9c] sm:$0xff]
  %v42 = vld [vmem:[%s0 + $0xa4] sm:$0xff]
  %v43 = vld [vmem:[%s0 + $0xac] sm:$0xff]
  %v44 = vld [vmem:[%s0 + $0xb4] sm:$0xf]
  %v45 = vld [vmem:[%s1] sm:$0xf]
  %v46 = vld [vmem:[%s1 + $0x4] sm:$0xf]
  %v47 = vld [vmem:[%s1 + $0x8] sm:$0xf]
  %v48 = vld [vmem:[%s1 + $0xc] sm:$0xf]
  %v49 = vld [vmem:[%s1 + $0x10] sm:$0xf]
  %v50 = vld [vmem:[%s1 + $0x14] sm:$0xf]
  %v51 = vld [vmem:[%s1 + $0x18] sm:$0xf]
  %v52 = vld [vmem:[%s1 + $0x1c] sm:$0xf]
  %v53 = vld [vmem:[%s1 + $0x20] sm:$0xf]
  %v54 = vld [vmem:[%s1 + $0x24] sm:$0xf]
  %v55 = vld [vmem:[%s1 + $0x28] sm:$0xf]
  %v56 = vld [vmem:[%s1 + $0x2c] sm:$0xf]
  %v57 = vld [vmem:[%s1 + $0x30] sm:$0xf]
  %v58 = vld [vmem:[%s1 + $0x34] sm:$0xf]
  %v59 = vld [vmem:[%s1 + $0x38] sm:$0xf]
  %v60 = vld [vmem:[%s1 + $0x3c] sm:$0xf]
  %v61 = vld [vmem:[%s1 + $0x40] sm:$0xf]
  %v62 = vld [vmem:[%s1 + $0x44] sm:$0xf]
  %v63 = vld [vmem:[%s1 + $0x48] sm:$0xf]
  %v64 = vld [vmem:[%s1 + $0x4c] sm:$0xf]
  %v65 = vld [vmem:[%s1 + $0x50] sm:$0xf]
  %v66 = vld [vmem:[%s1 + $0x54] sm:$0xf]
  %v67 = vld [vmem:[%s1 + $0x58] sm:$0xf]
  %v68 = vld [vmem:[%s1 + $0x5c] sm:$0xf]
  %v69 = vld [vmem:[%s1 + $0x60] sm:$0xf]
  %v70 = vld [vmem:[%s1 + $0x64] sm:$0xf]
  %v71 = vld [vmem:[%s1 + $0x68] sm:$0xf]
  %v72 = vld [vmem:[%s1 + $0x6c] sm:$0xf]
  %v73 = vld [vmem:[%s1 + $0x70] sm:$0xf]
  %v74 = vld [vmem:[%s1 + $0x74] sm:$0xf]
  %v75 = vld [vmem:[%s1 + $0x78] sm:$0xf]
  %v76 = vld [vmem:[%s1 + $0x7c] sm:$0xf]
  %v77 = vld [vmem:[%s1 + $0x80] sm:$0xf]
  %v78 = vld [vmem:[%s1 + $0x84] sm:$0xf]
  %v79 = vld [vmem:[%s1 + $0x88] sm:$0xf]
  %v80 = vld [vmem:[%s1 + $0x8c] sm:$0xf]
  %v81 = vld [vmem:[%s1 + $0x90] sm:$0xf]
  %v82 = vld [vmem:[%s1 + $0x94] sm:$0xf]
  %v83 = vld [vmem:[%s1 + $0x98] sm:$0xf]
  %v84 = vld [vmem:[%s1 + $0x9c] sm:$0xf]
  %v85 = vld [vmem:[%s1 + $0xa0] sm:$0xf]
  %v86 = vld [vmem:[%s1 + $0xa4] sm:$0xf]
  %v87 = vld [vmem:[%s1 + $0xa8] sm:$0xf]
  %v88 = vld [vmem:[%s1 + $0xac] sm:$0xf]
  %v89 = vld [vmem:[%s1 + $0xb0] sm:$0xf]
  %v90 = vld [vmem:[%s1 + $0xb4] sm:$0xf]
  %v91 = vld [vmem:[%s1 + $0xb8] sm:$0xf]
  %v92 = vld [vmem:[%s1 + $0xbc] sm:$0xf]
  %v93 = vld [vmem:[%s1 + $0xc0] sm:$0xf]
  %v94 = vld [vmem:[%s1 + $0xc4] sm:$0xf]
  %v95 = vld [vmem:[%s1 + $0xc8] sm:$0xf]
  %v96 = vld [vmem:[%s1 + $0xcc] sm:$0xf]
  %v97 = vld [vmem:[%s1 + $0xd0] sm:$0xf]
  %v98 = vld [vmem:[%s1 + $0xd4] sm:$0xf]
  %v99 = vld [vmem:[%s1 + $0xd8] sm:$0xf]
  %v100 = vld [vmem:[%s1 + $0xdc] sm:$0xf]
  %v101 = vld [vmem:[%s1 + $0xe0] sm:$0xf]
  %v102 = vld [vmem:[%s1 + $0xe4] sm:$0xf]
  %v103 = vld [vmem:[%s1 + $0xe8] sm:$0xf]
  %v104 = vld [vmem:[%s1 + $0xec] sm:$0xf]
  %v105 = vld [vmem:[%s1 + $0xf0] sm:$0xf]
  %v106 = vld [vmem:[%s1 + $0xf4] sm:$0xf]
  %v107 = vld [vmem:[%s1 + $0xf8] sm:$0xf]
  %v108 = vld [vmem:[%s1 + $0xfc] sm:$0xf]
  %v109 = vld [vmem:[%s1 + $0x100] sm:$0xf]
  %v110 = vld [vmem:[%s1 + $0x104] sm:$0xf]
  %v111 = vld [vmem:[%s1 + $0x108] sm:$0xf]
  %v112 = vld [vmem:[%s1 + $0x10c] sm:$0xf]
  %v113 = vld [vmem:[%s1 + $0x110] sm:$0xf]
  %v114 = vld [vmem:[%s1 + $0x114] sm:$0xf]
  %v115 = vld [vmem:[%s1 + $0x118] sm:$0xf]
  %v116 = vld [vmem:[%s1 + $0x11c] sm:$0xf]
  %v117 = vld [vmem:[%s1 + $0x120] sm:$0xf]
  %v118 = vld [vmem:[%s1 + $0x124] sm:$0xf]
  %v119 = vld [vmem:[%s1 + $0x128] sm:$0xf]
  %v120 = vld [vmem:[%s1 + $0x12c] sm:$0xf]
  %v121 = vld [vmem:[%s1 + $0x130] sm:$0xf]
  %v122 = vld [vmem:[%s1 + $0x134] sm:$0xf]
  %v123 = vld [vmem:[%s1 + $0x138] sm:$0xf]
  %v124 = vld [vmem:[%s1 + $0x13c] sm:$0xf]
  %v125 = vld [vmem:[%s1 + $0x140] sm:$0xf]
  %v126 = vld [vmem:[%s1 + $0x144] sm:$0xf]
  %v127 = vld [vmem:[%s1 + $0x148] sm:$0xf]
  %v128 = vld [vmem:[%s1 + $0x14c] sm:$0xf]
  %v129 = vld [vmem:[%s1 + $0x150] sm:$0xf]
  %v130 = vld [vmem:[%s1 + $0x154] sm:$0xf]
  %v131 = vld [vmem:[%s1 + $0x158] sm:$0xf]
  %v132 = vld [vmem:[%s1 + $0x15c] sm:$0xf]
  %v133 = vld [vmem:[%s1 + $0x160] sm:$0xf]
  %v134 = vld [vmem:[%s1 + $0x164] sm:$0xf]
  %v135 = vld [vmem:[%s1 + $0x168] sm:$0xf]
  %v136 = vld [vmem:[%s1 + $0x16c] sm:$0xf]
  %v137 = vld [vmem:[%s1 + $0x170] sm:$0xf]
  %v138 = vld [vmem:[%s1 + $0x174] sm:$0xf]
  %v139 = vld [vmem:[%s1 + $0x178] sm:$0xf]
  %v140 = vld [vmem:[%s1 + $0x17c] sm:$0xf]
  %v141 = vld [vmem:[%s1 + $0x180] sm:$0xf]
  %v142 = vld [vmem:[%s1 + $0x184] sm:$0xf]
  %v143 = vld [vmem:[%s1 + $0x188] sm:$0xf]
  %v144 = vld [vmem:[%s1 + $0x18c] sm:$0xf]
  %v145 = vld [vmem:[%s1 + $0x190] sm:$0xf]
  %v146 = vld [vmem:[%s1 + $0x194] sm:$0xf]
  %v147 = vld [vmem:[%s1 + $0x198] sm:$0xf]
  %v148 = vld [vmem:[%s1 + $0x19c] sm:$0xf]
  %v149 = vld [vmem:[%s1 + $0x1a0] sm:$0xf]
  %v150 = vld [vmem:[%s1 + $0x1a4] sm:$0xf]
  %v151 = vld [vmem:[%s1 + $0x1a8] sm:$0xf]
  %v152 = vld [vmem:[%s1 + $0x1ac] sm:$0xf]
  %v153 = vld [vmem:[%s1 + $0x1b0] sm:$0xf]
  %v154 = vld [vmem:[%s1 + $0x1b4] sm:$0xf]
  %v155 = vld [vmem:[%s1 + $0x1b8] sm:$0xf]
  %v156 = vld [vmem:[%s1 + $0x1bc] sm:$0xf]
  %v157 = vld [vmem:[%s1 + $0x1c0] sm:$0xf]
  %v158 = vld [vmem:[%s1 + $0x1c4] sm:$0xf]
  %v159 = vld [vmem:[%s1 + $0x1c8] sm:$0xf]
  %v160 = vld [vmem:[%s1 + $0x1cc] sm:$0xf]
  %v161 = vld [vmem:[%s1 + $0x1d0] sm:$0xf]
  %v162 = vld [vmem:[%s1 + $0x1d4] sm:$0xf]
  %v163 = vld [vmem:[%s1 + $0x1d8] sm:$0xf]
  %v164 = vld [vmem:[%s1 + $0x1dc] sm:$0xf]
  %v165 = vld [vmem:[%s1 + $0x1e0] sm:$0xf]
  %v166 = vld [vmem:[%s1 + $0x1e4] sm:$0xf]
  %v167 = vld [vmem:[%s1 + $0x1e8] sm:$0xf]
  %v168 = vld [vmem:[%s1 + $0x1ec] sm:$0xf]
  %v169 = vld [vmem:[%s1 + $0x1f0] sm:$0xf]
  %v170 = vld [vmem:[%s1 + $0x1f4] sm:$0xf]
  %v171 = vld [vmem:[%s1 + $0x1f8] sm:$0xf]
  %v172 = vld [vmem:[%s1 + $0x1fc] sm:$0xf]
  %v173 = vld [vmem:[%s1 + $0x200] sm:$0xf]
  %v174 = vld [vmem:[%s1 + $0x204] sm:$0xf]
  %v175 = vld [vmem:[%s1 + $0x208] sm:$0xf]
  %v176 = vld [vmem:[%s1 + $0x20c] sm:$0xf]
  %v177 = vld [vmem:[%s1 + $0x210] sm:$0xf]
  %v178 = vld [vmem:[%s1 + $0x214] sm:$0xf]
  %v179 = vld [vmem:[%s1 + $0x218] sm:$0xf]
  %v180 = vld [vmem:[%s1 + $0x21c] sm:$0xf]
  %v181 = vld [vmem:[%s1 + $0x220] sm:$0xf]
  %v182 = vld [vmem:[%s1 + $0x224] sm:$0xf]
  %v183 = vld [vmem:[%s1 + $0x228] sm:$0xf]
  %v184 = vld [vmem:[%s1 + $0x22c] sm:$0xf]
  %v185 = vld [vmem:[%s1 + $0x230] sm:$0xf]
  %v186 = vld [vmem:[%s1 + $0x234] sm:$0xf]
  %v187 = vld [vmem:[%s1 + $0x238] sm:$0xf]
  %v188 = vld [vmem:[%s1 + $0x23c] sm:$0xf]
  %v189 = vld [vmem:[%s1 + $0x240] sm:$0xf]
  %v190 = vld [vmem:[%s1 + $0x244] sm:$0xf]
  %v191 = vld [vmem:[%s1 + $0x248] sm:$0xf]
  %v192 = vld [vmem:[%s1 + $0x24c] sm:$0xf]
  %v193 = vld [vmem:[%s1 + $0x250] sm:$0xf]
  %v194 = vld [vmem:[%s1 + $0x254] sm:$0xf]
  %v195 = vld [vmem:[%s1 + $0x258] sm:$0xf]
  %v196 = vld [vmem:[%s1 + $0x25c] sm:$0xf]
  %v197 = vld [vmem:[%s1 + $0x260] sm:$0xf]
  %v198 = vld [vmem:[%s1 + $0x264] sm:$0xf]
  %v199 = vld [vmem:[%s1 + $0x268] sm:$0xf]
  %v200 = vld [vmem:[%s1 + $0x26c] sm:$0xf]
  %v201 = vld [vmem:[%s1 + $0x270] sm:$0xf]
  %v202 = vld [vmem:[%s1 + $0x274] sm:$0xf]
  %v203 = vld [vmem:[%s1 + $0x278] sm:$0xf]
  %v204 = vld [vmem:[%s1 + $0x27c] sm:$0xf]
  %v205 = vld [vmem:[%s1 + $0x280] sm:$0xf]
  %v206 = vld [vmem:[%s1 + $0x284] sm:$0xf]
  %v207 = vld [vmem:[%s1 + $0x288] sm:$0xf]
  %v208 = vld [vmem:[%s1 + $0x28c] sm:$0xf]
  %v209 = vld [vmem:[%s1 + $0x290] sm:$0xf]
  %v210 = vld [vmem:[%s1 + $0x294] sm:$0xf]
  %v211 = vld [vmem:[%s1 + $0x298] sm:$0xf]
  %v212 = vld [vmem:[%s1 + $0x29c] sm:$0xf]
  %v213 = vld [vmem:[%s1 + $0x2a0] sm:$0xf]
  %v214 = vld [vmem:[%s1 + $0x2a4] sm:$0xf]
  %v215 = vld [vmem:[%s1 + $0x2a8] sm:$0xf]
  %v216 = vld [vmem:[%s1 + $0x2ac] sm:$0xf]
  %v217 = vld [vmem:[%s1 + $0x2b0] sm:$0xf]
  %v218 = vld [vmem:[%s1 + $0x2b4] sm:$0xf]
  %v219 = vld [vmem:[%s1 + $0x2b8] sm:$0xf]
  %v220 = vld [vmem:[%s1 + $0x2bc] sm:$0xf]
  %v221 = vld [vmem:[%s1 + $0x2c0] sm:$0xf]
  %v222 = vld [vmem:[%s1 + $0x2c4] sm:$0xf]
  %v223 = vld [vmem:[%s1 + $0x2c8] sm:$0xf]
  %v224 = vld [vmem:[%s1 + $0x2cc] sm:$0xf]
  %v225 = vld [vmem:[%s1 + $0x2d0] sm:$0xf]
  %v226 = vld [vmem:[%s1 + $0x2d4] sm:$0xf]
  %v227 = vld [vmem:[%s1 + $0x2d8] sm:$0xf]
  %v228 = vld [vmem:[%s1 + $0x2dc] sm:$0xf]
  %v229 = vld [vmem:[%s1 + $0x2e0] sm:$0xf]
  %v230 = vld [vmem:[%s1 + $0x2e4] sm:$0xf]
  %v231 = vld [vmem:[%s1 + $0x2e8] sm:$0xf]
  %v232 = vld [vmem:[%s1 + $0x2ec] sm:$0xf]
  %v233 = vld [vmem:[%s1 + $0x2f0] sm:$0xf]
  %v234 = vld [vmem:[%s1 + $0x2f4] sm:$0xf]
  %v235 = vld [vmem:[%s1 + $0x2f8] sm:$0xf]
  %v236 = vld [vmem:[%s1 + $0x2fc] sm:$0xf]
  %v237 = vld [vmem:[%s1 + $0x300] sm:$0xf]
  %v238 = vld [vmem:[%s1 + $0x304] sm:$0xf]
  %v239 = vld [vmem:[%s1 + $0x308] sm:$0xf]
  %v240 = vld [vmem:[%s1 + $0x30c] sm:$0xf]
  %v241 = vld [vmem:[%s1 + $0x310] sm:$0xf]
  %v242 = vld [vmem:[%s1 + $0x314] sm:$0xf]
  %v243 = vld [vmem:[%s1 + $0x318] sm:$0xf]
  %v244 = vld [vmem:[%s1 + $0x31c] sm:$0xf]
  %v245 = vld [vmem:[%s1 + $0x320] sm:$0xf]
  %v246 = vld [vmem:[%s1 + $0x324] sm:$0xf]
  %v247 = vld [vmem:[%s1 + $0x328] sm:$0xf]
  %v248 = vld [vmem:[%s1 + $0x32c] sm:$0xf]
  %v249 = vld [vmem:[%s1 + $0x330] sm:$0xf]
  %v250 = vld [vmem:[%s1 + $0x334] sm:$0xf]
  %v251 = vld [vmem:[%s1 + $0x338] sm:$0xf]
  %v252 = vld [vmem:[%s1 + $0x33c] sm:$0xf]
  %v253 = vld [vmem:[%s1 + $0x340] sm:$0xf]
  %v254 = vld [vmem:[%s1 + $0x344] sm:$0xf]
  %v255 = vld [vmem:[%s1 + $0x348] sm:$0xf]
  %v256 = vld [vmem:[%s1 + $0x34c] sm:$0xf]
  %v257 = vld [vmem:[%s1 + $0x350] sm:$0xf]
  %v258 = vld [vmem:[%s1 + $0x354] sm:$0xf]
  %v259 = vld [vmem:[%s1 + $0x358] sm:$0xf]
  %v260 = vld [vmem:[%s1 + $0x35c] sm:$0xf]
  %v261 = vld [vmem:[%s1 + $0x360] sm:$0xf]
  %v262 = vld [vmem:[%s1 + $0x364] sm:$0xf]
  %v263 = vld [vmem:[%s1 + $0x368] sm:$0xf]
  %v264 = vld [vmem:[%s1 + $0x36c] sm:$0xf]
  %v265 = vld [vmem:[%s1 + $0x370] sm:$0xf]
  %v266 = vld [vmem:[%s1 + $0x374] sm:$0xf]
  %v267 = vld [vmem:[%s1 + $0x378] sm:$0xf]
  %v268 = vld [vmem:[%s1 + $0x37c] sm:$0xf]
  %v269 = vld [vmem:[%s1 + $0x380] sm:$0xf]
  %v270 = vld [vmem:[%s1 + $0x384] sm:$0xf]
  %v271 = vld [vmem:[%s1 + $0x388] sm:$0xf]
  %v272 = vld [vmem:[%s1 + $0x38c] sm:$0xf]
  %v273 = vld [vmem:[%s1 + $0x390] sm:$0xf]
  %v274 = vld [vmem:[%s1 + $0x394] sm:$0xf]
  %v275 = vld [vmem:[%s1 + $0x398] sm:$0xf]
  %v276 = vld [vmem:[%s1 + $0x39c] sm:$0xf]
  %v277 = vld [vmem:[%s1 + $0x3a0] sm:$0xf]
  %v278 = vld [vmem:[%s1 + $0x3a4] sm:$0xf]
  %v279 = vld [vmem:[%s1 + $0x3a8] sm:$0xf]
  %v280 = vld [vmem:[%s1 + $0x3ac] sm:$0xf]
  %v281 = vld [vmem:[%s1 + $0x3b0] sm:$0xf]
  %v282 = vld [vmem:[%s1 + $0x3b4] sm:$0xf]
  %v283 = vld [vmem:[%s1 + $0x3b8] sm:$0xf]
  %v284 = vld [vmem:[%s1 + $0x3bc] sm:$0xf]
  %v285 = vld [vmem:[%s1 + $0x3c0] sm:$0xf]
  %v286 = vld [vmem:[%s1 + $0x3c4] sm:$0xf]
  %v287 = vld [vmem:[%s1 + $0x3c8] sm:$0xf]
  %v288 = vld [vmem:[%s1 + $0x3cc] sm:$0xf]
  %v289 = vld [vmem:[%s1 + $0x3d0] sm:$0xf]
  %v290 = vld [vmem:[%s1 + $0x3d4] sm:$0xf]
  %v291 = vld [vmem:[%s1 + $0x3d8] sm:$0xf]
  %v292 = vld [vmem:[%s1 + $0x3dc] sm:$0xf]
  %v293 = vld [vmem:[%s1 + $0x3e0] sm:$0xf]
  %v294 = vld [vmem:[%s1 + $0x3e4] sm:$0xf]
  %v295 = vld [vmem:[%s1 + $0x3e8] sm:$0xf]
  %v296 = vld [vmem:[%s1 + $0x3ec] sm:$0xf]
  %v297 = vld [vmem:[%s1 + $0x3f0] sm:$0xf]
  %v298 = vld [vmem:[%s1 + $0x3f4] sm:$0xf]
  %v299 = vld [vmem:[%s1 + $0x3f8] sm:$0xf]
  %v300 = vld [vmem:[%s1 + $0x3fc] sm:$0xf]
  %v301 = vld [vmem:[%s1 + $0x400] sm:$0xf]
  %v302 = vld [vmem:[%s1 + $0x404] sm:$0xf]
  %v303 = vld [vmem:[%s1 + $0x408] sm:$0xf]
  %v304 = vld [vmem:[%s1 + $0x40c] sm:$0xf]
  %v305 = vld [vmem:[%s1 + $0x410] sm:$0xf]
  %v306 = vld [vmem:[%s1 + $0x414] sm:$0xf]
  %v307 = vld [vmem:[%s1 + $0x418] sm:$0xf]
  %v308 = vld [vmem:[%s1 + $0x41c] sm:$0xf]
  %v309 = vld [vmem:[%s1 + $0x420] sm:$0xf]
  %v310 = vld [vmem:[%s1 + $0x424] sm:$0xf]
  %v311 = vld [vmem:[%s1 + $0x428] sm:$0xf]
  %v312 = vld [vmem:[%s1 + $0x42c] sm:$0xf]
  %v313 = vld [vmem:[%s1 + $0x430] sm:$0xf]
  %v314 = vld [vmem:[%s1 + $0x434] sm:$0xf]
  %v315 = vld [vmem:[%s1 + $0x438] sm:$0xf]
  %v316 = vld [vmem:[%s1 + $0x43c] sm:$0xf]
  %v317 = vld [vmem:[%s1 + $0x440] sm:$0xf]
  %v318 = vld [vmem:[%s1 + $0x444] sm:$0xf]
  %v319 = vld [vmem:[%s1 + $0x448] sm:$0xf]
  %v320 = vld [vmem:[%s1 + $0x44c] sm:$0xf]
  %v321 = vld [vmem:[%s1 + $0x450] sm:$0xf]
  %v322 = vld [vmem:[%s1 + $0x454] sm:$0xf]
  %v323 = vld [vmem:[%s1 + $0x458] sm:$0xf]
  %v324 = vld [vmem:[%s1 + $0x45c] sm:$0xf]
  %v325 = vld [vmem:[%s1 + $0x460] sm:$0xf]
  %v326 = vld [vmem:[%s1 + $0x464] sm:$0xf]
  %v327 = vld [vmem:[%s1 + $0x468] sm:$0xf]
  %v328 = vld [vmem:[%s1 + $0x46c] sm:$0xf]
  %v329 = vld [vmem:[%s1 + $0x470] sm:$0xf]
  %v330 = vld [vmem:[%s1 + $0x474] sm:$0xf]
  %v331 = vld [vmem:[%s1 + $0x478] sm:$0xf]
  %v332 = vld [vmem:[%s1 + $0x47c] sm:$0xf]
  %v333 = vld [vmem:[%s1 + $0x480] sm:$0xf]
  %v334 = vld [vmem:[%s1 + $0x484] sm:$0xf]
  %v335 = vld [vmem:[%s1 + $0x488] sm:$0xf]
  %v336 = vld [vmem:[%s1 + $0x48c] sm:$0xf]
  %v337 = vld [vmem:[%s1 + $0x490] sm:$0xf]
  %v338 = vld [vmem:[%s1 + $0x494] sm:$0xf]
  %v339 = vld [vmem:[%s1 + $0x498] sm:$0xf]
  %v340 = vld [vmem:[%s1 + $0x49c] sm:$0xf]
  %v341 = vld [vmem:[%s1 + $0x4a0] sm:$0xf]
  %v342 = vld [vmem:[%s1 + $0x4a4] sm:$0xf]
  %v343 = vld [vmem:[%s1 + $0x4a8] sm:$0xf]
  %v344 = vld [vmem:[%s1 + $0x4ac] sm:$0xf]
  %v345 = vld [vmem:[%s1 + $0x4b0] sm:$0xf]
  %v346 = vld [vmem:[%s1 + $0x4b4] sm:$0xf]
  %v347 = vld [vmem:[%s1 + $0x4b8] sm:$0xf]
  %v348 = vld [vmem:[%s1 + $0x4bc] sm:$0xf]
  %v349 = vld [vmem:[%s1 + $0x4c0] sm:$0xf]
  %v350 = vld [vmem:[%s1 + $0x4c4] sm:$0xf]
  %v351 = vld [vmem:[%s1 + $0x4c8] sm:$0xf]
  %v352 = vld [vmem:[%s1 + $0x4cc] sm:$0xf]
  %v353 = vld [vmem:[%s1 + $0x4d0] sm:$0xf]
  %v354 = vld [vmem:[%s1 + $0x4d4] sm:$0xf]
  %v355 = vld [vmem:[%s1 + $0x4d8] sm:$0xf]
  %v356 = vld [vmem:[%s1 + $0x4dc] sm:$0xf]
  %v357 = vld [vmem:[%s1 + $0x4e0] sm:$0xf]
  %v358 = vld [vmem:[%s1 + $0x4e4] sm:$0xf]
  %v359 = vld [vmem:[%s1 + $0x4e8] sm:$0xf]
  %v360 = vld [vmem:[%s1 + $0x4ec] sm:$0xf]
  %v361 = vld [vmem:[%s1 + $0x4f0] sm:$0xf]
  %v362 = vld [vmem:[%s1 + $0x4f4] sm:$0xf]
  %v363 = vld [vmem:[%s1 + $0x4f8] sm:$0xf]
  %v364 = vld [vmem:[%s1 + $0x4fc] sm:$0xf]
  %v365 = vld [vmem:[%s1 + $0x500] sm:$0xf]
  %v366 = vld [vmem:[%s1 + $0x504] sm:$0xf]
  %v367 = vld [vmem:[%s1 + $0x508] sm:$0xf]
  %v368 = vld [vmem:[%s1 + $0x50c] sm:$0xf]
  %v369 = vld [vmem:[%s1 + $0x510] sm:$0xf]
  %v370 = vld [vmem:[%s1 + $0x514] sm:$0xf]
  %v371 = vld [vmem:[%s1 + $0x518] sm:$0xf]
  %v372 = vld [vmem:[%s1 + $0x51c] sm:$0xf]
  %v373 = vld [vmem:[%s1 + $0x520] sm:$0xf]
  %v374 = vld [vmem:[%s1 + $0x524] sm:$0xf]
  %v375 = vld [vmem:[%s1 + $0x528] sm:$0xf]
  %v376 = vld [vmem:[%s1 + $0x52c] sm:$0xf]
  %v377 = vld [vmem:[%s1 + $0x530] sm:$0xf]
  %v378 = vld [vmem:[%s1 + $0x534] sm:$0xf]
  %v379 = vld [vmem:[%s1 + $0x538] sm:$0xf]
  %v380 = vld [vmem:[%s1 + $0x53c] sm:$0xf]
  %v381 = vld [vmem:[%s1 + $0x540] sm:$0xf]
  %v382 = vld [vmem:[%s1 + $0x544] sm:$0xf]
  %v383 = vld [vmem:[%s1 + $0x548] sm:$0xf]
  %v384 = vld [vmem:[%s1 + $0x54c] sm:$0xf]
  %v385 = vld [vmem:[%s1 + $0x550] sm:$0xf]
  %v386 = vld [vmem:[%s1 + $0x554] sm:$0xf]
  %v387 = vld [vmem:[%s1 + $0x558] sm:$0xf]
  %v388 = vld [vmem:[%s1 + $0x55c] sm:$0xf]
  %v389 = vld [vmem:[%s1 + $0x560] sm:$0xf]
  %v390 = vld [vmem:[%s1 + $0x564] sm:$0xf]
  %v391 = vld [vmem:[%s1 + $0x568] sm:$0xf]
  %v392 = vld [vmem:[%s1 + $0x56c] sm:$0xf]
  %v393 = vld [vmem:[%s1 + $0x570] sm:$0xf]
  %v394 = vld [vmem:[%s1 + $0x574] sm:$0xf]
  %v395 = vld [vmem:[%s1 + $0x578] sm:$0xf]
  %v396 = vld [vmem:[%s1 + $0x57c] sm:$0xf]
  %v397 = vld [vmem:[%s1 + $0x580] sm:$0xf]
  %v398 = vld [vmem:[%s1 + $0x584] sm:$0xf]
  %v399 = vld [vmem:[%s1 + $0x588] sm:$0xf]
  %v400 = vld [vmem:[%s1 + $0x58c] sm:$0xf]
  %v401 = vld [vmem:[%s1 + $0x590] sm:$0xf]
  %v402 = vld [vmem:[%s1 + $0x594] sm:$0xf]
  %v403 = vld [vmem:[%s1 + $0x598] sm:$0xf]
  %v404 = vld [vmem:[%s1 + $0x59c] sm:$0xf]
  %v405 = vld [vmem:[%s1 + $0x5a0] sm:$0xf]
  %v406 = vld [vmem:[%s1 + $0x5a4] sm:$0xf]
  %v407 = vld [vmem:[%s1 + $0x5a8] sm:$0xf]
  %v408 = vld [vmem:[%s1 + $0x5ac] sm:$0xf]
  %v409 = vld [vmem:[%s1 + $0x5b0] sm:$0xf]
  %v410 = vld [vmem:[%s1 + $0x5b4] sm:$0xf]
  %v411 = vld [vmem:[%s1 + $0x5b8] sm:$0xf]
  %v412 = vld [vmem:[%s1 + $0x5bc] sm:$0xf]
  %v413 = vld [vmem:[%s2] sm:$0x1]
  %v415 = vlaneseq
  %v416 = vshrl.u32 %v415, 7
  %v417 = vsub.s32 0, %v416
  %v418 = vrot.slane %v413, %v417
  %v444 = vunpack.c.l.b16 %v21
  %v445 = vunpack.c.h.b16 %v21
  %v446 = vunpack.c.l.b16 %v22
  %v447 = vunpack.c.h.b16 %v22
  %v448 = vunpack.c.l.b16 %v23
  %v449 = vunpack.c.h.b16 %v23
  %v450 = vunpack.c.l.b16 %v24
  %v451 = vunpack.c.h.b16 %v24
  %v452 = vunpack.c.l.b16 %v25
  %v453 = vunpack.c.h.b16 %v25
  %v454 = vunpack.c.l.b16 %v26
  %v455 = vunpack.c.h.b16 %v26
  %v456 = vunpack.c.l.b16 %v27
  %v457 = vunpack.c.h.b16 %v27
  %v458 = vunpack.c.l.b16 %v28
  %v459 = vunpack.c.h.b16 %v28
  %v460 = vunpack.c.l.b16 %v29
  %v461 = vunpack.c.h.b16 %v29
  %v462 = vunpack.c.l.b16 %v30
  %v463 = vunpack.c.h.b16 %v30
  %v464 = vunpack.c.l.b16 %v31
  %v465 = vunpack.c.h.b16 %v31
  %v466 = vunpack.c.l.b16 %v32
  %v467 = vunpack.c.l.b16 %v33
  %v468 = vunpack.c.h.b16 %v33
  %v469 = vunpack.c.l.b16 %v34
  %v470 = vunpack.c.h.b16 %v34
  %v471 = vunpack.c.l.b16 %v35
  %v472 = vunpack.c.h.b16 %v35
  %v473 = vunpack.c.l.b16 %v36
  %v474 = vunpack.c.h.b16 %v36
  %v475 = vunpack.c.l.b16 %v37
  %v476 = vunpack.c.h.b16 %v37
  %v477 = vunpack.c.l.b16 %v38
  %v478 = vunpack.c.h.b16 %v38
  %v479 = vunpack.c.l.b16 %v39
  %v480 = vunpack.c.h.b16 %v39
  %v481 = vunpack.c.l.b16 %v40
  %v482 = vunpack.c.h.b16 %v40
  %v483 = vunpack.c.l.b16 %v41
  %v484 = vunpack.c.h.b16 %v41
  %v485 = vunpack.c.l.b16 %v42
  %v486 = vunpack.c.h.b16 %v42
  %v487 = vunpack.c.l.b16 %v43
  %v488 = vunpack.c.h.b16 %v43
  %v489 = vunpack.c.l.b16 %v44
  %v490 = vpack.c.b16 %v467, %v444
  %v491 = vpack.c.b16 %v468, %v445
  %v492 = vpack.c.b16 %v469, %v446
  %v493 = vpack.c.b16 %v470, %v447
  %v494 = vpack.c.b16 %v471, %v448
  %v495 = vpack.c.b16 %v472, %v449
  %v496 = vpack.c.b16 %v473, %v450
  %v497 = vpack.c.b16 %v474, %v451
  %v498 = vpack.c.b16 %v475, %v452
  %v499 = vpack.c.b16 %v476, %v453
  %v500 = vpack.c.b16 %v477, %v454
  %v501 = vpack.c.b16 %v478, %v455
  %v502 = vpack.c.b16 %v479, %v456
  %v503 = vpack.c.b16 %v480, %v457
  %v504 = vpack.c.b16 %v481, %v458
  %v505 = vpack.c.b16 %v482, %v459
  %v506 = vpack.c.b16 %v483, %v460
  %v507 = vpack.c.b16 %v484, %v461
  %v508 = vpack.c.b16 %v485, %v462
  %v509 = vpack.c.b16 %v486, %v463
  %v510 = vpack.c.b16 %v487, %v464
  %v511 = vpack.c.b16 %v488, %v465
  %v512 = vpack.c.b16 %v489, %v466
  %v904 = vunpack.c.l.b16 %v45
  %v905 = vunpack.c.l.b16 %v46
  %v906 = vunpack.c.l.b16 %v47
  %v907 = vunpack.c.l.b16 %v48
  %v908 = vunpack.c.l.b16 %v49
  %v909 = vunpack.c.l.b16 %v50
  %v910 = vunpack.c.l.b16 %v51
  %v911 = vunpack.c.l.b16 %v52
  %v912 = vunpack.c.l.b16 %v53
  %v913 = vunpack.c.l.b16 %v54
  %v914 = vunpack.c.l.b16 %v55
  %v915 = vunpack.c.l.b16 %v56
  %v916 = vunpack.c.l.b16 %v57
  %v917 = vunpack.c.l.b16 %v58
  %v918 = vunpack.c.l.b16 %v59
  %v919 = vunpack.c.l.b16 %v60
  %v920 = vunpack.c.l.b16 %v61
  %v921 = vunpack.c.l.b16 %v62
  %v922 = vunpack.c.l.b16 %v63
  %v923 = vunpack.c.l.b16 %v64
  %v924 = vunpack.c.l.b16 %v65
  %v925 = vunpack.c.l.b16 %v66
  %v926 = vunpack.c.l.b16 %v67
  %v927 = vunpack.c.l.b16 %v68
  %v928 = vunpack.c.l.b16 %v69
  %v929 = vunpack.c.l.b16 %v70
  %v930 = vunpack.c.l.b16 %v71
  %v931 = vunpack.c.l.b16 %v72
  %v932 = vunpack.c.l.b16 %v73
  %v933 = vunpack.c.l.b16 %v74
  %v934 = vunpack.c.l.b16 %v75
  %v935 = vunpack.c.l.b16 %v76
  %v936 = vunpack.c.l.b16 %v77
  %v937 = vunpack.c.l.b16 %v78
  %v938 = vunpack.c.l.b16 %v79
  %v939 = vunpack.c.l.b16 %v80
  %v940 = vunpack.c.l.b16 %v81
  %v941 = vunpack.c.l.b16 %v82
  %v942 = vunpack.c.l.b16 %v83
  %v943 = vunpack.c.l.b16 %v84
  %v944 = vunpack.c.l.b16 %v85
  %v945 = vunpack.c.l.b16 %v86
  %v946 = vunpack.c.l.b16 %v87
  %v947 = vunpack.c.l.b16 %v88
  %v948 = vunpack.c.l.b16 %v89
  %v949 = vunpack.c.l.b16 %v90
  %v950 = vunpack.c.l.b16 %v91
  %v951 = vunpack.c.l.b16 %v92
  %v952 = vunpack.c.l.b16 %v93
  %v953 = vunpack.c.l.b16 %v94
  %v954 = vunpack.c.l.b16 %v95
  %v955 = vunpack.c.l.b16 %v96
  %v956 = vunpack.c.l.b16 %v97
  %v957 = vunpack.c.l.b16 %v98
  %v958 = vunpack.c.l.b16 %v99
  %v959 = vunpack.c.l.b16 %v100
  %v960 = vunpack.c.l.b16 %v101
  %v961 = vunpack.c.l.b16 %v102
  %v962 = vunpack.c.l.b16 %v103
  %v963 = vunpack.c.l.b16 %v104
  %v964 = vunpack.c.l.b16 %v105
  %v965 = vunpack.c.l.b16 %v106
  %v966 = vunpack.c.l.b16 %v107
  %v967 = vunpack.c.l.b16 %v108
  %v968 = vunpack.c.l.b16 %v109
  %v969 = vunpack.c.l.b16 %v110
  %v970 = vunpack.c.l.b16 %v111
  %v971 = vunpack.c.l.b16 %v112
  %v972 = vunpack.c.l.b16 %v113
  %v973 = vunpack.c.l.b16 %v114
  %v974 = vunpack.c.l.b16 %v115
  %v975 = vunpack.c.l.b16 %v116
  %v976 = vunpack.c.l.b16 %v117
  %v977 = vunpack.c.l.b16 %v118
  %v978 = vunpack.c.l.b16 %v119
  %v979 = vunpack.c.l.b16 %v120
  %v980 = vunpack.c.l.b16 %v121
  %v981 = vunpack.c.l.b16 %v122
  %v982 = vunpack.c.l.b16 %v123
  %v983 = vunpack.c.l.b16 %v124
  %v984 = vunpack.c.l.b16 %v125
  %v985 = vunpack.c.l.b16 %v126
  %v986 = vunpack.c.l.b16 %v127
  %v987 = vunpack.c.l.b16 %v128
  %v988 = vunpack.c.l.b16 %v129
  %v989 = vunpack.c.l.b16 %v130
  %v990 = vunpack.c.l.b16 %v131
  %v991 = vunpack.c.l.b16 %v132
  %v992 = vunpack.c.l.b16 %v133
  %v993 = vunpack.c.l.b16 %v134
  %v994 = vunpack.c.l.b16 %v135
  %v995 = vunpack.c.l.b16 %v136
  %v996 = vunpack.c.l.b16 %v137
  %v997 = vunpack.c.l.b16 %v138
  %v998 = vunpack.c.l.b16 %v139
  %v999 = vunpack.c.l.b16 %v140
  %v1000 = vunpack.c.l.b16 %v141
  %v1001 = vunpack.c.l.b16 %v142
  %v1002 = vunpack.c.l.b16 %v143
  %v1003 = vunpack.c.l.b16 %v144
  %v1004 = vunpack.c.l.b16 %v145
  %v1005 = vunpack.c.l.b16 %v146
  %v1006 = vunpack.c.l.b16 %v147
  %v1007 = vunpack.c.l.b16 %v148
  %v1008 = vunpack.c.l.b16 %v149
  %v1009 = vunpack.c.l.b16 %v150
  %v1010 = vunpack.c.l.b16 %v151
  %v1011 = vunpack.c.l.b16 %v152
  %v1012 = vunpack.c.l.b16 %v153
  %v1013 = vunpack.c.l.b16 %v154
  %v1014 = vunpack.c.l.b16 %v155
  %v1015 = vunpack.c.l.b16 %v156
  %v1016 = vunpack.c.l.b16 %v157
  %v1017 = vunpack.c.l.b16 %v158
  %v1018 = vunpack.c.l.b16 %v159
  %v1019 = vunpack.c.l.b16 %v160
  %v1020 = vunpack.c.l.b16 %v161
  %v1021 = vunpack.c.l.b16 %v162
  %v1022 = vunpack.c.l.b16 %v163
  %v1023 = vunpack.c.l.b16 %v164
  %v1024 = vunpack.c.l.b16 %v165
  %v1025 = vunpack.c.l.b16 %v166
  %v1026 = vunpack.c.l.b16 %v167
  %v1027 = vunpack.c.l.b16 %v168
  %v1028 = vunpack.c.l.b16 %v169
  %v1029 = vunpack.c.l.b16 %v170
  %v1030 = vunpack.c.l.b16 %v171
  %v1031 = vunpack.c.l.b16 %v172
  %v1032 = vunpack.c.l.b16 %v173
  %v1033 = vunpack.c.l.b16 %v174
  %v1034 = vunpack.c.l.b16 %v175
  %v1035 = vunpack.c.l.b16 %v176
  %v1036 = vunpack.c.l.b16 %v177
  %v1037 = vunpack.c.l.b16 %v178
  %v1038 = vunpack.c.l.b16 %v179
  %v1039 = vunpack.c.l.b16 %v180
  %v1040 = vunpack.c.l.b16 %v181
  %v1041 = vunpack.c.l.b16 %v182
  %v1042 = vunpack.c.l.b16 %v183
  %v1043 = vunpack.c.l.b16 %v184
  %v1044 = vunpack.c.l.b16 %v185
  %v1045 = vunpack.c.l.b16 %v186
  %v1046 = vunpack.c.l.b16 %v187
  %v1047 = vunpack.c.l.b16 %v188
  %v1048 = vunpack.c.l.b16 %v189
  %v1049 = vunpack.c.l.b16 %v190
  %v1050 = vunpack.c.l.b16 %v191
  %v1051 = vunpack.c.l.b16 %v192
  %v1052 = vunpack.c.l.b16 %v193
  %v1053 = vunpack.c.l.b16 %v194
  %v1054 = vunpack.c.l.b16 %v195
  %v1055 = vunpack.c.l.b16 %v196
  %v1056 = vunpack.c.l.b16 %v197
  %v1057 = vunpack.c.l.b16 %v198
  %v1058 = vunpack.c.l.b16 %v199
  %v1059 = vunpack.c.l.b16 %v200
  %v1060 = vunpack.c.l.b16 %v201
  %v1061 = vunpack.c.l.b16 %v202
  %v1062 = vunpack.c.l.b16 %v203
  %v1063 = vunpack.c.l.b16 %v204
  %v1064 = vunpack.c.l.b16 %v205
  %v1065 = vunpack.c.l.b16 %v206
  %v1066 = vunpack.c.l.b16 %v207
  %v1067 = vunpack.c.l.b16 %v208
  %v1068 = vunpack.c.l.b16 %v209
  %v1069 = vunpack.c.l.b16 %v210
  %v1070 = vunpack.c.l.b16 %v211
  %v1071 = vunpack.c.l.b16 %v212
  %v1072 = vunpack.c.l.b16 %v213
  %v1073 = vunpack.c.l.b16 %v214
  %v1074 = vunpack.c.l.b16 %v215
  %v1075 = vunpack.c.l.b16 %v216
  %v1076 = vunpack.c.l.b16 %v217
  %v1077 = vunpack.c.l.b16 %v218
  %v1078 = vunpack.c.l.b16 %v219
  %v1079 = vunpack.c.l.b16 %v220
  %v1080 = vunpack.c.l.b16 %v221
  %v1081 = vunpack.c.l.b16 %v222
  %v1082 = vunpack.c.l.b16 %v223
  %v1083 = vunpack.c.l.b16 %v224
  %v1084 = vunpack.c.l.b16 %v225
  %v1085 = vunpack.c.l.b16 %v226
  %v1086 = vunpack.c.l.b16 %v227
  %v1087 = vunpack.c.l.b16 %v228
  %v1088 = vunpack.c.l.b16 %v229
  %v1089 = vunpack.c.l.b16 %v230
  %v1090 = vunpack.c.l.b16 %v231
  %v1091 = vunpack.c.l.b16 %v232
  %v1092 = vunpack.c.l.b16 %v233
  %v1093 = vunpack.c.l.b16 %v234
  %v1094 = vunpack.c.l.b16 %v235
  %v1095 = vunpack.c.l.b16 %v236
  %v1096 = vunpack.c.l.b16 %v237
  %v1097 = vunpack.c.l.b16 %v238
  %v1098 = vunpack.c.l.b16 %v239
  %v1099 = vunpack.c.l.b16 %v240
  %v1100 = vunpack.c.l.b16 %v241
  %v1101 = vunpack.c.l.b16 %v242
  %v1102 = vunpack.c.l.b16 %v243
  %v1103 = vunpack.c.l.b16 %v244
  %v1104 = vunpack.c.l.b16 %v245
  %v1105 = vunpack.c.l.b16 %v246
  %v1106 = vunpack.c.l.b16 %v247
  %v1107 = vunpack.c.l.b16 %v248
  %v1108 = vunpack.c.l.b16 %v249
  %v1109 = vunpack.c.l.b16 %v250
  %v1110 = vunpack.c.l.b16 %v251
  %v1111 = vunpack.c.l.b16 %v252
  %v1112 = vunpack.c.l.b16 %v253
  %v1113 = vunpack.c.l.b16 %v254
  %v1114 = vunpack.c.l.b16 %v255
  %v1115 = vunpack.c.l.b16 %v256
  %v1116 = vunpack.c.l.b16 %v257
  %v1117 = vunpack.c.l.b16 %v258
  %v1118 = vunpack.c.l.b16 %v259
  %v1119 = vunpack.c.l.b16 %v260
  %v1120 = vunpack.c.l.b16 %v261
  %v1121 = vunpack.c.l.b16 %v262
  %v1122 = vunpack.c.l.b16 %v263
  %v1123 = vunpack.c.l.b16 %v264
  %v1124 = vunpack.c.l.b16 %v265
  %v1125 = vunpack.c.l.b16 %v266
  %v1126 = vunpack.c.l.b16 %v267
  %v1127 = vunpack.c.l.b16 %v268
  %v1128 = vunpack.c.l.b16 %v269
  %v1129 = vunpack.c.l.b16 %v270
  %v1130 = vunpack.c.l.b16 %v271
  %v1131 = vunpack.c.l.b16 %v272
  %v1132 = vunpack.c.l.b16 %v273
  %v1133 = vunpack.c.l.b16 %v274
  %v1134 = vunpack.c.l.b16 %v275
  %v1135 = vunpack.c.l.b16 %v276
  %v1136 = vunpack.c.l.b16 %v277
  %v1137 = vunpack.c.l.b16 %v278
  %v1138 = vunpack.c.l.b16 %v279
  %v1139 = vunpack.c.l.b16 %v280
  %v1140 = vunpack.c.l.b16 %v281
  %v1141 = vunpack.c.l.b16 %v282
  %v1142 = vunpack.c.l.b16 %v283
  %v1143 = vunpack.c.l.b16 %v284
  %v1144 = vunpack.c.l.b16 %v285
  %v1145 = vunpack.c.l.b16 %v286
  %v1146 = vunpack.c.l.b16 %v287
  %v1147 = vunpack.c.l.b16 %v288
  %v1148 = vunpack.c.l.b16 %v289
  %v1149 = vunpack.c.l.b16 %v290
  %v1150 = vunpack.c.l.b16 %v291
  %v1151 = vunpack.c.l.b16 %v292
  %v1152 = vunpack.c.l.b16 %v293
  %v1153 = vunpack.c.l.b16 %v294
  %v1154 = vunpack.c.l.b16 %v295
  %v1155 = vunpack.c.l.b16 %v296
  %v1156 = vunpack.c.l.b16 %v297
  %v1157 = vunpack.c.l.b16 %v298
  %v1158 = vunpack.c.l.b16 %v299
  %v1159 = vunpack.c.l.b16 %v300
  %v1160 = vunpack.c.l.b16 %v301
  %v1161 = vunpack.c.l.b16 %v302
  %v1162 = vunpack.c.l.b16 %v303
  %v1163 = vunpack.c.l.b16 %v304
  %v1164 = vunpack.c.l.b16 %v305
  %v1165 = vunpack.c.l.b16 %v306
  %v1166 = vunpack.c.l.b16 %v307
  %v1167 = vunpack.c.l.b16 %v308
  %v1168 = vunpack.c.l.b16 %v309
  %v1169 = vunpack.c.l.b16 %v310
  %v1170 = vunpack.c.l.b16 %v311
  %v1171 = vunpack.c.l.b16 %v312
  %v1172 = vunpack.c.l.b16 %v313
  %v1173 = vunpack.c.l.b16 %v314
  %v1174 = vunpack.c.l.b16 %v315
  %v1175 = vunpack.c.l.b16 %v316
  %v1176 = vunpack.c.l.b16 %v317
  %v1177 = vunpack.c.l.b16 %v318
  %v1178 = vunpack.c.l.b16 %v319
  %v1179 = vunpack.c.l.b16 %v320
  %v1180 = vunpack.c.l.b16 %v321
  %v1181 = vunpack.c.l.b16 %v322
  %v1182 = vunpack.c.l.b16 %v323
  %v1183 = vunpack.c.l.b16 %v324
  %v1184 = vunpack.c.l.b16 %v325
  %v1185 = vunpack.c.l.b16 %v326
  %v1186 = vunpack.c.l.b16 %v327
  %v1187 = vunpack.c.l.b16 %v328
  %v1188 = vunpack.c.l.b16 %v329
  %v1189 = vunpack.c.l.b16 %v330
  %v1190 = vunpack.c.l.b16 %v331
  %v1191 = vunpack.c.l.b16 %v332
  %v1192 = vunpack.c.l.b16 %v333
  %v1193 = vunpack.c.l.b16 %v334
  %v1194 = vunpack.c.l.b16 %v335
  %v1195 = vunpack.c.l.b16 %v336
  %v1196 = vunpack.c.l.b16 %v337
  %v1197 = vunpack.c.l.b16 %v338
  %v1198 = vunpack.c.l.b16 %v339
  %v1199 = vunpack.c.l.b16 %v340
  %v1200 = vunpack.c.l.b16 %v341
  %v1201 = vunpack.c.l.b16 %v342
  %v1202 = vunpack.c.l.b16 %v343
  %v1203 = vunpack.c.l.b16 %v344
  %v1204 = vunpack.c.l.b16 %v345
  %v1205 = vunpack.c.l.b16 %v346
  %v1206 = vunpack.c.l.b16 %v347
  %v1207 = vunpack.c.l.b16 %v348
  %v1208 = vunpack.c.l.b16 %v349
  %v1209 = vunpack.c.l.b16 %v350
  %v1210 = vunpack.c.l.b16 %v351
  %v1211 = vunpack.c.l.b16 %v352
  %v1212 = vunpack.c.l.b16 %v353
  %v1213 = vunpack.c.l.b16 %v354
  %v1214 = vunpack.c.l.b16 %v355
  %v1215 = vunpack.c.l.b16 %v356
  %v1216 = vunpack.c.l.b16 %v357
  %v1217 = vunpack.c.l.b16 %v358
  %v1218 = vunpack.c.l.b16 %v359
  %v1219 = vunpack.c.l.b16 %v360
  %v1220 = vunpack.c.l.b16 %v361
  %v1221 = vunpack.c.l.b16 %v362
  %v1222 = vunpack.c.l.b16 %v363
  %v1223 = vunpack.c.l.b16 %v364
  %v1224 = vunpack.c.l.b16 %v365
  %v1225 = vunpack.c.l.b16 %v366
  %v1226 = vunpack.c.l.b16 %v367
  %v1227 = vunpack.c.l.b16 %v368
  %v1228 = vunpack.c.l.b16 %v369
  %v1229 = vunpack.c.l.b16 %v370
  %v1230 = vunpack.c.l.b16 %v371
  %v1231 = vunpack.c.l.b16 %v372
  %v1232 = vunpack.c.l.b16 %v373
  %v1233 = vunpack.c.l.b16 %v374
  %v1234 = vunpack.c.l.b16 %v375
  %v1235 = vunpack.c.l.b16 %v376
  %v1236 = vunpack.c.l.b16 %v377
  %v1237 = vunpack.c.l.b16 %v378
  %v1238 = vunpack.c.l.b16 %v379
  %v1239 = vunpack.c.l.b16 %v380
  %v1240 = vunpack.c.l.b16 %v381
  %v1241 = vunpack.c.l.b16 %v382
  %v1242 = vunpack.c.l.b16 %v383
  %v1243 = vunpack.c.l.b16 %v384
  %v1244 = vunpack.c.l.b16 %v385
  %v1245 = vunpack.c.l.b16 %v386
  %v1246 = vunpack.c.l.b16 %v387
  %v1247 = vunpack.c.l.b16 %v388
  %v1248 = vunpack.c.l.b16 %v389
  %v1249 = vunpack.c.l.b16 %v390
  %v1250 = vunpack.c.l.b16 %v391
  %v1251 = vunpack.c.l.b16 %v392
  %v1252 = vunpack.c.l.b16 %v393
  %v1253 = vunpack.c.l.b16 %v394
  %v1254 = vunpack.c.l.b16 %v395
  %v1255 = vunpack.c.l.b16 %v396
  %v1256 = vunpack.c.l.b16 %v397
  %v1257 = vunpack.c.l.b16 %v398
  %v1258 = vunpack.c.l.b16 %v399
  %v1259 = vunpack.c.l.b16 %v400
  %v1260 = vunpack.c.l.b16 %v401
  %v1261 = vunpack.c.l.b16 %v402
  %v1262 = vunpack.c.l.b16 %v403
  %v1263 = vunpack.c.l.b16 %v404
  %v1264 = vunpack.c.l.b16 %v405
  %v1265 = vunpack.c.l.b16 %v406
  %v1266 = vunpack.c.l.b16 %v407
  %v1267 = vunpack.c.l.b16 %v408
  %v1268 = vunpack.c.l.b16 %v409
  %v1269 = vunpack.c.l.b16 %v410
  %v1270 = vunpack.c.l.b16 %v411
  %v1271 = vunpack.c.l.b16 %v412
  %v1272 = vpack.c.b16 %v905, %v904
  %v1273 = vpack.c.b16 %v907, %v906
  %v1274 = vpack.c.b16 %v909, %v908
  %v1275 = vpack.c.b16 %v911, %v910
  %v1276 = vpack.c.b16 %v913, %v912
  %v1277 = vpack.c.b16 %v915, %v914
  %v1278 = vpack.c.b16 %v917, %v916
  %v1279 = vpack.c.b16 %v919, %v918
  %v1280 = vpack.c.b16 %v921, %v920
  %v1281 = vpack.c.b16 %v923, %v922
  %v1282 = vpack.c.b16 %v925, %v924
  %v1283 = vpack.c.b16 %v927, %v926
  %v1284 = vpack.c.b16 %v929, %v928
  %v1285 = vpack.c.b16 %v931, %v930
  %v1286 = vpack.c.b16 %v933, %v932
  %v1287 = vpack.c.b16 %v935, %v934
  %v1288 = vpack.c.b16 %v937, %v936
  %v1289 = vpack.c.b16 %v939, %v938
  %v1290 = vpack.c.b16 %v941, %v940
  %v1291 = vpack.c.b16 %v943, %v942
  %v1292 = vpack.c.b16 %v945, %v944
  %v1293 = vpack.c.b16 %v947, %v946
  %v1294 = vpack.c.b16 %v949, %v948
  %v1295 = vpack.c.b16 %v951, %v950
  %v1296 = vpack.c.b16 %v953, %v952
  %v1297 = vpack.c.b16 %v955, %v954
  %v1298 = vpack.c.b16 %v957, %v956
  %v1299 = vpack.c.b16 %v959, %v958
  %v1300 = vpack.c.b16 %v961, %v960
  %v1301 = vpack.c.b16 %v963, %v962
  %v1302 = vpack.c.b16 %v965, %v964
  %v1303 = vpack.c.b16 %v967, %v966
  %v1304 = vpack.c.b16 %v969, %v968
  %v1305 = vpack.c.b16 %v971, %v970
  %v1306 = vpack.c.b16 %v973, %v972
  %v1307 = vpack.c.b16 %v975, %v974
  %v1308 = vpack.c.b16 %v977, %v976
  %v1309 = vpack.c.b16 %v979, %v978
  %v1310 = vpack.c.b16 %v981, %v980
  %v1311 = vpack.c.b16 %v983, %v982
  %v1312 = vpack.c.b16 %v985, %v984
  %v1313 = vpack.c.b16 %v987, %v986
  %v1314 = vpack.c.b16 %v989, %v988
  %v1315 = vpack.c.b16 %v991, %v990
  %v1316 = vpack.c.b16 %v993, %v992
  %v1317 = vpack.c.b16 %v995, %v994
  %v1318 = vpack.c.b16 %v997, %v996
  %v1319 = vpack.c.b16 %v999, %v998
  %v1320 = vpack.c.b16 %v1001, %v1000
  %v1321 = vpack.c.b16 %v1003, %v1002
  %v1322 = vpack.c.b16 %v1005, %v1004
  %v1323 = vpack.c.b16 %v1007, %v1006
  %v1324 = vpack.c.b16 %v1009, %v1008
  %v1325 = vpack.c.b16 %v1011, %v1010
  %v1326 = vpack.c.b16 %v1013, %v1012
  %v1327 = vpack.c.b16 %v1015, %v1014
  %v1328 = vpack.c.b16 %v1017, %v1016
  %v1329 = vpack.c.b16 %v1019, %v1018
  %v1330 = vpack.c.b16 %v1021, %v1020
  %v1331 = vpack.c.b16 %v1023, %v1022
  %v1332 = vpack.c.b16 %v1025, %v1024
  %v1333 = vpack.c.b16 %v1027, %v1026
  %v1334 = vpack.c.b16 %v1029, %v1028
  %v1335 = vpack.c.b16 %v1031, %v1030
  %v1336 = vpack.c.b16 %v1033, %v1032
  %v1337 = vpack.c.b16 %v1035, %v1034
  %v1338 = vpack.c.b16 %v1037, %v1036
  %v1339 = vpack.c.b16 %v1039, %v1038
  %v1340 = vpack.c.b16 %v1041, %v1040
  %v1341 = vpack.c.b16 %v1043, %v1042
  %v1342 = vpack.c.b16 %v1045, %v1044
  %v1343 = vpack.c.b16 %v1047, %v1046
  %v1344 = vpack.c.b16 %v1049, %v1048
  %v1345 = vpack.c.b16 %v1051, %v1050
  %v1346 = vpack.c.b16 %v1053, %v1052
  %v1347 = vpack.c.b16 %v1055, %v1054
  %v1348 = vpack.c.b16 %v1057, %v1056
  %v1349 = vpack.c.b16 %v1059, %v1058
  %v1350 = vpack.c.b16 %v1061, %v1060
  %v1351 = vpack.c.b16 %v1063, %v1062
  %v1352 = vpack.c.b16 %v1065, %v1064
  %v1353 = vpack.c.b16 %v1067, %v1066
  %v1354 = vpack.c.b16 %v1069, %v1068
  %v1355 = vpack.c.b16 %v1071, %v1070
  %v1356 = vpack.c.b16 %v1073, %v1072
  %v1357 = vpack.c.b16 %v1075, %v1074
  %v1358 = vpack.c.b16 %v1077, %v1076
  %v1359 = vpack.c.b16 %v1079, %v1078
  %v1360 = vpack.c.b16 %v1081, %v1080
  %v1361 = vpack.c.b16 %v1083, %v1082
  %v1362 = vpack.c.b16 %v1085, %v1084
  %v1363 = vpack.c.b16 %v1087, %v1086
  %v1364 = vpack.c.b16 %v1089, %v1088
  %v1365 = vpack.c.b16 %v1091, %v1090
  %v1366 = vpack.c.b16 %v1093, %v1092
  %v1367 = vpack.c.b16 %v1095, %v1094
  %v1368 = vpack.c.b16 %v1097, %v1096
  %v1369 = vpack.c.b16 %v1099, %v1098
  %v1370 = vpack.c.b16 %v1101, %v1100
  %v1371 = vpack.c.b16 %v1103, %v1102
  %v1372 = vpack.c.b16 %v1105, %v1104
  %v1373 = vpack.c.b16 %v1107, %v1106
  %v1374 = vpack.c.b16 %v1109, %v1108
  %v1375 = vpack.c.b16 %v1111, %v1110
  %v1376 = vpack.c.b16 %v1113, %v1112
  %v1377 = vpack.c.b16 %v1115, %v1114
  %v1378 = vpack.c.b16 %v1117, %v1116
  %v1379 = vpack.c.b16 %v1119, %v1118
  %v1380 = vpack.c.b16 %v1121, %v1120
  %v1381 = vpack.c.b16 %v1123, %v1122
  %v1382 = vpack.c.b16 %v1125, %v1124
  %v1383 = vpack.c.b16 %v1127, %v1126
  %v1384 = vpack.c.b16 %v1129, %v1128
  %v1385 = vpack.c.b16 %v1131, %v1130
  %v1386 = vpack.c.b16 %v1133, %v1132
  %v1387 = vpack.c.b16 %v1135, %v1134
  %v1388 = vpack.c.b16 %v1137, %v1136
  %v1389 = vpack.c.b16 %v1139, %v1138
  %v1390 = vpack.c.b16 %v1141, %v1140
  %v1391 = vpack.c.b16 %v1143, %v1142
  %v1392 = vpack.c.b16 %v1145, %v1144
  %v1393 = vpack.c.b16 %v1147, %v1146
  %v1394 = vpack.c.b16 %v1149, %v1148
  %v1395 = vpack.c.b16 %v1151, %v1150
  %v1396 = vpack.c.b16 %v1153, %v1152
  %v1397 = vpack.c.b16 %v1155, %v1154
  %v1398 = vpack.c.b16 %v1157, %v1156
  %v1399 = vpack.c.b16 %v1159, %v1158
  %v1400 = vpack.c.b16 %v1161, %v1160
  %v1401 = vpack.c.b16 %v1163, %v1162
  %v1402 = vpack.c.b16 %v1165, %v1164
  %v1403 = vpack.c.b16 %v1167, %v1166
  %v1404 = vpack.c.b16 %v1169, %v1168
  %v1405 = vpack.c.b16 %v1171, %v1170
  %v1406 = vpack.c.b16 %v1173, %v1172
  %v1407 = vpack.c.b16 %v1175, %v1174
  %v1408 = vpack.c.b16 %v1177, %v1176
  %v1409 = vpack.c.b16 %v1179, %v1178
  %v1410 = vpack.c.b16 %v1181, %v1180
  %v1411 = vpack.c.b16 %v1183, %v1182
  %v1412 = vpack.c.b16 %v1185, %v1184
  %v1413 = vpack.c.b16 %v1187, %v1186
  %v1414 = vpack.c.b16 %v1189, %v1188
  %v1415 = vpack.c.b16 %v1191, %v1190
  %v1416 = vpack.c.b16 %v1193, %v1192
  %v1417 = vpack.c.b16 %v1195, %v1194
  %v1418 = vpack.c.b16 %v1197, %v1196
  %v1419 = vpack.c.b16 %v1199, %v1198
  %v1420 = vpack.c.b16 %v1201, %v1200
  %v1421 = vpack.c.b16 %v1203, %v1202
  %v1422 = vpack.c.b16 %v1205, %v1204
  %v1423 = vpack.c.b16 %v1207, %v1206
  %v1424 = vpack.c.b16 %v1209, %v1208
  %v1425 = vpack.c.b16 %v1211, %v1210
  %v1426 = vpack.c.b16 %v1213, %v1212
  %v1427 = vpack.c.b16 %v1215, %v1214
  %v1428 = vpack.c.b16 %v1217, %v1216
  %v1429 = vpack.c.b16 %v1219, %v1218
  %v1430 = vpack.c.b16 %v1221, %v1220
  %v1431 = vpack.c.b16 %v1223, %v1222
  %v1432 = vpack.c.b16 %v1225, %v1224
  %v1433 = vpack.c.b16 %v1227, %v1226
  %v1434 = vpack.c.b16 %v1229, %v1228
  %v1435 = vpack.c.b16 %v1231, %v1230
  %v1436 = vpack.c.b16 %v1233, %v1232
  %v1437 = vpack.c.b16 %v1235, %v1234
  %v1438 = vpack.c.b16 %v1237, %v1236
  %v1439 = vpack.c.b16 %v1239, %v1238
  %v1440 = vpack.c.b16 %v1241, %v1240
  %v1441 = vpack.c.b16 %v1243, %v1242
  %v1442 = vpack.c.b16 %v1245, %v1244
  %v1443 = vpack.c.b16 %v1247, %v1246
  %v1444 = vpack.c.b16 %v1249, %v1248
  %v1445 = vpack.c.b16 %v1251, %v1250
  %v1446 = vpack.c.b16 %v1253, %v1252
  %v1447 = vpack.c.b16 %v1255, %v1254
  %v1448 = vpack.c.b16 %v1257, %v1256
  %v1449 = vpack.c.b16 %v1259, %v1258
  %v1450 = vpack.c.b16 %v1261, %v1260
  %v1451 = vpack.c.b16 %v1263, %v1262
  %v1452 = vpack.c.b16 %v1265, %v1264
  %v1453 = vpack.c.b16 %v1267, %v1266
  %v1454 = vpack.c.b16 %v1269, %v1268
  %v1455 = vpack.c.b16 %v1271, %v1270
  %1640 = vmatprep.subr.bf16.mxu0 0
  %1641 = vmatpush1.bf16.msra.mxu0 %v1272
  %1642 = vmatprep.subr.bf16.mxu0 0
  %1643 = vmatpush1.bf16.msra.mxu0 %v1273
  %1644 = vmatprep.subr.bf16.mxu0 0
  %1645 = vmatpush1.bf16.msra.mxu0 %v1274
  %1646 = vmatprep.subr.bf16.mxu0 0
  %1647 = vmatpush1.bf16.msra.mxu0 %v1275
  %1648 = vmatprep.subr.bf16.mxu0 0
  %1649 = vmatpush1.bf16.msra.mxu0 %v1276
  %1650 = vmatprep.subr.bf16.mxu0 0
  %1651 = vmatpush1.bf16.msra.mxu0 %v1277
  %1652 = vmatprep.subr.bf16.mxu0 0
  %1653 = vmatpush1.bf16.msra.mxu0 %v1278
  %1654 = vmatprep.subr.bf16.mxu0 0
  %1655 = vmatpush1.bf16.msra.mxu0 %v1279
  %1656 = vmatprep.subr.bf16.mxu0 0
  %1657 = vmatpush1.bf16.msra.mxu0 %v1280
  %1658 = vmatprep.subr.bf16.mxu0 0
  %1659 = vmatpush1.bf16.msra.mxu0 %v1281
  %1660 = vmatprep.subr.bf16.mxu0 0
  %1661 = vmatpush1.bf16.msra.mxu0 %v1282
  %1662 = vmatprep.subr.bf16.mxu0 0
  %1663 = vmatpush1.bf16.msra.mxu0 %v1283
  %1664 = vmatprep.subr.bf16.mxu0 0
  %1665 = vmatpush1.bf16.msra.mxu0 %v1284
  %1666 = vmatprep.subr.bf16.mxu0 0
  %1667 = vmatpush1.bf16.msra.mxu0 %v1285
  %1668 = vmatprep.subr.bf16.mxu0 0
  %1669 = vmatpush1.bf16.msra.mxu0 %v1286
  %1670 = vmatprep.subr.bf16.mxu0 0
  %1671 = vmatpush1.bf16.msra.mxu0 %v1287
  %1672 = vmatprep.mubr.bf16.mxu0 %v491
  %1673 = vmatmul.mubr.bf16.gmra.mrb[0].mxu0 %v490
  %v1674 = vpop.f32.mrb[0].mxu0
  %v1675 = vadd.f32 %v418, %v1674
  %v1676 = vpop.f32.mrb[0].mxu0
  %v1677 = vpop.f32.mrb[0].mxu0
  %v1678 = vadd.f32 %v418, %v1677
  %v1679 = vpop.f32.mrb[0].mxu0
  %1680 = vdwg.mxu0
  %1681 = vmatprep.subr.bf16.mxu0 0
  %1682 = vmatpush1.bf16.msra.mxu0 %v1288
  %1683 = vmatprep.subr.bf16.mxu0 0
  %1684 = vmatpush1.bf16.msra.mxu0 %v1289
  %1685 = vmatprep.subr.bf16.mxu0 0
  %1686 = vmatpush1.bf16.msra.mxu0 %v1290
  %1687 = vmatprep.subr.bf16.mxu0 0
  %1688 = vmatpush1.bf16.msra.mxu0 %v1291
  %1689 = vmatprep.subr.bf16.mxu0 0
  %1690 = vmatpush1.bf16.msra.mxu0 %v1292
  %1691 = vmatprep.subr.bf16.mxu0 0
  %1692 = vmatpush1.bf16.msra.mxu0 %v1293
  %1693 = vmatprep.subr.bf16.mxu0 0
  %1694 = vmatpush1.bf16.msra.mxu0 %v1294
  %1695 = vmatprep.subr.bf16.mxu0 0
  %1696 = vmatpush1.bf16.msra.mxu0 %v1295
  %1697 = vmatprep.subr.bf16.mxu0 0
  %1698 = vmatpush1.bf16.msra.mxu0 %v1296
  %1699 = vmatprep.subr.bf16.mxu0 0
  %1700 = vmatpush1.bf16.msra.mxu0 %v1297
  %1701 = vmatprep.subr.bf16.mxu0 0
  %1702 = vmatpush1.bf16.msra.mxu0 %v1298
  %1703 = vmatprep.subr.bf16.mxu0 0
  %1704 = vmatpush1.bf16.msra.mxu0 %v1299
  %1705 = vmatprep.subr.bf16.mxu0 0
  %1706 = vmatpush1.bf16.msra.mxu0 %v1300
  %1707 = vmatprep.subr.bf16.mxu0 0
  %1708 = vmatpush1.bf16.msra.mxu0 %v1301
  %1709 = vmatprep.subr.bf16.mxu0 0
  %1710 = vmatpush1.bf16.msra.mxu0 %v1302
  %1711 = vmatprep.subr.bf16.mxu0 0
  %1712 = vmatpush1.bf16.msra.mxu0 %v1303
  %1713 = vmatprep.mubr.bf16.mxu0 %v493
  %1714 = vmatmul.mubr.bf16.gmra.mrb[0].mxu0 %v492
  %v1715 = vpop.f32.mrb[0].mxu0
  %v1716 = vadd.f32 %v1675, %v1715
  %v1717 = vpop.f32.mrb[0].mxu0
  %v1718 = vpop.f32.mrb[0].mxu0
  %v1719 = vadd.f32 %v1678, %v1718
  %v1720 = vpop.f32.mrb[0].mxu0
  %1721 = vdwg.mxu0
  %1722 = vmatprep.subr.bf16.mxu0 0
  %1723 = vmatpush1.bf16.msra.mxu0 %v1304
  %1724 = vmatprep.subr.bf16.mxu0 0
  %1725 = vmatpush1.bf16.msra.mxu0 %v1305
  %1726 = vmatprep.subr.bf16.mxu0 0
  %1727 = vmatpush1.bf16.msra.mxu0 %v1306
  %1728 = vmatprep.subr.bf16.mxu0 0
  %1729 = vmatpush1.bf16.msra.mxu0 %v1307
  %1730 = vmatprep.subr.bf16.mxu0 0
  %1731 = vmatpush1.bf16.msra.mxu0 %v1308
  %1732 = vmatprep.subr.bf16.mxu0 0
  %1733 = vmatpush1.bf16.msra.mxu0 %v1309
  %1734 = vmatprep.subr.bf16.mxu0 0
  %1735 = vmatpush1.bf16.msra.mxu0 %v1310
  %1736 = vmatprep.subr.bf16.mxu0 0
  %1737 = vmatpush1.bf16.msra.mxu0 %v1311
  %1738 = vmatprep.subr.bf16.mxu0 0
  %1739 = vmatpush1.bf16.msra.mxu0 %v1312
  %1740 = vmatprep.subr.bf16.mxu0 0
  %1741 = vmatpush1.bf16.msra.mxu0 %v1313
  %1742 = vmatprep.subr.bf16.mxu0 0
  %1743 = vmatpush1.bf16.msra.mxu0 %v1314
  %1744 = vmatprep.subr.bf16.mxu0 0
  %1745 = vmatpush1.bf16.msra.mxu0 %v1315
  %1746 = vmatprep.subr.bf16.mxu0 0
  %1747 = vmatpush1.bf16.msra.mxu0 %v1316
  %1748 = vmatprep.subr.bf16.mxu0 0
  %1749 = vmatpush1.bf16.msra.mxu0 %v1317
  %1750 = vmatprep.subr.bf16.mxu0 0
  %1751 = vmatpush1.bf16.msra.mxu0 %v1318
  %1752 = vmatprep.subr.bf16.mxu0 0
  %1753 = vmatpush1.bf16.msra.mxu0 %v1319
  %1754 = vmatprep.mubr.bf16.mxu0 %v495
  %1755 = vmatmul.mubr.bf16.gmra.mrb[0].mxu0 %v494
  %v1756 = vpop.f32.mrb[0].mxu0
  %v1757 = vadd.f32 %v1716, %v1756
  %v1758 = vpop.f32.mrb[0].mxu0
  %v1759 = vpop.f32.mrb[0].mxu0
  %v1760 = vadd.f32 %v1719, %v1759
  %v1761 = vpop.f32.mrb[0].mxu0
  %1762 = vdwg.mxu0
  %1763 = vmatprep.subr.bf16.mxu0 0
  %1764 = vmatpush1.bf16.msra.mxu0 %v1320
  %1765 = vmatprep.subr.bf16.mxu0 0
  %1766 = vmatpush1.bf16.msra.mxu0 %v1321
  %1767 = vmatprep.subr.bf16.mxu0 0
  %1768 = vmatpush1.bf16.msra.mxu0 %v1322
  %1769 = vmatprep.subr.bf16.mxu0 0
  %1770 = vmatpush1.bf16.msra.mxu0 %v1323
  %1771 = vmatprep.subr.bf16.mxu0 0
  %1772 = vmatpush1.bf16.msra.mxu0 %v1324
  %1773 = vmatprep.subr.bf16.mxu0 0
  %1774 = vmatpush1.bf16.msra.mxu0 %v1325
  %1775 = vmatprep.subr.bf16.mxu0 0
  %1776 = vmatpush1.bf16.msra.mxu0 %v1326
  %1777 = vmatprep.subr.bf16.mxu0 0
  %1778 = vmatpush1.bf16.msra.mxu0 %v1327
  %1779 = vmatprep.subr.bf16.mxu0 0
  %1780 = vmatpush1.bf16.msra.mxu0 %v1328
  %1781 = vmatprep.subr.bf16.mxu0 0
  %1782 = vmatpush1.bf16.msra.mxu0 %v1329
  %1783 = vmatprep.subr.bf16.mxu0 0
  %1784 = vmatpush1.bf16.msra.mxu0 %v1330
  %1785 = vmatprep.subr.bf16.mxu0 0
  %1786 = vmatpush1.bf16.msra.mxu0 %v1331
  %1787 = vmatprep.subr.bf16.mxu0 0
  %1788 = vmatpush1.bf16.msra.mxu0 %v1332
  %1789 = vmatprep.subr.bf16.mxu0 0
  %1790 = vmatpush1.bf16.msra.mxu0 %v1333
  %1791 = vmatprep.subr.bf16.mxu0 0
  %1792 = vmatpush1.bf16.msra.mxu0 %v1334
  %1793 = vmatprep.subr.bf16.mxu0 0
  %1794 = vmatpush1.bf16.msra.mxu0 %v1335
  %1795 = vmatprep.mubr.bf16.mxu0 %v497
  %1796 = vmatmul.mubr.bf16.gmra.mrb[0].mxu0 %v496
  %v1797 = vpop.f32.mrb[0].mxu0
  %v1798 = vadd.f32 %v1757, %v1797
  %v1799 = vpop.f32.mrb[0].mxu0
  %v1800 = vpop.f32.mrb[0].mxu0
  %v1801 = vadd.f32 %v1760, %v1800
  %v1802 = vpop.f32.mrb[0].mxu0
  %1803 = vdwg.mxu0
  %1804 = vmatprep.subr.bf16.mxu0 0
  %1805 = vmatpush1.bf16.msra.mxu0 %v1336
  %1806 = vmatprep.subr.bf16.mxu0 0
  %1807 = vmatpush1.bf16.msra.mxu0 %v1337
  %1808 = vmatprep.subr.bf16.mxu0 0
  %1809 = vmatpush1.bf16.msra.mxu0 %v1338
  %1810 = vmatprep.subr.bf16.mxu0 0
  %1811 = vmatpush1.bf16.msra.mxu0 %v1339
  %1812 = vmatprep.subr.bf16.mxu0 0
  %1813 = vmatpush1.bf16.msra.mxu0 %v1340
  %1814 = vmatprep.subr.bf16.mxu0 0
  %1815 = vmatpush1.bf16.msra.mxu0 %v1341
  %1816 = vmatprep.subr.bf16.mxu0 0
  %1817 = vmatpush1.bf16.msra.mxu0 %v1342
  %1818 = vmatprep.subr.bf16.mxu0 0
  %1819 = vmatpush1.bf16.msra.mxu0 %v1343
  %1820 = vmatprep.subr.bf16.mxu0 0
  %1821 = vmatpush1.bf16.msra.mxu0 %v1344
  %1822 = vmatprep.subr.bf16.mxu0 0
  %1823 = vmatpush1.bf16.msra.mxu0 %v1345
  %1824 = vmatprep.subr.bf16.mxu0 0
  %1825 = vmatpush1.bf16.msra.mxu0 %v1346
  %1826 = vmatprep.subr.bf16.mxu0 0
  %1827 = vmatpush1.bf16.msra.mxu0 %v1347
  %1828 = vmatprep.subr.bf16.mxu0 0
  %1829 = vmatpush1.bf16.msra.mxu0 %v1348
  %1830 = vmatprep.subr.bf16.mxu0 0
  %1831 = vmatpush1.bf16.msra.mxu0 %v1349
  %1832 = vmatprep.subr.bf16.mxu0 0
  %1833 = vmatpush1.bf16.msra.mxu0 %v1350
  %1834 = vmatprep.subr.bf16.mxu0 0
  %1835 = vmatpush1.bf16.msra.mxu0 %v1351
  %1836 = vmatprep.mubr.bf16.mxu0 %v499
  %1837 = vmatmul.mubr.bf16.gmra.mrb[0].mxu0 %v498
  %v1838 = vpop.f32.mrb[0].mxu0
  %v1839 = vadd.f32 %v1798, %v1838
  %v1840 = vpop.f32.mrb[0].mxu0
  %v1841 = vpop.f32.mrb[0].mxu0
  %v1842 = vadd.f32 %v1801, %v1841
  %v1843 = vpop.f32.mrb[0].mxu0
  %1844 = vdwg.mxu0
  %1845 = vmatprep.subr.bf16.mxu0 0
  %1846 = vmatpush1.bf16.msra.mxu0 %v1352
  %1847 = vmatprep.subr.bf16.mxu0 0
  %1848 = vmatpush1.bf16.msra.mxu0 %v1353
  %1849 = vmatprep.subr.bf16.mxu0 0
  %1850 = vmatpush1.bf16.msra.mxu0 %v1354
  %1851 = vmatprep.subr.bf16.mxu0 0
  %1852 = vmatpush1.bf16.msra.mxu0 %v1355
  %1853 = vmatprep.subr.bf16.mxu0 0
  %1854 = vmatpush1.bf16.msra.mxu0 %v1356
  %1855 = vmatprep.subr.bf16.mxu0 0
  %1856 = vmatpush1.bf16.msra.mxu0 %v1357
  %1857 = vmatprep.subr.bf16.mxu0 0
  %1858 = vmatpush1.bf16.msra.mxu0 %v1358
  %1859 = vmatprep.subr.bf16.mxu0 0
  %1860 = vmatpush1.bf16.msra.mxu0 %v1359
  %1861 = vmatprep.subr.bf16.mxu0 0
  %1862 = vmatpush1.bf16.msra.mxu0 %v1360
  %1863 = vmatprep.subr.bf16.mxu0 0
  %1864 = vmatpush1.bf16.msra.mxu0 %v1361
  %1865 = vmatprep.subr.bf16.mxu0 0
  %1866 = vmatpush1.bf16.msra.mxu0 %v1362
  %1867 = vmatprep.subr.bf16.mxu0 0
  %1868 = vmatpush1.bf16.msra.mxu0 %v1363
  %1869 = vmatprep.subr.bf16.mxu0 0
  %1870 = vmatpush1.bf16.msra.mxu0 %v1364
  %1871 = vmatprep.subr.bf16.mxu0 0
  %1872 = vmatpush1.bf16.msra.mxu0 %v1365
  %1873 = vmatprep.subr.bf16.mxu0 0
  %1874 = vmatpush1.bf16.msra.mxu0 %v1366
  %1875 = vmatprep.subr.bf16.mxu0 0
  %1876 = vmatpush1.bf16.msra.mxu0 %v1367
  %1877 = vmatprep.mubr.bf16.mxu0 %v501
  %1878 = vmatmul.mubr.bf16.gmra.mrb[0].mxu0 %v500
  %v1879 = vpop.f32.mrb[0].mxu0
  %v1880 = vadd.f32 %v1839, %v1879
  %v1881 = vpop.f32.mrb[0].mxu0
  %v1882 = vpop.f32.mrb[0].mxu0
  %v1883 = vadd.f32 %v1842, %v1882
  %v1884 = vpop.f32.mrb[0].mxu0
  %1885 = vdwg.mxu0
  %1886 = vmatprep.subr.bf16.mxu0 0
  %1887 = vmatpush1.bf16.msra.mxu0 %v1368
  %1888 = vmatprep.subr.bf16.mxu0 0
  %1889 = vmatpush1.bf16.msra.mxu0 %v1369
  %1890 = vmatprep.subr.bf16.mxu0 0
  %1891 = vmatpush1.bf16.msra.mxu0 %v1370
  %1892 = vmatprep.subr.bf16.mxu0 0
  %1893 = vmatpush1.bf16.msra.mxu0 %v1371
  %1894 = vmatprep.subr.bf16.mxu0 0
  %1895 = vmatpush1.bf16.msra.mxu0 %v1372
  %1896 = vmatprep.subr.bf16.mxu0 0
  %1897 = vmatpush1.bf16.msra.mxu0 %v1373
  %1898 = vmatprep.subr.bf16.mxu0 0
  %1899 = vmatpush1.bf16.msra.mxu0 %v1374
  %1900 = vmatprep.subr.bf16.mxu0 0
  %1901 = vmatpush1.bf16.msra.mxu0 %v1375
  %1902 = vmatprep.subr.bf16.mxu0 0
  %1903 = vmatpush1.bf16.msra.mxu0 %v1376
  %1904 = vmatprep.subr.bf16.mxu0 0
  %1905 = vmatpush1.bf16.msra.mxu0 %v1377
  %1906 = vmatprep.subr.bf16.mxu0 0
  %1907 = vmatpush1.bf16.msra.mxu0 %v1378
  %1908 = vmatprep.subr.bf16.mxu0 0
  %1909 = vmatpush1.bf16.msra.mxu0 %v1379
  %1910 = vmatprep.subr.bf16.mxu0 0
  %1911 = vmatpush1.bf16.msra.mxu0 %v1380
  %1912 = vmatprep.subr.bf16.mxu0 0
  %1913 = vmatpush1.bf16.msra.mxu0 %v1381
  %1914 = vmatprep.subr.bf16.mxu0 0
  %1915 = vmatpush1.bf16.msra.mxu0 %v1382
  %1916 = vmatprep.subr.bf16.mxu0 0
  %1917 = vmatpush1.bf16.msra.mxu0 %v1383
  %1918 = vmatprep.mubr.bf16.mxu0 %v503
  %1919 = vmatmul.mubr.bf16.gmra.mrb[0].mxu0 %v502
  %v1920 = vpop.f32.mrb[0].mxu0
  %v1921 = vadd.f32 %v1880, %v1920
  %v1922 = vpop.f32.mrb[0].mxu0
  %v1923 = vpop.f32.mrb[0].mxu0
  %v1924 = vadd.f32 %v1883, %v1923
  %v1925 = vpop.f32.mrb[0].mxu0
  %1926 = vdwg.mxu0
  %1927 = vmatprep.subr.bf16.mxu0 0
  %1928 = vmatpush1.bf16.msra.mxu0 %v1384
  %1929 = vmatprep.subr.bf16.mxu0 0
  %1930 = vmatpush1.bf16.msra.mxu0 %v1385
  %1931 = vmatprep.subr.bf16.mxu0 0
  %1932 = vmatpush1.bf16.msra.mxu0 %v1386
  %1933 = vmatprep.subr.bf16.mxu0 0
  %1934 = vmatpush1.bf16.msra.mxu0 %v1387
  %1935 = vmatprep.subr.bf16.mxu0 0
  %1936 = vmatpush1.bf16.msra.mxu0 %v1388
  %1937 = vmatprep.subr.bf16.mxu0 0
  %1938 = vmatpush1.bf16.msra.mxu0 %v1389
  %1939 = vmatprep.subr.bf16.mxu0 0
  %1940 = vmatpush1.bf16.msra.mxu0 %v1390
  %1941 = vmatprep.subr.bf16.mxu0 0
  %1942 = vmatpush1.bf16.msra.mxu0 %v1391
  %1943 = vmatprep.subr.bf16.mxu0 0
  %1944 = vmatpush1.bf16.msra.mxu0 %v1392
  %1945 = vmatprep.subr.bf16.mxu0 0
  %1946 = vmatpush1.bf16.msra.mxu0 %v1393
  %1947 = vmatprep.subr.bf16.mxu0 0
  %1948 = vmatpush1.bf16.msra.mxu0 %v1394
  %1949 = vmatprep.subr.bf16.mxu0 0
  %1950 = vmatpush1.bf16.msra.mxu0 %v1395
  %1951 = vmatprep.subr.bf16.mxu0 0
  %1952 = vmatpush1.bf16.msra.mxu0 %v1396
  %1953 = vmatprep.subr.bf16.mxu0 0
  %1954 = vmatpush1.bf16.msra.mxu0 %v1397
  %1955 = vmatprep.subr.bf16.mxu0 0
  %1956 = vmatpush1.bf16.msra.mxu0 %v1398
  %1957 = vmatprep.subr.bf16.mxu0 0
  %1958 = vmatpush1.bf16.msra.mxu0 %v1399
  %1959 = vmatprep.mubr.bf16.mxu0 %v505
  %1960 = vmatmul.mubr.bf16.gmra.mrb[0].mxu0 %v504
  %v1961 = vpop.f32.mrb[0].mxu0
  %v1962 = vadd.f32 %v1921, %v1961
  %v1963 = vpop.f32.mrb[0].mxu0
  %v1964 = vpop.f32.mrb[0].mxu0
  %v1965 = vadd.f32 %v1924, %v1964
  %v1966 = vpop.f32.mrb[0].mxu0
  %1967 = vdwg.mxu0
  %1968 = vmatprep.subr.bf16.mxu0 0
  %1969 = vmatpush1.bf16.msra.mxu0 %v1400
  %1970 = vmatprep.subr.bf16.mxu0 0
  %1971 = vmatpush1.bf16.msra.mxu0 %v1401
  %1972 = vmatprep.subr.bf16.mxu0 0
  %1973 = vmatpush1.bf16.msra.mxu0 %v1402
  %1974 = vmatprep.subr.bf16.mxu0 0
  %1975 = vmatpush1.bf16.msra.mxu0 %v1403
  %1976 = vmatprep.subr.bf16.mxu0 0
  %1977 = vmatpush1.bf16.msra.mxu0 %v1404
  %1978 = vmatprep.subr.bf16.mxu0 0
  %1979 = vmatpush1.bf16.msra.mxu0 %v1405
  %1980 = vmatprep.subr.bf16.mxu0 0
  %1981 = vmatpush1.bf16.msra.mxu0 %v1406
  %1982 = vmatprep.subr.bf16.mxu0 0
  %1983 = vmatpush1.bf16.msra.mxu0 %v1407
  %1984 = vmatprep.subr.bf16.mxu0 0
  %1985 = vmatpush1.bf16.msra.mxu0 %v1408
  %1986 = vmatprep.subr.bf16.mxu0 0
  %1987 = vmatpush1.bf16.msra.mxu0 %v1409
  %1988 = vmatprep.subr.bf16.mxu0 0
  %1989 = vmatpush1.bf16.msra.mxu0 %v1410
  %1990 = vmatprep.subr.bf16.mxu0 0
  %1991 = vmatpush1.bf16.msra.mxu0 %v1411
  %1992 = vmatprep.subr.bf16.mxu0 0
  %1993 = vmatpush1.bf16.msra.mxu0 %v1412
  %1994 = vmatprep.subr.bf16.mxu0 0
  %1995 = vmatpush1.bf16.msra.mxu0 %v1413
  %1996 = vmatprep.subr.bf16.mxu0 0
  %1997 = vmatpush1.bf16.msra.mxu0 %v1414
  %1998 = vmatprep.subr.bf16.mxu0 0
  %1999 = vmatpush1.bf16.msra.mxu0 %v1415
  %2000 = vmatprep.mubr.bf16.mxu0 %v507
  %2001 = vmatmul.mubr.bf16.gmra.mrb[0].mxu0 %v506
  %v2002 = vpop.f32.mrb[0].mxu0
  %v2003 = vadd.f32 %v1962, %v2002
  %v2004 = vpop.f32.mrb[0].mxu0
  %v2005 = vpop.f32.mrb[0].mxu0
  %v2006 = vadd.f32 %v1965, %v2005
  %v2007 = vpop.f32.mrb[0].mxu0
  %2008 = vdwg.mxu0
  %2009 = vmatprep.subr.bf16.mxu0 0
  %2010 = vmatpush1.bf16.msra.mxu0 %v1416
  %2011 = vmatprep.subr.bf16.mxu0 0
  %2012 = vmatpush1.bf16.msra.mxu0 %v1417
  %2013 = vmatprep.subr.bf16.mxu0 0
  %2014 = vmatpush1.bf16.msra.mxu0 %v1418
  %2015 = vmatprep.subr.bf16.mxu0 0
  %2016 = vmatpush1.bf16.msra.mxu0 %v1419
  %2017 = vmatprep.subr.bf16.mxu0 0
  %2018 = vmatpush1.bf16.msra.mxu0 %v1420
  %2019 = vmatprep.subr.bf16.mxu0 0
  %2020 = vmatpush1.bf16.msra.mxu0 %v1421
  %2021 = vmatprep.subr.bf16.mxu0 0
  %2022 = vmatpush1.bf16.msra.mxu0 %v1422
  %2023 = vmatprep.subr.bf16.mxu0 0
  %2024 = vmatpush1.bf16.msra.mxu0 %v1423
  %2025 = vmatprep.subr.bf16.mxu0 0
  %2026 = vmatpush1.bf16.msra.mxu0 %v1424
  %2027 = vmatprep.subr.bf16.mxu0 0
  %2028 = vmatpush1.bf16.msra.mxu0 %v1425
  %2029 = vmatprep.subr.bf16.mxu0 0
  %2030 = vmatpush1.bf16.msra.mxu0 %v1426
  %2031 = vmatprep.subr.bf16.mxu0 0
  %2032 = vmatpush1.bf16.msra.mxu0 %v1427
  %2033 = vmatprep.subr.bf16.mxu0 0
  %2034 = vmatpush1.bf16.msra.mxu0 %v1428
  %2035 = vmatprep.subr.bf16.mxu0 0
  %2036 = vmatpush1.bf16.msra.mxu0 %v1429
  %2037 = vmatprep.subr.bf16.mxu0 0
  %2038 = vmatpush1.bf16.msra.mxu0 %v1430
  %2039 = vmatprep.subr.bf16.mxu0 0
  %2040 = vmatpush1.bf16.msra.mxu0 %v1431
  %2041 = vmatprep.mubr.bf16.mxu0 %v509
  %2042 = vmatmul.mubr.bf16.gmra.mrb[0].mxu0 %v508
  %v2043 = vpop.f32.mrb[0].mxu0
  %v2044 = vadd.f32 %v2003, %v2043
  %v2045 = vpop.f32.mrb[0].mxu0
  %v2046 = vpop.f32.mrb[0].mxu0
  %v2047 = vadd.f32 %v2006, %v2046
  %v2048 = vpop.f32.mrb[0].mxu0
  %2049 = vdwg.mxu0
  %2050 = vmatprep.subr.bf16.mxu0 0
  %2051 = vmatpush1.bf16.msra.mxu0 %v1432
  %2052 = vmatprep.subr.bf16.mxu0 0
  %2053 = vmatpush1.bf16.msra.mxu0 %v1433
  %2054 = vmatprep.subr.bf16.mxu0 0
  %2055 = vmatpush1.bf16.msra.mxu0 %v1434
  %2056 = vmatprep.subr.bf16.mxu0 0
  %2057 = vmatpush1.bf16.msra.mxu0 %v1435
  %2058 = vmatprep.subr.bf16.mxu0 0
  %2059 = vmatpush1.bf16.msra.mxu0 %v1436
  %2060 = vmatprep.subr.bf16.mxu0 0
  %2061 = vmatpush1.bf16.msra.mxu0 %v1437
  %2062 = vmatprep.subr.bf16.mxu0 0
  %2063 = vmatpush1.bf16.msra.mxu0 %v1438
  %2064 = vmatprep.subr.bf16.mxu0 0
  %2065 = vmatpush1.bf16.msra.mxu0 %v1439
  %2066 = vmatprep.subr.bf16.mxu0 0
  %2067 = vmatpush1.bf16.msra.mxu0 %v1440
  %2068 = vmatprep.subr.bf16.mxu0 0
  %2069 = vmatpush1.bf16.msra.mxu0 %v1441
  %2070 = vmatprep.subr.bf16.mxu0 0
  %2071 = vmatpush1.bf16.msra.mxu0 %v1442
  %2072 = vmatprep.subr.bf16.mxu0 0
  %2073 = vmatpush1.bf16.msra.mxu0 %v1443
  %2074 = vmatprep.subr.bf16.mxu0 0
  %2075 = vmatpush1.bf16.msra.mxu0 %v1444
  %2076 = vmatprep.subr.bf16.mxu0 0
  %2077 = vmatpush1.bf16.msra.mxu0 %v1445
  %2078 = vmatprep.subr.bf16.mxu0 0
  %2079 = vmatpush1.bf16.msra.mxu0 %v1446
  %2080 = vmatprep.subr.bf16.mxu0 0
  %2081 = vmatpush1.bf16.msra.mxu0 %v1447
  %2082 = vmatprep.mubr.bf16.mxu0 %v511
  %2083 = vmatmul.mubr.bf16.gmra.mrb[0].mxu0 %v510
  %v2084 = vpop.f32.mrb[0].mxu0
  %v2085 = vadd.f32 %v2044, %v2084
  %v2086 = vpop.f32.mrb[0].mxu0
  %v2087 = vpop.f32.mrb[0].mxu0
  %v2088 = vadd.f32 %v2047, %v2087
  %v2089 = vpop.f32.mrb[0].mxu0
  %2090 = vdwg.mxu0
  %2091 = vmatprep.subr.bf16.mxu0 0
  %2092 = vmatpush1.bf16.msra.mxu0 %v1448
  %2093 = vmatprep.subr.bf16.mxu0 0
  %2094 = vmatpush1.bf16.msra.mxu0 %v1449
  %2095 = vmatprep.subr.bf16.mxu0 0
  %2096 = vmatpush1.bf16.msra.mxu0 %v1450
  %2097 = vmatprep.subr.bf16.mxu0 0
  %2098 = vmatpush1.bf16.msra.mxu0 %v1451
  %2099 = vmatprep.subr.bf16.mxu0 0
  %2100 = vmatpush1.bf16.msra.mxu0 %v1452
  %2101 = vmatprep.subr.bf16.mxu0 0
  %2102 = vmatpush1.bf16.msra.mxu0 %v1453
  %2103 = vmatprep.subr.bf16.mxu0 0
  %2104 = vmatpush1.bf16.msra.mxu0 %v1454
  %2105 = vmatprep.subr.bf16.mxu0 0
  %2106 = vmatpush1.bf16.msra.mxu0 %v1455
  %2107 = vmatprep.subr.bf16.mxu0 0
  %2108 = vmatpush1.bf16.msra.mxu0 0
  %2109 = vmatprep.subr.bf16.mxu0 0
  %2110 = vmatpush1.bf16.msra.mxu0 0
  %2111 = vmatprep.subr.bf16.mxu0 0
  %2112 = vmatpush1.bf16.msra.mxu0 0
  %2113 = vmatprep.subr.bf16.mxu0 0
  %2114 = vmatpush1.bf16.msra.mxu0 0
  %2115 = vmatprep.subr.bf16.mxu0 0
  %2116 = vmatpush1.bf16.msra.mxu0 0
  %2117 = vmatprep.subr.bf16.mxu0 0
  %2118 = vmatpush1.bf16.msra.mxu0 0
  %2119 = vmatprep.subr.bf16.mxu0 0
  %2120 = vmatpush1.bf16.msra.mxu0 0
  %2121 = vmatprep.subr.bf16.mxu0 0
  %2122 = vmatpush1.bf16.msra.mxu0 0
  %2123 = vmatprep.mubr.bf16.mxu0 0
  %2124 = vmatmul.mubr.bf16.gmra.mrb[0].mxu0 %v512
  %v2125 = vpop.f32.mrb[0].mxu0
  %v2126 = vadd.f32 %v2085, %v2125
  %v2127 = vpop.f32.mrb[0].mxu0
  %v2128 = vpop.f32.mrb[0].mxu0
  %v2129 = vadd.f32 %v2088, %v2128
  %v2130 = vpop.f32.mrb[0].mxu0
  %2131 = vdwg.mxu0
  %vm2132 = vcmp.gt.f32.partialorder %v2126, 0.0
  %vm2133 = vcmp.gt.f32.partialorder %v2129, 0.0
  %v2134 = vmul.f32 %v2126, 0.01
  %v2135 = vmul.f32 %v2129, 0.01
  %v2136 = vsel %vm2132, %v2126, %v2134
  %v2137 = vsel %vm2133, %v2129, %v2135
  %v2138 = vpack.c.bf16 %v2137, %v2136
  %v2139 = vld [vmem:[%s3] sm:$0xf]
  %v2140 = vld [vmem:[%s3 + $0x4] sm:$0xf]
  %v2141 = vld [vmem:[%s3 + $0x8] sm:$0xf]
  %v2142 = vld [vmem:[%s3 + $0xc] sm:$0xf]
  %v2143 = vld [vmem:[%s3 + $0x10] sm:$0xf]
  %v2144 = vld [vmem:[%s3 + $0x14] sm:$0xf]
  %v2145 = vld [vmem:[%s3 + $0x18] sm:$0xf]
  %v2146 = vld [vmem:[%s3 + $0x1c] sm:$0xf]
  %v2147 = vld [vmem:[%s3 + $0x20] sm:$0xf]
  %v2148 = vld [vmem:[%s3 + $0x24] sm:$0xf]
  %v2149 = vld [vmem:[%s3 + $0x28] sm:$0xf]
  %v2150 = vld [vmem:[%s3 + $0x2c] sm:$0xf]
  %v2151 = vld [vmem:[%s3 + $0x30] sm:$0xf]
  %v2152 = vld [vmem:[%s3 + $0x34] sm:$0xf]
  %v2153 = vld [vmem:[%s3 + $0x38] sm:$0xf]
  %v2154 = vld [vmem:[%s3 + $0x3c] sm:$0xf]
  %v2155 = vld [vmem:[%s4] sm:$0x1]
  %v2157 = vlaneseq
  %v2158 = vshrl.u32 %v2157, 7
  %v2159 = vsub.s32 0, %v2158
  %v2160 = vrot.slane %v2155, %v2159
  %v2178 = vunpack.c.l.b16 %v2139
  %v2179 = vunpack.c.l.b16 %v2140
  %v2180 = vunpack.c.l.b16 %v2141
  %v2181 = vunpack.c.l.b16 %v2142
  %v2182 = vunpack.c.l.b16 %v2143
  %v2183 = vunpack.c.l.b16 %v2144
  %v2184 = vunpack.c.l.b16 %v2145
  %v2185 = vunpack.c.l.b16 %v2146
  %v2186 = vunpack.c.l.b16 %v2147
  %v2187 = vunpack.c.l.b16 %v2148
  %v2188 = vunpack.c.l.b16 %v2149
  %v2189 = vunpack.c.l.b16 %v2150
  %v2190 = vunpack.c.l.b16 %v2151
  %v2191 = vunpack.c.l.b16 %v2152
  %v2192 = vunpack.c.l.b16 %v2153
  %v2193 = vunpack.c.l.b16 %v2154
  %v2194 = vpack.c.b16 %v2179, %v2178
  %v2195 = vpack.c.b16 %v2181, %v2180
  %v2196 = vpack.c.b16 %v2183, %v2182
  %v2197 = vpack.c.b16 %v2185, %v2184
  %v2198 = vpack.c.b16 %v2187, %v2186
  %v2199 = vpack.c.b16 %v2189, %v2188
  %v2200 = vpack.c.b16 %v2191, %v2190
  %v2201 = vpack.c.b16 %v2193, %v2192
  %2210 = vmatprep.subr.bf16.mxu0 0
  %2211 = vmatpush1.bf16.msra.mxu0 %v2194
  %2212 = vmatprep.subr.bf16.mxu0 0
  %2213 = vmatpush1.bf16.msra.mxu0 %v2195
  %2214 = vmatprep.subr.bf16.mxu0 0
  %2215 = vmatpush1.bf16.msra.mxu0 %v2196
  %2216 = vmatprep.subr.bf16.mxu0 0
  %2217 = vmatpush1.bf16.msra.mxu0 %v2197
  %2218 = vmatprep.subr.bf16.mxu0 0
  %2219 = vmatpush1.bf16.msra.mxu0 %v2198
  %2220 = vmatprep.subr.bf16.mxu0 0
  %2221 = vmatpush1.bf16.msra.mxu0 %v2199
  %2222 = vmatprep.subr.bf16.mxu0 0
  %2223 = vmatpush1.bf16.msra.mxu0 %v2200
  %2224 = vmatprep.subr.bf16.mxu0 0
  %2225 = vmatpush1.bf16.msra.mxu0 %v2201
  %2226 = vmatprep.subr.bf16.mxu0 0
  %2227 = vmatpush1.bf16.msra.mxu0 0
  %2228 = vmatprep.subr.bf16.mxu0 0
  %2229 = vmatpush1.bf16.msra.mxu0 0
  %2230 = vmatprep.subr.bf16.mxu0 0
  %2231 = vmatpush1.bf16.msra.mxu0 0
  %2232 = vmatprep.subr.bf16.mxu0 0
  %2233 = vmatpush1.bf16.msra.mxu0 0
  %2234 = vmatprep.subr.bf16.mxu0 0
  %2235 = vmatpush1.bf16.msra.mxu0 0
  %2236 = vmatprep.subr.bf16.mxu0 0
  %2237 = vmatpush1.bf16.msra.mxu0 0
  %2238 = vmatprep.subr.bf16.mxu0 0
  %2239 = vmatpush1.bf16.msra.mxu0 0
  %2240 = vmatprep.subr.bf16.mxu0 0
  %2241 = vmatpush1.bf16.msra.mxu0 0
  %2242 = vmatprep.mubr.bf16.mxu0 0
  %2243 = vmatmul.mubr.bf16.gmra.mrb[0].mxu0 %v2138
  %v2244 = vpop.f32.mrb[0].mxu0
  %v2245 = vadd.f32 %v2160, %v2244
  %v2246 = vpop.f32.mrb[0].mxu0
  %v2247 = vpop.f32.mrb[0].mxu0
  %v2248 = vadd.f32 %v2160, %v2247
  %v2249 = vpop.f32.mrb[0].mxu0
  %2250 = vdwg.mxu0
  %2251 = vst [vmem:[%s5] sm:$0xff] %v2245
  %2252 = vst [vmem:[%s5 + $0x8] sm:$0xff] %v2248
  // Predicated region
  $region22: #{cnn_forward.5} parent=0 // pred_check
    _
  $region23: #{cnn_forward.5} parent=0 // pred_check_branch
    %2254 = sbr.rel (0) target = $region25
  $region24: #{cnn_forward.5} parent=0 // pred_region
    _
  $region25: #{cnn_forward.5} parent=0 // pred_fallthru
    _
  // Predicated region
  $region26: #{cnn_forward.5} parent=0 // pred_check
    _
  $region27: #{cnn_forward.5} parent=0 // pred_check_branch
    %2256 = sbr.rel (0) target = $region29
  $region28: #{cnn_forward.5} parent=0 // pred_region
    _
  $region29: #{cnn_forward.5} parent=0 // pred_fallthru
    _

</llo_original>
